<compile_context>
chip_gen: v7x
topology: tpu7x:2x2x1
jax: 0.10.0
libtpu: 0.0.40
codegen_flags: <defaults>
</compile_context>

<pallas_src>
import functools

import numpy as np
import jax
import jax.numpy as jnp
from jax import lax
from jax.experimental import pallas as pl
from jax.experimental.pallas import tpu as pltpu

LANE = 128                      # TPU lane width
CPAD = 16                       # channel padding granularity (bf16 sublane packing)
SMALL_L = 320                   # l_out <= SMALL_L (and all 1x1 convs) -> plain XLA path
VMEM_LIMIT = 32 * 1024 * 1024   # explicit scoped-VMEM limit (safe on v5e/v6e/v7x)
TILE_BUDGET = 18 * 1024 * 1024  # per-call VMEM budget used when picking the lane tile


def _round_up(x, m):
    return ((x + m - 1) // m) * m


def _pick_lane_tile(lp, nbatch, s, cinp, coutp, k, cap=2048, budget=TILE_BUDGET):
    """Largest multiple of 128 dividing lp that fits the VMEM budget (<= cap)."""
    def vmem_bytes(t):
        return (k * coutp * cinp * 2            # resident weight taps (bf16)
                + 2 * (s * cinp * t * 2)        # main input block, double-buffered
                + 2 * (s * cinp * LANE * 2)     # halo block, double-buffered
                + 2 * (coutp * t * 2)           # output block, double-buffered
                + s * cinp * (t + LANE) * 2     # assembly scratch
                + coutp * t * 4 + coutp * 4)    # f32 accumulator + shift
    cands = [t for t in range(LANE, min(lp, cap) + 1, LANE)
             if lp % t == 0 and vmem_bytes(t) <= budget]
    if not cands:
        cands = [LANE]
    best = max(cands)
    # keep >= 2 grid items so a second TensorCore (v7x) is never idle at batch=1
    if nbatch * (lp // best) < 2:
        multi = [t for t in cands if lp // t >= 2]
        if multi:
            best = max(multi)
    return best


# --------------------------------------------------------------------------
# Pallas conv kernel: in-kernel im2col (shifted reads) + K tap dots + shift + act
# --------------------------------------------------------------------------
def _make_conv_kernel(k, d, s, tl, act):
    def kernel(w_ref, x_ref, xh_ref, t_ref, o_ref, xw_ref):
        # assemble [current tile | 128-lane halo] once into VMEM scratch
        xw_ref[:, :, :tl] = x_ref[0]
        xw_ref[:, :, tl:] = xh_ref[0]
        xw = xw_ref[...]                                   # (s, cinp, tl+128) bf16
        acc = None
        for t in range(k):                                 # tap loop (static)
            ph, off = (t * d) % s, (t * d) // s
            xs = xw[ph, :, off:off + tl]                   # shifted VMEM read
            part = jnp.dot(w_ref[t], xs, preferred_element_type=jnp.float32)
            acc = part if acc is None else acc + part
        y = acc + t_ref[...]                               # folded BN shift / bias
        if act == "relu":
            y = jnp.maximum(y, 0.0)
        o_ref[0] = y.astype(o_ref.dtype)                   # bf16, lane-dense store
    return kernel


@functools.partial(jax.jit,
                   static_argnames=("cout", "stride", "padding", "dilation", "act"))
def _conv1d_pallas(x, taps, shift, *, cout, stride, padding, dilation, act):
    """PyTorch-semantics Conv1d (NCL) with in-kernel im2col; bf16 activations."""
    n, cin, l = x.shape
    k, coutp, cinp = taps.shape
    s, d = stride, dilation
    eff_k = (k - 1) * d + 1
    l_out = (l + 2 * padding - eff_k) // s + 1
    lp = _round_up(l_out, LANE)
    width = lp + LANE                          # per-phase length incl. halo block
    need = s * width                           # raw (conv-padded) samples required
    right = max(0, need - (l + padding))
    xp = jnp.pad(x.astype(jnp.bfloat16),
                 ((0, 0), (0, cinp - cin), (padding, right)))
    if s == 1:
        phases = xp[:, None, :, :width]                                  # (n,1,cinp,width)
    else:                                       # stride-2: even/odd phase split
        phases = jnp.stack([xp[:, :, m::s][:, :, :width] for m in range(s)], axis=1)

    tl = _pick_lane_tile(lp, n, s, cinp, coutp, k)
    grid = (n, lp // tl)
    out = pl.pallas_call(
        _make_conv_kernel(k, d, s, tl, act),
        out_shape=jax.ShapeDtypeStruct((n, coutp, lp), jnp.bfloat16),
        grid_spec=pltpu.PrefetchScalarGridSpec(
            num_scalar_prefetch=0,
            grid=grid,
            in_specs=[
                pl.BlockSpec((k, coutp, cinp), lambda i, j: (0, 0, 0)),      # weights
                pl.BlockSpec((1, s, cinp, tl), lambda i, j: (i, 0, 0, j)),   # tile
                pl.BlockSpec((1, s, cinp, LANE),                             # halo
                             lambda i, j: (i, 0, 0, (j + 1) * (tl // LANE))),
                pl.BlockSpec((coutp, 1), lambda i, j: (0, 0)),               # shift
            ],
            out_specs=pl.BlockSpec((1, coutp, tl), lambda i, j: (i, 0, j)),
            scratch_shapes=[pltpu.VMEM((s, cinp, tl + LANE), jnp.bfloat16)],
        ),
        compiler_params=pltpu.CompilerParams(
            dimension_semantics=("parallel", "parallel"),
            vmem_limit_bytes=VMEM_LIMIT),
    )(taps, phases, phases, shift)
    return out[:, :cout, :l_out]
    # TODO(synk): the small left-pad / phase split is still one host-side copy per
    # conv; a left-halo block in the kernel would fold it in entirely.


@functools.partial(jax.jit, static_argnames=("stride", "padding", "dilation", "act"))
def _conv1d_xla(x, w, shift, *, stride, padding, dilation, act):
    """Plain-XLA path for 1x1 convs and low-resolution branches (tiny GEMMs)."""
    y = lax.conv_general_dilated(
        x.astype(jnp.float32), w.astype(jnp.float32),
        window_strides=(stride,), padding=[(padding, padding)],
        rhs_dilation=(dilation,),
        dimension_numbers=("NCH", "OIH", "NCH"))
    y = y + shift[None, :, None]
    if act == "relu":
        y = jnp.maximum(y, 0.0)
    elif act == "sigmoid":
        y = jax.nn.sigmoid(y)
    return y.astype(jnp.bfloat16)


def conv_apply(p, x, *, stride=1, padding=0, dilation=1, act="none"):
    cout, cin, k = p["w"].shape
    l = x.shape[-1]
    eff_k = (k - 1) * dilation + 1
    l_out = (l + 2 * padding - eff_k) // stride + 1
    if k == 1 or l_out <= SMALL_L:
        return _conv1d_xla(x, p["w"], p["shift_v"], stride=stride, padding=padding,
                           dilation=dilation, act=act)
    return _conv1d_pallas(x, p["taps"], p["shift"], cout=cout, stride=stride,
                          padding=padding, dilation=dilation, act=act)


# --------------------------------------------------------------------------
# Small fused jnp helpers (GC module tail + residual, 1x1 heads) -- f32 math
# --------------------------------------------------------------------------
@jax.jit
def _gc_residual_tail(h, identity, mw, mb, a1w, a1b, lnw, lnb, a2w, a2b):
    h = h.astype(jnp.float32)
    identity = identity.astype(jnp.float32)
    mask = jnp.einsum("oc,ncl->nol", mw, h) + mb[None, :, None]       # (N, 1, L)
    prob = jax.nn.softmax(mask, axis=2)
    context = jnp.einsum("ncl,nkl->nck", h, prob)                     # (N, C, 1)
    a = jnp.einsum("oc,ncl->nol", a1w, context) + a1b[None, :, None]  # (N, r, 1)
    mu = jnp.mean(a, axis=(1, 2), keepdims=True)                      # LayerNorm([r,1])
    var = jnp.mean((a - mu) ** 2, axis=(1, 2), keepdims=True)
    a = (a - mu) / jnp.sqrt(var + 1e-5) * lnw[None] + lnb[None]
    a = jnp.maximum(a, 0.0)
    att = jnp.einsum("oc,ncl->nol", a2w, a) + a2b[None, :, None]      # (N, C, 1)
    gated = h * jax.nn.sigmoid(att)                                   # mode='mul'
    return jnp.maximum(gated + identity, 0.0).astype(jnp.bfloat16)


@jax.jit
def _final_head(h, w, b):
    h = h.astype(jnp.float32)
    y = jnp.einsum("oc,ncl->nol", w, h) + b[None, :, None]            # 1x1, Cout=2
    y = jax.nn.sigmoid(y)
    return y.transpose(0, 2, 1)                                       # (N, L, 2)


# --------------------------------------------------------------------------
# Deterministic parameter construction (synthetic; BN folded into weights)
# --------------------------------------------------------------------------
class KeyGen:
    def __init__(self, seed):
        self._key = jax.random.PRNGKey(seed)

    def __call__(self):
        self._key, sub = jax.random.split(self._key)
        return sub


def _init_conv(kg, cout, cin, k, bias=True):
    fan_in = cin * k
    w = jax.random.normal(kg(), (cout, cin, k), jnp.float32) * np.sqrt(2.0 / fan_in)
    if bias:
        b = 0.01 * jax.random.normal(kg(), (cout,), jnp.float32)
    else:
        b = jnp.zeros((cout,), jnp.float32)
    return w, b


def init_conv_fused(kg, cout, cin, k, *, bias=True, bn=False):
    """Conv1d (+ optional eval-mode BN folded into weights/shift), padded at init."""
    w, b = _init_conv(kg, cout, cin, k, bias)
    if bn:
        gamma = 1.0 + 0.1 * jax.random.normal(kg(), (cout,), jnp.float32)
        beta = 0.1 * jax.random.normal(kg(), (cout,), jnp.float32)
        mean = jnp.zeros((cout,), jnp.float32)   # running_mean (default init)
        var = jnp.ones((cout,), jnp.float32)     # running_var  (default init)
        scale = gamma / jnp.sqrt(var + 1e-5)
        shift = (b - mean) * scale + beta
    else:
        scale = jnp.ones((cout,), jnp.float32)
        shift = b
    w_fold = w * scale[:, None, None]            # BN scale folded into the weights
    coutp, cinp = _round_up(cout, CPAD), _round_up(cin, CPAD)
    taps = jnp.transpose(w_fold, (2, 0, 1))                       # (k, cout, cin)
    taps = jnp.pad(taps, ((0, 0), (0, coutp - cout), (0, cinp - cin)))
    return {"w": w_fold,                                          # f32, for XLA path
            "shift_v": shift,
            "taps": taps.astype(jnp.bfloat16),                    # (k, coutp, cinp)
            "shift": jnp.pad(shift, (0, coutp - cout)).reshape(coutp, 1)}


def init_conv_1x1(kg, cout, cin, bias=True):
    w, b = _init_conv(kg, cout, cin, 1, bias)
    return {"w": w[:, :, 0], "b": b}


def init_gc(kg, channels, reduction=16):
    r = max(channels // reduction, 1)
    return {"att1": init_conv_1x1(kg, r, channels),
            "ln_w": jnp.ones((r, 1), jnp.float32),
            "ln_b": jnp.zeros((r, 1), jnp.float32),
            "att2": init_conv_1x1(kg, channels, r),
            "mask": init_conv_1x1(kg, 1, channels)}


def init_residual_block(kg, in_ch, out_ch, down=False):
    p = {"down": down,
         "conv1": init_conv_fused(kg, out_ch, in_ch, 7, bn=True),
         "conv2": init_conv_fused(kg, out_ch, out_ch, 7, bn=True),
         "gc": init_gc(kg, out_ch)}
    if down:
        p["down_sample"] = init_conv_fused(kg, out_ch, in_ch, 1)
    return p


def init_stage_module(kg, stage, out_branches, c):
    branches = [[init_residual_block(kg, c * 2 ** i, c * 2 ** i) for _ in range(3)]
                for i in range(stage)]
    fuse = []
    for i in range(out_branches):
        row = []
        for j in range(stage):
            if i == j:
                row.append(None)
            elif i < j:
                row.append({"conv": init_conv_fused(kg, c * 2 ** i, c * 2 ** j, 1, bn=True)})
            else:
                steps = []
                ch_in = c * 2 ** j
                for s in range(i - j):
                    ch_out = c * 2 ** (j + s + 1)
                    steps.append(init_conv_fused(kg, ch_out, ch_in, 7, bn=True))
                    ch_in = ch_out
                row.append({"downs": steps})
        fuse.append(row)
    return {"branches": branches, "fuse": fuse}


def init_final_layer(kg, in_ch):
    return {"fuse": init_conv_fused(kg, in_ch // 2, in_ch, 7, bn=True),
            "final": init_conv_1x1(kg, 2, in_ch // 2)}


def init_yolo_1d(kg, c=16, stem1=8, stem2=16):
    # original: stem1=64, stem2=128, c=128 (the only self-consistent full-size config)
    p = {}
    p["layer1_conv"] = init_conv_fused(kg, stem1, 1, 16, bn=True)
    p["layer2"] = [init_residual_block(kg, stem1, stem2, down=True),
                   init_residual_block(kg, stem2, stem2),
                   init_residual_block(kg, stem2, stem2)]
    p["transition1"] = init_conv_fused(kg, 2 * c, stem2, 7, bias=False, bn=True)
    p["stage2"] = init_stage_module(kg, 2, 2, c)
    p["transition2"] = init_conv_fused(kg, 4 * c, 2 * c, 7, bias=False, bn=True)
    p["stage3"] = [init_stage_module(kg, 3, 3, c), init_stage_module(kg, 3, 3, c)]
    p["transition3"] = init_conv_fused(kg, 8 * c, 4 * c, 7, bias=False, bn=True)
    p["stage4"] = init_stage_module(kg, 4, 4, c)
    p["conv_o5"] = init_final_layer(kg, 8 * c)
    p["conv_o4"] = init_final_layer(kg, 4 * c)
    p["conv_o3"] = init_final_layer(kg, 2 * c)
    p["conv_o2"] = init_final_layer(kg, 1 * c)
    return p


# --------------------------------------------------------------------------
# Forward pass (eval / inference path)
# --------------------------------------------------------------------------
UPSAMPLE_SIZE = {0: 625, 1: 313, 2: 157}   # hard-coded in the PyTorch StageModule


def residual_block_apply(p, x, *, stride=1):
    # Dropout layers are identity in eval mode.
    if p["down"]:
        h = conv_apply(p["conv1"], x, stride=stride, padding=3, dilation=1, act="relu")
        h = conv_apply(p["conv2"], h, stride=1, padding=3, dilation=1, act="none")
        identity = conv_apply(p["down_sample"], x, stride=2, padding=0, act="none")
    else:
        h = conv_apply(p["conv1"], x, stride=stride, padding=6, dilation=2, act="relu")
        h = conv_apply(p["conv2"], h, stride=1, padding=6, dilation=2, act="none")
        identity = x
    g = p["gc"]
    return _gc_residual_tail(h, identity,
                             g["mask"]["w"], g["mask"]["b"],
                             g["att1"]["w"], g["att1"]["b"],
                             g["ln_w"], g["ln_b"],
                             g["att2"]["w"], g["att2"]["b"])


def upsample_nearest(x, size):
    l = x.shape[-1]
    idx = (jnp.arange(size) * l) // size                 # PyTorch 'nearest' indexing
    return x[:, :, idx]


def stage_module_apply(p, xs):
    stage = len(p["branches"])
    out_branches = len(p["fuse"])
    ys = []
    for i in range(stage):
        h = xs[i]
        for blk in p["branches"][i]:
            h = residual_block_apply(blk, h)
        ys.append(h)
    fused = []
    for i in range(out_branches):
        acc = None
        for j in range(stage):
            fp = p["fuse"][i][j]
            if i == j:
                z = ys[j]
            elif i < j:
                z = conv_apply(fp["conv"], ys[j], stride=1, padding=0, act="none")
                z = upsample_nearest(z, UPSAMPLE_SIZE[i])
            else:
                z = ys[j]
                nsteps = len(fp["downs"])
                for s, cp in enumerate(fp["downs"]):
                    z = conv_apply(cp, z, stride=2, padding=3,
                                   act="relu" if s < nsteps - 1 else "none")
            zf = z.astype(jnp.float32)
            acc = zf if acc is None else acc + zf
        fused.append(jnp.maximum(acc, 0.0).astype(jnp.bfloat16))
    return fused


def final_layer_apply(p, x):
    x = conv_apply(p["fuse"], x, stride=1, padding=3, act="relu")
    return _final_head(x, p["final"]["w"], p["final"]["b"])   # (N, L, 2), f32


def yolo_layer_infer(f):
    # inference branch of Yolo_layer: add grid offset, rescale to sample index
    N, L, _ = f.shape
    offset = jnp.arange(L, dtype=jnp.float32)
    pt = (f[..., 0] + offset[None, :]) / L * 5000.0
    return jnp.stack([pt, f[..., 1]], axis=-1)


def yolo_1d_forward(p, x):
    # layer_1: Conv(1->stem1, 16, s2, p7) + BN + ReLU + MaxPool(2, 2)
    h = conv_apply(p["layer1_conv"], x, stride=2, padding=7, act="relu")
    N, C, L = h.shape
    h = h.reshape(N, C, L // 2, 2).max(axis=-1)
    # layer_2: down block (stride 2) + 2 dilated residual blocks
    h = residual_block_apply(p["layer2"][0], h, stride=2)
    h = residual_block_apply(p["layer2"][1], h)
    h = residual_block_apply(p["layer2"][2], h)
    # transitions + HRNet stages
    xs = [h, conv_apply(p["transition1"], h, stride=2, padding=3, act="relu")]
    xs = stage_module_apply(p["stage2"], xs)
    xs = [xs[0], xs[1],
          conv_apply(p["transition2"], xs[-1], stride=2, padding=3, act="relu")]
    xs = stage_module_apply(p["stage3"][0], xs)
    xs = stage_module_apply(p["stage3"][1], xs)
    xs = [xs[0], xs[1], xs[2],
          conv_apply(p["transition3"], xs[-1], stride=2, padding=3, act="relu")]
    out2, out3, out4, out5 = stage_module_apply(p["stage4"], xs)
    # heads + YOLO decode (inference path), concatenated along the region axis
    f5 = final_layer_apply(p["conv_o5"], out5)
    f4 = final_layer_apply(p["conv_o4"], out4)
    f3 = final_layer_apply(p["conv_o3"], out3)
    f2 = final_layer_apply(p["conv_o2"], out2)
    y5, y4, y3, y2 = (yolo_layer_infer(f) for f in (f5, f4, f3, f2))
    return jnp.concatenate([y5, y4, y3, y2], axis=1)

# TODO(synk): the training path (encoder / MSE+BCE losses) and the NMS-style
# predict() post-processing use data-dependent boolean masking and Python while
# loops; they are host-side / loss code and are not part of this inference kernel.


if __name__ == "__main__":
    batch, length = 2, 5000          # length must be 5000 (hard-coded Upsample sizes)
    x = jax.random.normal(jax.random.PRNGKey(0), (batch, 1, length), jnp.float32)
    params = init_yolo_1d(KeyGen(42))

    out = yolo_1d_forward(params, x)
    out = jax.block_until_ready(out)

    assert out.shape == (batch, 79 + 157 + 313 + 625, 2), out.shape
    assert bool(jnp.all(jnp.isfinite(out)))
    print("KERNEL_OK")
</pallas_src>

<mosaic_0001>
module attributes {stable_mosaic.version = 11 : i64} {
  func.func @kernel(%arg0: i32, %arg1: i32, %arg2: memref<16x16x16xbf16, #tpu.memory_space<vmem>>, %arg3: memref<1x2x16x1280xbf16, #tpu.memory_space<vmem>>, %arg4: memref<1x2x16x128xbf16, #tpu.memory_space<vmem>>, %arg5: memref<16x1xf32, #tpu.memory_space<vmem>>, %arg6: memref<1x16x1280xbf16, #tpu.memory_space<vmem>>, %arg7: memref<2x16x1408xbf16, #tpu.memory_space<vmem>>) attributes {dimension_semantics = [#tpu.dimension_semantics<parallel>, #tpu.dimension_semantics<parallel>], iteration_bounds = array<i64: 2, 2>, scalar_prefetch = 0 : i64, scratch_operands = 1 : i64, tpu.core_type = #tpu.core_type<tc>, window_params = [{pipeline_mode = #tpu.pipeline_mode<synchronous>, transform_indices = @transform_0, window_bounds = array<i64: 16, 16, 16>}, {transform_indices = @transform_1, window_bounds = array<i64: 1, 2, 16, 1280>}, {transform_indices = @transform_2, window_bounds = array<i64: 1, 2, 16, 128>}, {pipeline_mode = #tpu.pipeline_mode<synchronous>, transform_indices = @transform_3, window_bounds = array<i64: 16, 1>}, {transform_indices = @transform_4, window_bounds = array<i64: 1, 16, 1280>}]} {
    %c0 = arith.constant 0 : index
    %c0_0 = arith.constant 0 : index
    %c0_1 = arith.constant 0 : index
    %c0_2 = arith.constant 0 : index
    %0 = vector.load %arg3[%c0, %c0_0, %c0_1, %c0_2] : memref<1x2x16x1280xbf16, #tpu.memory_space<vmem>>, vector<1x2x16x1280xbf16>
    %1 = vector.shape_cast %0 : vector<1x2x16x1280xbf16> to vector<2x16x1280xbf16>
    %c0_3 = arith.constant 0 : index
    %c0_4 = arith.constant 0 : index
    %c0_5 = arith.constant 0 : index
    %2 = vector.load %arg7[%c0_3, %c0_4, %c0_5] : memref<2x16x1408xbf16, #tpu.memory_space<vmem>>, vector<2x16x1280xbf16>
    tpu.vector_store %arg7[%c0_3, %c0_4, %c0_5], %1 {strides = array<i32>} : memref<2x16x1408xbf16, #tpu.memory_space<vmem>>, vector<2x16x1280xbf16>,
    %c0_6 = arith.constant 0 : index
    %c0_7 = arith.constant 0 : index
    %c0_8 = arith.constant 0 : index
    %c0_9 = arith.constant 0 : index
    %3 = vector.load %arg4[%c0_6, %c0_7, %c0_8, %c0_9] : memref<1x2x16x128xbf16, #tpu.memory_space<vmem>>, vector<1x2x16x128xbf16>
    %4 = vector.shape_cast %3 : vector<1x2x16x128xbf16> to vector<2x16x128xbf16>
    %c0_10 = arith.constant 0 : index
    %c0_11 = arith.constant 0 : index
    %c1280 = arith.constant 1280 : index
    %5 = vector.load %arg7[%c0_10, %c0_11, %c1280] : memref<2x16x1408xbf16, #tpu.memory_space<vmem>>, vector<2x16x128xbf16>
    tpu.vector_store %arg7[%c0_10, %c0_11, %c1280], %4 {strides = array<i32>} : memref<2x16x1408xbf16, #tpu.memory_space<vmem>>, vector<2x16x128xbf16>,
    %c0_12 = arith.constant 0 : index
    %c0_13 = arith.constant 0 : index
    %c0_14 = arith.constant 0 : index
    %6 = vector.load %arg7[%c0_12, %c0_13, %c0_14] : memref<2x16x1408xbf16, #tpu.memory_space<vmem>>, vector<2x16x1408xbf16>
    %7 = vector.extract_strided_slice %6 {offsets = [0, 0, 0], sizes = [1, 16, 1280], strides = [1, 1, 1]} : vector<2x16x1408xbf16> to vector<1x16x1280xbf16>
    %8 = vector.shape_cast %7 : vector<1x16x1280xbf16> to vector<16x1280xbf16>
    %c0_15 = arith.constant 0 : index
    %c0_16 = arith.constant 0 : index
    %c0_17 = arith.constant 0 : index
    %9 = vector.load %arg2[%c0_15, %c0_16, %c0_17] : memref<16x16x16xbf16, #tpu.memory_space<vmem>>, vector<1x16x16xbf16>
    %10 = vector.shape_cast %9 : vector<1x16x16xbf16> to vector<16x16xbf16>
    %cst = arith.constant dense<0.000000e+00> : vector<16x1280xf32>
    %11 = tpu.matmul %10, %8, %cst {dimension_numbers = #tpu.dot_dimension_numbers<[1], [0], [0], [1], [0, 0, 1, 1], [], []>} : vector<16x16xbf16>, vector<16x1280xbf16>, vector<16x1280xf32> -> vector<16x1280xf32>
    %12 = vector.extract_strided_slice %6 {offsets = [1, 0, 0], sizes = [1, 16, 1280], strides = [1, 1, 1]} : vector<2x16x1408xbf16> to vector<1x16x1280xbf16>
    %13 = vector.shape_cast %12 : vector<1x16x1280xbf16> to vector<16x1280xbf16>
    %c1 = arith.constant 1 : index
    %c0_18 = arith.constant 0 : index
    %c0_19 = arith.constant 0 : index
    %14 = vector.load %arg2[%c1, %c0_18, %c0_19] : memref<16x16x16xbf16, #tpu.memory_space<vmem>>, vector<1x16x16xbf16>
    %15 = vector.shape_cast %14 : vector<1x16x16xbf16> to vector<16x16xbf16>
    %cst_20 = arith.constant dense<0.000000e+00> : vector<16x1280xf32>
    %16 = tpu.matmul %15, %13, %cst_20 {dimension_numbers = #tpu.dot_dimension_numbers<[1], [0], [0], [1], [0, 0, 1, 1], [], []>} : vector<16x16xbf16>, vector<16x1280xbf16>, vector<16x1280xf32> -> vector<16x1280xf32>
    %17 = arith.addf %11, %16 : vector<16x1280xf32>
    %18 = vector.extract_strided_slice %6 {offsets = [0, 0, 1], sizes = [1, 16, 1280], strides = [1, 1, 1]} : vector<2x16x1408xbf16> to vector<1x16x1280xbf16>
    %19 = vector.shape_cast %18 : vector<1x16x1280xbf16> to vector<16x1280xbf16>
    %c2 = arith.constant 2 : index
    %c0_21 = arith.constant 0 : index
    %c0_22 = arith.constant 0 : index
    %20 = vector.load %arg2[%c2, %c0_21, %c0_22] : memref<16x16x16xbf16, #tpu.memory_space<vmem>>, vector<1x16x16xbf16>
    %21 = vector.shape_cast %20 : vector<1x16x16xbf16> to vector<16x16xbf16>
    %cst_23 = arith.constant dense<0.000000e+00> : vector<16x1280xf32>
    %22 = tpu.matmul %21, %19, %cst_23 {dimension_numbers = #tpu.dot_dimension_numbers<[1], [0], [0], [1], [0, 0, 1, 1], [], []>} : vector<16x16xbf16>, vector<16x1280xbf16>, vector<16x1280xf32> -> vector<16x1280xf32>
    %23 = arith.addf %17, %22 : vector<16x1280xf32>
    %24 = vector.extract_strided_slice %6 {offsets = [1, 0, 1], sizes = [1, 16, 1280], strides = [1, 1, 1]} : vector<2x16x1408xbf16> to vector<1x16x1280xbf16>
    %25 = vector.shape_cast %24 : vector<1x16x1280xbf16> to vector<16x1280xbf16>
    %c3 = arith.constant 3 : index
    %c0_24 = arith.constant 0 : index
    %c0_25 = arith.constant 0 : index
    %26 = vector.load %arg2[%c3, %c0_24, %c0_25] : memref<16x16x16xbf16, #tpu.memory_space<vmem>>, vector<1x16x16xbf16>
    %27 = vector.shape_cast %26 : vector<1x16x16xbf16> to vector<16x16xbf16>
    %cst_26 = arith.constant dense<0.000000e+00> : vector<16x1280xf32>
    %28 = tpu.matmul %27, %25, %cst_26 {dimension_numbers = #tpu.dot_dimension_numbers<[1], [0], [0], [1], [0, 0, 1, 1], [], []>} : vector<16x16xbf16>, vector<16x1280xbf16>, vector<16x1280xf32> -> vector<16x1280xf32>
    %29 = arith.addf %23, %28 : vector<16x1280xf32>
    %30 = vector.extract_strided_slice %6 {offsets = [0, 0, 2], sizes = [1, 16, 1280], strides = [1, 1, 1]} : vector<2x16x1408xbf16> to vector<1x16x1280xbf16>
    %31 = vector.shape_cast %30 : vector<1x16x1280xbf16> to vector<16x1280xbf16>
    %c4 = arith.constant 4 : index
    %c0_27 = arith.constant 0 : index
    %c0_28 = arith.constant 0 : index
    %32 = vector.load %arg2[%c4, %c0_27, %c0_28] : memref<16x16x16xbf16, #tpu.memory_space<vmem>>, vector<1x16x16xbf16>
    %33 = vector.shape_cast %32 : vector<1x16x16xbf16> to vector<16x16xbf16>
    %cst_29 = arith.constant dense<0.000000e+00> : vector<16x1280xf32>
    %34 = tpu.matmul %33, %31, %cst_29 {dimension_numbers = #tpu.dot_dimension_numbers<[1], [0], [0], [1], [0, 0, 1, 1], [], []>} : vector<16x16xbf16>, vector<16x1280xbf16>, vector<16x1280xf32> -> vector<16x1280xf32>
    %35 = arith.addf %29, %34 : vector<16x1280xf32>
    %36 = vector.extract_strided_slice %6 {offsets = [1, 0, 2], sizes = [1, 16, 1280], strides = [1, 1, 1]} : vector<2x16x1408xbf16> to vector<1x16x1280xbf16>
    %37 = vector.shape_cast %36 : vector<1x16x1280xbf16> to vector<16x1280xbf16>
    %c5 = arith.constant 5 : index
    %c0_30 = arith.constant 0 : index
    %c0_31 = arith.constant 0 : index
    %38 = vector.load %arg2[%c5, %c0_30, %c0_31] : memref<16x16x16xbf16, #tpu.memory_space<vmem>>, vector<1x16x16xbf16>
    %39 = vector.shape_cast %38 : vector<1x16x16xbf16> to vector<16x16xbf16>
    %cst_32 = arith.constant dense<0.000000e+00> : vector<16x1280xf32>
    %40 = tpu.matmul %39, %37, %cst_32 {dimension_numbers = #tpu.dot_dimension_numbers<[1], [0], [0], [1], [0, 0, 1, 1], [], []>} : vector<16x16xbf16>, vector<16x1280xbf16>, vector<16x1280xf32> -> vector<16x1280xf32>
    %41 = arith.addf %35, %40 : vector<16x1280xf32>
    %42 = vector.extract_strided_slice %6 {offsets = [0, 0, 3], sizes = [1, 16, 1280], strides = [1, 1, 1]} : vector<2x16x1408xbf16> to vector<1x16x1280xbf16>
    %43 = vector.shape_cast %42 : vector<1x16x1280xbf16> to vector<16x1280xbf16>
    %c6 = arith.constant 6 : index
    %c0_33 = arith.constant 0 : index
    %c0_34 = arith.constant 0 : index
    %44 = vector.load %arg2[%c6, %c0_33, %c0_34] : memref<16x16x16xbf16, #tpu.memory_space<vmem>>, vector<1x16x16xbf16>
    %45 = vector.shape_cast %44 : vector<1x16x16xbf16> to vector<16x16xbf16>
    %cst_35 = arith.constant dense<0.000000e+00> : vector<16x1280xf32>
    %46 = tpu.matmul %45, %43, %cst_35 {dimension_numbers = #tpu.dot_dimension_numbers<[1], [0], [0], [1], [0, 0, 1, 1], [], []>} : vector<16x16xbf16>, vector<16x1280xbf16>, vector<16x1280xf32> -> vector<16x1280xf32>
    %47 = arith.addf %41, %46 : vector<16x1280xf32>
    %48 = vector.extract_strided_slice %6 {offsets = [1, 0, 3], sizes = [1, 16, 1280], strides = [1, 1, 1]} : vector<2x16x1408xbf16> to vector<1x16x1280xbf16>
    %49 = vector.shape_cast %48 : vector<1x16x1280xbf16> to vector<16x1280xbf16>
    %c7 = arith.constant 7 : index
    %c0_36 = arith.constant 0 : index
    %c0_37 = arith.constant 0 : index
    %50 = vector.load %arg2[%c7, %c0_36, %c0_37] : memref<16x16x16xbf16, #tpu.memory_space<vmem>>, vector<1x16x16xbf16>
    %51 = vector.shape_cast %50 : vector<1x16x16xbf16> to vector<16x16xbf16>
    %cst_38 = arith.constant dense<0.000000e+00> : vector<16x1280xf32>
    %52 = tpu.matmul %51, %49, %cst_38 {dimension_numbers = #tpu.dot_dimension_numbers<[1], [0], [0], [1], [0, 0, 1, 1], [], []>} : vector<16x16xbf16>, vector<16x1280xbf16>, vector<16x1280xf32> -> vector<16x1280xf32>
    %53 = arith.addf %47, %52 : vector<16x1280xf32>
    %54 = vector.extract_strided_slice %6 {offsets = [0, 0, 4], sizes = [1, 16, 1280], strides = [1, 1, 1]} : vector<2x16x1408xbf16> to vector<1x16x1280xbf16>
    %55 = vector.shape_cast %54 : vector<1x16x1280xbf16> to vector<16x1280xbf16>
    %c8 = arith.constant 8 : index
    %c0_39 = arith.constant 0 : index
    %c0_40 = arith.constant 0 : index
    %56 = vector.load %arg2[%c8, %c0_39, %c0_40] : memref<16x16x16xbf16, #tpu.memory_space<vmem>>, vector<1x16x16xbf16>
    %57 = vector.shape_cast %56 : vector<1x16x16xbf16> to vector<16x16xbf16>
    %cst_41 = arith.constant dense<0.000000e+00> : vector<16x1280xf32>
    %58 = tpu.matmul %57, %55, %cst_41 {dimension_numbers = #tpu.dot_dimension_numbers<[1], [0], [0], [1], [0, 0, 1, 1], [], []>} : vector<16x16xbf16>, vector<16x1280xbf16>, vector<16x1280xf32> -> vector<16x1280xf32>
    %59 = arith.addf %53, %58 : vector<16x1280xf32>
    %60 = vector.extract_strided_slice %6 {offsets = [1, 0, 4], sizes = [1, 16, 1280], strides = [1, 1, 1]} : vector<2x16x1408xbf16> to vector<1x16x1280xbf16>
    %61 = vector.shape_cast %60 : vector<1x16x1280xbf16> to vector<16x1280xbf16>
    %c9 = arith.constant 9 : index
    %c0_42 = arith.constant 0 : index
    %c0_43 = arith.constant 0 : index
    %62 = vector.load %arg2[%c9, %c0_42, %c0_43] : memref<16x16x16xbf16, #tpu.memory_space<vmem>>, vector<1x16x16xbf16>
    %63 = vector.shape_cast %62 : vector<1x16x16xbf16> to vector<16x16xbf16>
    %cst_44 = arith.constant dense<0.000000e+00> : vector<16x1280xf32>
    %64 = tpu.matmul %63, %61, %cst_44 {dimension_numbers = #tpu.dot_dimension_numbers<[1], [0], [0], [1], [0, 0, 1, 1], [], []>} : vector<16x16xbf16>, vector<16x1280xbf16>, vector<16x1280xf32> -> vector<16x1280xf32>
    %65 = arith.addf %59, %64 : vector<16x1280xf32>
    %66 = vector.extract_strided_slice %6 {offsets = [0, 0, 5], sizes = [1, 16, 1280], strides = [1, 1, 1]} : vector<2x16x1408xbf16> to vector<1x16x1280xbf16>
    %67 = vector.shape_cast %66 : vector<1x16x1280xbf16> to vector<16x1280xbf16>
    %c10 = arith.constant 10 : index
    %c0_45 = arith.constant 0 : index
    %c0_46 = arith.constant 0 : index
    %68 = vector.load %arg2[%c10, %c0_45, %c0_46] : memref<16x16x16xbf16, #tpu.memory_space<vmem>>, vector<1x16x16xbf16>
    %69 = vector.shape_cast %68 : vector<1x16x16xbf16> to vector<16x16xbf16>
    %cst_47 = arith.constant dense<0.000000e+00> : vector<16x1280xf32>
    %70 = tpu.matmul %69, %67, %cst_47 {dimension_numbers = #tpu.dot_dimension_numbers<[1], [0], [0], [1], [0, 0, 1, 1], [], []>} : vector<16x16xbf16>, vector<16x1280xbf16>, vector<16x1280xf32> -> vector<16x1280xf32>
    %71 = arith.addf %65, %70 : vector<16x1280xf32>
    %72 = vector.extract_strided_slice %6 {offsets = [1, 0, 5], sizes = [1, 16, 1280], strides = [1, 1, 1]} : vector<2x16x1408xbf16> to vector<1x16x1280xbf16>
    %73 = vector.shape_cast %72 : vector<1x16x1280xbf16> to vector<16x1280xbf16>
    %c11 = arith.constant 11 : index
    %c0_48 = arith.constant 0 : index
    %c0_49 = arith.constant 0 : index
    %74 = vector.load %arg2[%c11, %c0_48, %c0_49] : memref<16x16x16xbf16, #tpu.memory_space<vmem>>, vector<1x16x16xbf16>
    %75 = vector.shape_cast %74 : vector<1x16x16xbf16> to vector<16x16xbf16>
    %cst_50 = arith.constant dense<0.000000e+00> : vector<16x1280xf32>
    %76 = tpu.matmul %75, %73, %cst_50 {dimension_numbers = #tpu.dot_dimension_numbers<[1], [0], [0], [1], [0, 0, 1, 1], [], []>} : vector<16x16xbf16>, vector<16x1280xbf16>, vector<16x1280xf32> -> vector<16x1280xf32>
    %77 = arith.addf %71, %76 : vector<16x1280xf32>
    %78 = vector.extract_strided_slice %6 {offsets = [0, 0, 6], sizes = [1, 16, 1280], strides = [1, 1, 1]} : vector<2x16x1408xbf16> to vector<1x16x1280xbf16>
    %79 = vector.shape_cast %78 : vector<1x16x1280xbf16> to vector<16x1280xbf16>
    %c12 = arith.constant 12 : index
    %c0_51 = arith.constant 0 : index
    %c0_52 = arith.constant 0 : index
    %80 = vector.load %arg2[%c12, %c0_51, %c0_52] : memref<16x16x16xbf16, #tpu.memory_space<vmem>>, vector<1x16x16xbf16>
    %81 = vector.shape_cast %80 : vector<1x16x16xbf16> to vector<16x16xbf16>
    %cst_53 = arith.constant dense<0.000000e+00> : vector<16x1280xf32>
    %82 = tpu.matmul %81, %79, %cst_53 {dimension_numbers = #tpu.dot_dimension_numbers<[1], [0], [0], [1], [0, 0, 1, 1], [], []>} : vector<16x16xbf16>, vector<16x1280xbf16>, vector<16x1280xf32> -> vector<16x1280xf32>
    %83 = arith.addf %77, %82 : vector<16x1280xf32>
    %84 = vector.extract_strided_slice %6 {offsets = [1, 0, 6], sizes = [1, 16, 1280], strides = [1, 1, 1]} : vector<2x16x1408xbf16> to vector<1x16x1280xbf16>
    %85 = vector.shape_cast %84 : vector<1x16x1280xbf16> to vector<16x1280xbf16>
    %c13 = arith.constant 13 : index
    %c0_54 = arith.constant 0 : index
    %c0_55 = arith.constant 0 : index
    %86 = vector.load %arg2[%c13, %c0_54, %c0_55] : memref<16x16x16xbf16, #tpu.memory_space<vmem>>, vector<1x16x16xbf16>
    %87 = vector.shape_cast %86 : vector<1x16x16xbf16> to vector<16x16xbf16>
    %cst_56 = arith.constant dense<0.000000e+00> : vector<16x1280xf32>
    %88 = tpu.matmul %87, %85, %cst_56 {dimension_numbers = #tpu.dot_dimension_numbers<[1], [0], [0], [1], [0, 0, 1, 1], [], []>} : vector<16x16xbf16>, vector<16x1280xbf16>, vector<16x1280xf32> -> vector<16x1280xf32>
    %89 = arith.addf %83, %88 : vector<16x1280xf32>
    %90 = vector.extract_strided_slice %6 {offsets = [0, 0, 7], sizes = [1, 16, 1280], strides = [1, 1, 1]} : vector<2x16x1408xbf16> to vector<1x16x1280xbf16>
    %91 = vector.shape_cast %90 : vector<1x16x1280xbf16> to vector<16x1280xbf16>
    %c14 = arith.constant 14 : index
    %c0_57 = arith.constant 0 : index
    %c0_58 = arith.constant 0 : index
    %92 = vector.load %arg2[%c14, %c0_57, %c0_58] : memref<16x16x16xbf16, #tpu.memory_space<vmem>>, vector<1x16x16xbf16>
    %93 = vector.shape_cast %92 : vector<1x16x16xbf16> to vector<16x16xbf16>
    %cst_59 = arith.constant dense<0.000000e+00> : vector<16x1280xf32>
    %94 = tpu.matmul %93, %91, %cst_59 {dimension_numbers = #tpu.dot_dimension_numbers<[1], [0], [0], [1], [0, 0, 1, 1], [], []>} : vector<16x16xbf16>, vector<16x1280xbf16>, vector<16x1280xf32> -> vector<16x1280xf32>
    %95 = arith.addf %89, %94 : vector<16x1280xf32>
    %96 = vector.extract_strided_slice %6 {offsets = [1, 0, 7], sizes = [1, 16, 1280], strides = [1, 1, 1]} : vector<2x16x1408xbf16> to vector<1x16x1280xbf16>
    %97 = vector.shape_cast %96 : vector<1x16x1280xbf16> to vector<16x1280xbf16>
    %c15 = arith.constant 15 : index
    %c0_60 = arith.constant 0 : index
    %c0_61 = arith.constant 0 : index
    %98 = vector.load %arg2[%c15, %c0_60, %c0_61] : memref<16x16x16xbf16, #tpu.memory_space<vmem>>, vector<1x16x16xbf16>
    %99 = vector.shape_cast %98 : vector<1x16x16xbf16> to vector<16x16xbf16>
    %cst_62 = arith.constant dense<0.000000e+00> : vector<16x1280xf32>
    %100 = tpu.matmul %99, %97, %cst_62 {dimension_numbers = #tpu.dot_dimension_numbers<[1], [0], [0], [1], [0, 0, 1, 1], [], []>} : vector<16x16xbf16>, vector<16x1280xbf16>, vector<16x1280xf32> -> vector<16x1280xf32>
    %101 = arith.addf %95, %100 : vector<16x1280xf32>
    %c0_63 = arith.constant 0 : index
    %c0_64 = arith.constant 0 : index
    %102 = vector.load %arg5[%c0_63, %c0_64] : memref<16x1xf32, #tpu.memory_space<vmem>>, vector<16x1xf32>
    %103 = vector.broadcast %102 : vector<16x1xf32> to vector<16x1280xf32>
    %104 = arith.addf %101, %103 : vector<16x1280xf32>
    %cst_65 = arith.constant 0.000000e+00 : f32
    %105 = vector.broadcast %cst_65 : f32 to vector<16x1280xf32>
    %106 = arith.maximumf %104, %105 : vector<16x1280xf32>
    %107 = arith.truncf %106 : vector<16x1280xf32> to vector<16x1280xbf16>
    %c0_66 = arith.constant 0 : index
    %c0_67 = arith.constant 0 : index
    %c0_68 = arith.constant 0 : index
    %108 = vector.load %arg6[%c0_66, %c0_67, %c0_68] : memref<1x16x1280xbf16, #tpu.memory_space<vmem>>, vector<1x16x1280xbf16>
    %109 = vector.shape_cast %108 : vector<1x16x1280xbf16> to vector<16x1280xbf16>
    %110 = vector.shape_cast %107 : vector<16x1280xbf16> to vector<1x16x1280xbf16>
    tpu.vector_store %arg6[%c0_66, %c0_67, %c0_68], %110 {strides = array<i32>} : memref<1x16x1280xbf16, #tpu.memory_space<vmem>>, vector<1x16x1280xbf16>,
    return
  }
  func.func @transform_0(%arg0: i32, %arg1: i32) -> (i32, i32, i32) {
    %c0_i32 = arith.constant 0 : i32
    %c0_i32_0 = arith.constant 0 : i32
    %c0_i32_1 = arith.constant 0 : i32
    %c0_i32_2 = arith.constant 0 : i32
    return %c0_i32, %c0_i32_0, %c0_i32_1 : i32, i32, i32
  }
  func.func @transform_1(%arg0: i32, %arg1: i32) -> (i32, i32, i32, i32) {
    %c0_i32 = arith.constant 0 : i32
    %c0_i32_0 = arith.constant 0 : i32
    %c0_i32_1 = arith.constant 0 : i32
    return %arg0, %c0_i32, %c0_i32_0, %arg1 : i32, i32, i32, i32
  }
  func.func @transform_2(%arg0: i32, %arg1: i32) -> (i32, i32, i32, i32) {
    %c1_i32 = arith.constant 1 : i32
    %0 = arith.addi %arg1, %c1_i32 : i32
    %c10_i32 = arith.constant 10 : i32
    %1 = arith.muli %0, %c10_i32 : i32
    %c0_i32 = arith.constant 0 : i32
    %c0_i32_0 = arith.constant 0 : i32
    %c0_i32_1 = arith.constant 0 : i32
    return %arg0, %c0_i32, %c0_i32_0, %1 : i32, i32, i32, i32
  }
  func.func @transform_3(%arg0: i32, %arg1: i32) -> (i32, i32) {
    %c0_i32 = arith.constant 0 : i32
    %c0_i32_0 = arith.constant 0 : i32
    %c0_i32_1 = arith.constant 0 : i32
    return %c0_i32, %c0_i32_0 : i32, i32
  }
  func.func @transform_4(%arg0: i32, %arg1: i32) -> (i32, i32, i32) {
    %c0_i32 = arith.constant 0 : i32
    %c0_i32_0 = arith.constant 0 : i32
    return %arg0, %c0_i32, %arg1 : i32, i32, i32
  }
}

</mosaic_0001>

<llo_original>
// kernel: _conv1d_pallas.1
$region0: #{_conv1d_pallas.1}
  #allocation0 [shape = 'u32[]', space=smem, size = 0x4, offset = 0x4, fixed_abs, tag = 'smem constant byte address 0x4 - core index']
  #allocation1 [shape = 'u32[144,128]{1,0:T(1,128)}', space=vmem, size = 0x12000, scoped, tag = 'internal scratch']
  #allocation2 [shape = 'bf16[2,16,1408]{2,1,0:T(16,128)(2,1)}', space=vmem, size = 0x16000, scoped, tag = 'scratch operand']
  %s0 = inlined_call_operand.vmem [shape: bf16[16,16,16], index: 0, kind: input, shape index: {}]
  %s1 = inlined_call_operand.vmem [shape: bf16[2,2,16,2688], index: 1, kind: input, shape index: {}, may-alias: {1,2}]
  %s2 = inlined_call_operand.vmem [shape: bf16[2,2,16,2688], index: 2, kind: input, shape index: {}, may-alias: {1,2}]
  %s3 = inlined_call_operand.vmem [shape: f32[16,1], index: 3, kind: input, shape index: {}]
  %s4 = inlined_call_operand.vmem [shape: bf16[2,16,2560], index: 4, kind: output, shape index: {}]
  %s5 = sld [smem:[#allocation0]]
  $region175: #{_conv1d_pallas.1} parent=0
    _
  %s7 = ssub.s32 1, %s5
  %s8 = scalar_select 0, %s7, %s5
  $region1: #{_conv1d_pallas.1} parent=0
    #allocation3 [shape = 'u8[163840]{0}', space=vmem, size = 0x28000, scoped, tag = 'input window, operand 1']
    #allocation4 [shape = 'u8[16384]{0}', space=vmem, size = 0x4000, scoped, tag = 'input window, operand 2']
    #allocation5 [shape = 'u8[81920]{0}', space=vmem, size = 0x14000, scoped, tag = 'output window, operand 0']
    loop: start=0, step=1, limit=6
    $region2: #{_conv1d_pallas.1} parent=1 // loop_pre_header
      _
    $region3: #{_conv1d_pallas.1} parent=1 // loop_header
      %s10 = sphi 0, %s14
      %p11 = scmp.ge.s32.totalorder %s10, 6
      %s17 = sphi 0, %s29
      %s18 = sphi 0, %s25
      %s19 = sphi 0, %s17
      %s20 = sphi 0, %s18
      %s21 = sphi 0, %s19
      %s22 = sphi 0, %s20
      %s30 = sphi 0, %s30
      %s32 = sphi 0, %s30
      %s33 = sphi 0, %s32
      %s47 = sphi 0, %s33
      %s55 = sphi 0, %s57
      %s58 = sphi 0, %s55
      %s59 = sphi 0, %s58
      %s75 = sphi 0, %s59
      %s87 = sphi 0, %s89
      %s90 = sphi 0, %s87
      %s91 = sphi 0, %s90
      %s107 = sphi 0, %s91
      %s111 = sphi 0, %s111
      %s113 = sphi 0, %s111
      %s114 = sphi 0, %s113
      %s128 = sphi 0, %s114
      %s136 = sphi 0, %s138
      %s139 = sphi 0, %s136
      %s140 = sphi 0, %s139
      %s156 = sphi 0, %s140
    $region4: #{_conv1d_pallas.1} parent=1 // loop_header_branch
      %13 = sbr.rel (%p11) target = $region8
    $region5: #{_conv1d_pallas.1} parent=1 // loop_body
      %s15 = ssub.s32 %s10, 1
      %s16 = ssub.s32 %s10, 2
      %s23 = sadd.s32 1, %s18
      %p24 = scmp.ge.s32.totalorder %s23, 2
      %s25 = scalar_select %p24, 0, %s23
      %s26 = sadd.s32 1, %s17
      %s27 = scalar_select %p24, %s26, %s17
      %p28 = scmp.ge.s32.totalorder %s27, 2
      %s29 = scalar_select %p28, 0, %s27
      %s31 = sadd.s32 %s30, 1
      %p34 = scmp.eq.s32.totalorder %s10, 3
      %p35 = scmp.ne.s32.totalorder %s30, %s32
      %p36 = scmp.eq.s32.totalorder %s10, 0
      %p37 = por %p35, %p36
      %p38 = scmp.ne.s32.totalorder %s30, %s32
      %p39 = scmp.eq.s32.totalorder %s15, 3
      %p40 = por %p38, %p39
      %p41 = scmp.ne.s32.totalorder %s32, %s33
      %p42 = scmp.eq.s32.totalorder %s15, 0
      %p43 = por %p41, %p42
      %p44 = scmp.ne.s32.totalorder %s32, %s33
      %p45 = scmp.eq.s32.totalorder %s16, 3
      %p46 = por %p44, %p45
      %p48 = scmp.ne.s32.totalorder %s33, %s47
      %p49 = scmp.eq.s32.totalorder %s16, 0
      %p50 = por %p48, %p49
      %s51 = ssub.s32 %s17, %s29
      %s52 = ssub.s32 %s18, %s25
      %s53 = sor.u32 %s51, %s52
      %p54 = scmp.eq.s32.totalorder %s53, 0
      %s56 = sadd.s32 %s55, 1
      %s57 = scalar_select %p54, %s55, %s56
      %p60 = pneg %p54
      %p61 = scmp.eq.s32.totalorder %s10, 3
      %p62 = por %p60, %p61
      %p63 = scmp.ne.s32.totalorder %s55, %s58
      %p64 = scmp.eq.s32.totalorder %s10, 0
      %p65 = por %p63, %p64
      %p66 = scmp.ne.s32.totalorder %s55, %s58
      %p67 = scmp.eq.s32.totalorder %s15, 3
      %p68 = por %p66, %p67
      %p69 = scmp.ne.s32.totalorder %s58, %s59
      %p70 = scmp.eq.s32.totalorder %s15, 0
      %p71 = por %p69, %p70
      %p72 = scmp.ne.s32.totalorder %s58, %s59
      %p73 = scmp.eq.s32.totalorder %s16, 3
      %p74 = por %p72, %p73
      %p76 = scmp.ne.s32.totalorder %s59, %s75
      %p77 = scmp.eq.s32.totalorder %s16, 0
      %p78 = por %p76, %p77
      %s79 = sadd.s32 %s18, 1
      %s80 = smul.u32 %s79, 10
      %s81 = sadd.s32 %s25, 1
      %s82 = smul.u32 %s81, 10
      %s83 = ssub.s32 %s17, %s29
      %s84 = ssub.s32 %s80, %s82
      %s85 = sor.u32 %s83, %s84
      %p86 = scmp.eq.s32.totalorder %s85, 0
      %s88 = sadd.s32 %s87, 1
      %s89 = scalar_select %p86, %s87, %s88
      %p92 = pneg %p86
      %p93 = scmp.eq.s32.totalorder %s10, 3
      %p94 = por %p92, %p93
      %p95 = scmp.ne.s32.totalorder %s87, %s90
      %p96 = scmp.eq.s32.totalorder %s10, 0
      %p97 = por %p95, %p96
      %p98 = scmp.ne.s32.totalorder %s87, %s90
      %p99 = scmp.eq.s32.totalorder %s15, 3
      %p100 = por %p98, %p99
      %p101 = scmp.ne.s32.totalorder %s90, %s91
      %p102 = scmp.eq.s32.totalorder %s15, 0
      %p103 = por %p101, %p102
      %p104 = scmp.ne.s32.totalorder %s90, %s91
      %p105 = scmp.eq.s32.totalorder %s16, 3
      %p106 = por %p104, %p105
      %p108 = scmp.ne.s32.totalorder %s91, %s107
      %p109 = scmp.eq.s32.totalorder %s16, 0
      %p110 = por %p108, %p109
      %s112 = sadd.s32 %s111, 1
      %p115 = scmp.eq.s32.totalorder %s10, 3
      %p116 = scmp.ne.s32.totalorder %s111, %s113
      %p117 = scmp.eq.s32.totalorder %s10, 0
      %p118 = por %p116, %p117
      %p119 = scmp.ne.s32.totalorder %s111, %s113
      %p120 = scmp.eq.s32.totalorder %s15, 3
      %p121 = por %p119, %p120
      %p122 = scmp.ne.s32.totalorder %s113, %s114
      %p123 = scmp.eq.s32.totalorder %s15, 0
      %p124 = por %p122, %p123
      %p125 = scmp.ne.s32.totalorder %s113, %s114
      %p126 = scmp.eq.s32.totalorder %s16, 3
      %p127 = por %p125, %p126
      %p129 = scmp.ne.s32.totalorder %s114, %s128
      %p130 = scmp.eq.s32.totalorder %s16, 0
      %p131 = por %p129, %p130
      %s132 = ssub.s32 %s17, %s29
      %s133 = ssub.s32 %s18, %s25
      %s134 = sor.u32 %s132, %s133
      %p135 = scmp.eq.s32.totalorder %s134, 0
      %s137 = sadd.s32 %s136, 1
      %s138 = scalar_select %p135, %s136, %s137
      %p141 = pneg %p135
      %p142 = scmp.eq.s32.totalorder %s10, 3
      %p143 = por %p141, %p142
      %p144 = scmp.ne.s32.totalorder %s136, %s139
      %p145 = scmp.eq.s32.totalorder %s10, 0
      %p146 = por %p144, %p145
      %p147 = scmp.ne.s32.totalorder %s136, %s139
      %p148 = scmp.eq.s32.totalorder %s15, 3
      %p149 = por %p147, %p148
      %p150 = scmp.ne.s32.totalorder %s139, %s140
      %p151 = scmp.eq.s32.totalorder %s15, 0
      %p152 = por %p150, %p151
      %p153 = scmp.ne.s32.totalorder %s139, %s140
      %p154 = scmp.eq.s32.totalorder %s16, 3
      %p155 = por %p153, %p154
      %p157 = scmp.ne.s32.totalorder %s140, %s156
      %p158 = scmp.eq.s32.totalorder %s16, 0
      %p159 = por %p157, %p158
      %p160 = scmp.le.s32.totalorder 1, %s10
      %p161 = scmp.lt.s32.totalorder %s10, 5
      %p162 = pnand %p160, %p161
      %p163 = pneg %p162
      // Predicated region
      $region9: #{_conv1d_pallas.1} parent=5 // pred_check
        _
      $region10: #{_conv1d_pallas.1} parent=5 // pred_check_branch
        %165 = sbr.rel (%p162) target = $region12
      $region11: #{_conv1d_pallas.1} parent=5 // pred_region
        %s166 = ssub.s32 %s10, 1
        // Predicated region
        $region13: #{_conv1d_pallas.1} parent=11 // pred_check
          %p167 = pneg %p43
        $region14: #{_conv1d_pallas.1} parent=11 // pred_check_branch
          %169 = sbr.rel (%p167) target = $region16
        $region15: #{_conv1d_pallas.1} parent=11 // pred_region
          _
        $region16: #{_conv1d_pallas.1} parent=11 // pred_fallthru
          _
        // Predicated region
        $region17: #{_conv1d_pallas.1} parent=11 // pred_check
          %p170 = pneg %p124
        $region18: #{_conv1d_pallas.1} parent=11 // pred_check_branch
          %172 = sbr.rel (%p170) target = $region20
        $region19: #{_conv1d_pallas.1} parent=11 // pred_region
          _
        $region20: #{_conv1d_pallas.1} parent=11 // pred_fallthru
          _
      $region12: #{_conv1d_pallas.1} parent=5 // pred_fallthru
        _
      %p173 = scmp.lt.s32.totalorder %s10, 4
      // Predicated region
      $region21: #{_conv1d_pallas.1} parent=5 // pred_check
        %p174 = pneg %p173
      $region22: #{_conv1d_pallas.1} parent=5 // pred_check_branch
        %176 = sbr.rel (%p174) target = $region24
      $region23: #{_conv1d_pallas.1} parent=5 // pred_region
        // Predicated region
        $region25: #{_conv1d_pallas.1} parent=23 // pred_check
          %p177 = pneg %p65
        $region26: #{_conv1d_pallas.1} parent=23 // pred_check_branch
          %179 = sbr.rel (%p177) target = $region28
        $region27: #{_conv1d_pallas.1} parent=23 // pred_region
          %s180 = sand.u32 %s55, 1
          %s181 = sand.u32 %s55, 1
          %s182 = smul.addr %s181, 160
          %s183 = scalar_lea.vmem [#allocation3], %s182
          %s184 = smul.u32 10, %s18
          %s185 = ssub.s32 21, %s184
          %p186 = scmp.lt.s32.totalorder %s185, 10
          %s187 = scalar_select %p186, %s185, 10
          %s188 = smul.u32 256, %s187
          %p189 = scmp.ne.s32.totalorder 0, %s188
          %s190 = smul.addr %s17, 84
          %s191 = sadd.s32 %s184, %s190
          %s192 = smul.addr %s191, 4
          %s193 = scalar_lea.vmem %s1, %s192
          %s194 = smul.u32 %s187, 4
          // Predicated region
          $region29: #{_conv1d_pallas.1} parent=27 // pred_check
            %p195 = pneg %p189
          $region30: #{_conv1d_pallas.1} parent=27 // pred_check_branch
            %197 = sbr.rel (%p195) target = $region32
          $region31: #{_conv1d_pallas.1} parent=27 // pred_region
            %p198 = scmp.lt.u32.totalorder %s194, 8
            %p199 = pneg %p198
            // Predicated region
            $region33: #{_conv1d_pallas.1} parent=31 // pred_check
              _
            $region34: #{_conv1d_pallas.1} parent=31 // pred_check_branch
              %201 = sbr.rel (%p198) target = $region36
            $region35: #{_conv1d_pallas.1} parent=31 // pred_region
              %s222 = sand.u32 %s194, 7
              %p223 = scmp.eq.s32.totalorder %s222, 0
              // Predicated region
              $region48: #{_conv1d_pallas.1} parent=35 // pred_check
                %p224 = pneg %p223
              $region49: #{_conv1d_pallas.1} parent=35 // pred_check_branch
                %226 = sbr.rel (%p224) target = $region51
              $region50: #{_conv1d_pallas.1} parent=35 // pred_region
                %s227 = sshrl.u32 %s194, 3
                %s228 = sshrl.u32 %s227, 4
                // While loop
                $region52: #{_conv1d_pallas.1} parent=50 // loop_pre_header
                  _
                $region53: #{_conv1d_pallas.1} parent=50 // loop_header
                  %s232 = sphi 0, %s234
                  %p233 = scmp.ge.s32.totalorder %s232, %s228
                  %s237 = sphi 0, %s370
                  %s238 = sphi %s193, %s373
                  %s239 = sphi %s183, %s374
                $region54: #{_conv1d_pallas.1} parent=50 // loop_header_branch
                  %236 = sbr.rel (%p233) target = $region58
                $region55: #{_conv1d_pallas.1} parent=50 // loop_body
                  %v240 = vld [vmem:[%s238] sm:$0xff]
                  %241 = vst [vmem:[%s239] sm:$0xff] %v240
                  %v242 = vld [vmem:[%s238 + $0x8] sm:$0xff]
                  %243 = vst [vmem:[%s239 + $0x8] sm:$0xff] %v242
                  %v244 = vld [vmem:[%s238 + $0x10] sm:$0xff]
                  %245 = vst [vmem:[%s239 + $0x10] sm:$0xff] %v244
                  %v246 = vld [vmem:[%s238 + $0x18] sm:$0xff]
                  %247 = vst [vmem:[%s239 + $0x18] sm:$0xff] %v246
                  %v248 = vld [vmem:[%s238 + $0x20] sm:$0xff]
                  %249 = vst [vmem:[%s239 + $0x20] sm:$0xff] %v248
                  %v250 = vld [vmem:[%s238 + $0x28] sm:$0xff]
                  %251 = vst [vmem:[%s239 + $0x28] sm:$0xff] %v250
                  %v252 = vld [vmem:[%s238 + $0x30] sm:$0xff]
                  %253 = vst [vmem:[%s239 + $0x30] sm:$0xff] %v252
                  %v254 = vld [vmem:[%s238 + $0x38] sm:$0xff]
                  %255 = vst [vmem:[%s239 + $0x38] sm:$0xff] %v254
                  %v256 = vld [vmem:[%s238 + $0x40] sm:$0xff]
                  %257 = vst [vmem:[%s239 + $0x40] sm:$0xff] %v256
                  %v258 = vld [vmem:[%s238 + $0x48] sm:$0xff]
                  %259 = vst [vmem:[%s239 + $0x48] sm:$0xff] %v258
                  %v260 = vld [vmem:[%s238 + $0x50] sm:$0xff]
                  %261 = vst [vmem:[%s239 + $0x50] sm:$0xff] %v260
                  %v262 = vld [vmem:[%s238 + $0x58] sm:$0xff]
                  %263 = vst [vmem:[%s239 + $0x58] sm:$0xff] %v262
                  %v264 = vld [vmem:[%s238 + $0x60] sm:$0xff]
                  %265 = vst [vmem:[%s239 + $0x60] sm:$0xff] %v264
                  %v266 = vld [vmem:[%s238 + $0x68] sm:$0xff]
                  %267 = vst [vmem:[%s239 + $0x68] sm:$0xff] %v266
                  %v268 = vld [vmem:[%s238 + $0x70] sm:$0xff]
                  %269 = vst [vmem:[%s239 + $0x70] sm:$0xff] %v268
                  %v270 = vld [vmem:[%s238 + $0x78] sm:$0xff]
                  %271 = vst [vmem:[%s239 + $0x78] sm:$0xff] %v270
                  %v272 = vld [vmem:[%s238 + $0x54] sm:$0xff]
                  %273 = vst [vmem:[%s239 + $0x28] sm:$0xff] %v272
                  %v274 = vld [vmem:[%s238 + $0x5c] sm:$0xff]
                  %275 = vst [vmem:[%s239 + $0x30] sm:$0xff] %v274
                  %v276 = vld [vmem:[%s238 + $0x64] sm:$0xff]
                  %277 = vst [vmem:[%s239 + $0x38] sm:$0xff] %v276
                  %v278 = vld [vmem:[%s238 + $0x6c] sm:$0xff]
                  %279 = vst [vmem:[%s239 + $0x40] sm:$0xff] %v278
                  %v280 = vld [vmem:[%s238 + $0x74] sm:$0xff]
                  %281 = vst [vmem:[%s239 + $0x48] sm:$0xff] %v280
                  %v282 = vld [vmem:[%s238 + $0x7c] sm:$0xff]
                  %283 = vst [vmem:[%s239 + $0x50] sm:$0xff] %v282
                  %v284 = vld [vmem:[%s238 + $0x84] sm:$0xff]
                  %285 = vst [vmem:[%s239 + $0x58] sm:$0xff] %v284
                  %v286 = vld [vmem:[%s238 + $0x8c] sm:$0xff]
                  %287 = vst [vmem:[%s239 + $0x60] sm:$0xff] %v286
                  %v288 = vld [vmem:[%s238 + $0x94] sm:$0xff]
                  %289 = vst [vmem:[%s239 + $0x68] sm:$0xff] %v288
                  %v290 = vld [vmem:[%s238 + $0x9c] sm:$0xff]
                  %291 = vst [vmem:[%s239 + $0x70] sm:$0xff] %v290
                  %v292 = vld [vmem:[%s238 + $0xa4] sm:$0xff]
                  %293 = vst [vmem:[%s239 + $0x78] sm:$0xff] %v292
                  %v294 = vld [vmem:[%s238 + $0xac] sm:$0xff]
                  %295 = vst [vmem:[%s239 + $0x80] sm:$0xff] %v294
                  %v296 = vld [vmem:[%s238 + $0xb4] sm:$0xff]
                  %297 = vst [vmem:[%s239 + $0x88] sm:$0xff] %v296
                  %v298 = vld [vmem:[%s238 + $0xbc] sm:$0xff]
                  %299 = vst [vmem:[%s239 + $0x90] sm:$0xff] %v298
                  %v300 = vld [vmem:[%s238 + $0xc4] sm:$0xff]
                  %301 = vst [vmem:[%s239 + $0x98] sm:$0xff] %v300
                  %v302 = vld [vmem:[%s238 + $0xcc] sm:$0xff]
                  %303 = vst [vmem:[%s239 + $0xa0] sm:$0xff] %v302
                  %v304 = vld [vmem:[%s238 + $0xa8] sm:$0xff]
                  %305 = vst [vmem:[%s239 + $0x50] sm:$0xff] %v304
                  %v306 = vld [vmem:[%s238 + $0xb0] sm:$0xff]
                  %307 = vst [vmem:[%s239 + $0x58] sm:$0xff] %v306
                  %v308 = vld [vmem:[%s238 + $0xb8] sm:$0xff]
                  %309 = vst [vmem:[%s239 + $0x60] sm:$0xff] %v308
                  %v310 = vld [vmem:[%s238 + $0xc0] sm:$0xff]
                  %311 = vst [vmem:[%s239 + $0x68] sm:$0xff] %v310
                  %v312 = vld [vmem:[%s238 + $0xc8] sm:$0xff]
                  %313 = vst [vmem:[%s239 + $0x70] sm:$0xff] %v312
                  %v314 = vld [vmem:[%s238 + $0xd0] sm:$0xff]
                  %315 = vst [vmem:[%s239 + $0x78] sm:$0xff] %v314
                  %v316 = vld [vmem:[%s238 + $0xd8] sm:$0xff]
                  %317 = vst [vmem:[%s239 + $0x80] sm:$0xff] %v316
                  %v318 = vld [vmem:[%s238 + $0xe0] sm:$0xff]
                  %319 = vst [vmem:[%s239 + $0x88] sm:$0xff] %v318
                  %v320 = vld [vmem:[%s238 + $0xe8] sm:$0xff]
                  %321 = vst [vmem:[%s239 + $0x90] sm:$0xff] %v320
                  %v322 = vld [vmem:[%s238 + $0xf0] sm:$0xff]
                  %323 = vst [vmem:[%s239 + $0x98] sm:$0xff] %v322
                  %v324 = vld [vmem:[%s238 + $0xf8] sm:$0xff]
                  %325 = vst [vmem:[%s239 + $0xa0] sm:$0xff] %v324
                  %v326 = vld [vmem:[%s238 + $0x100] sm:$0xff]
                  %327 = vst [vmem:[%s239 + $0xa8] sm:$0xff] %v326
                  %v328 = vld [vmem:[%s238 + $0x108] sm:$0xff]
                  %329 = vst [vmem:[%s239 + $0xb0] sm:$0xff] %v328
                  %v330 = vld [vmem:[%s238 + $0x110] sm:$0xff]
                  %331 = vst [vmem:[%s239 + $0xb8] sm:$0xff] %v330
                  %v332 = vld [vmem:[%s238 + $0x118] sm:$0xff]
                  %333 = vst [vmem:[%s239 + $0xc0] sm:$0xff] %v332
                  %v334 = vld [vmem:[%s238 + $0x120] sm:$0xff]
                  %335 = vst [vmem:[%s239 + $0xc8] sm:$0xff] %v334
                  %v336 = vld [vmem:[%s238 + $0xfc] sm:$0xff]
                  %337 = vst [vmem:[%s239 + $0x78] sm:$0xff] %v336
                  %v338 = vld [vmem:[%s238 + $0x104] sm:$0xff]
                  %339 = vst [vmem:[%s239 + $0x80] sm:$0xff] %v338
                  %v340 = vld [vmem:[%s238 + $0x10c] sm:$0xff]
                  %341 = vst [vmem:[%s239 + $0x88] sm:$0xff] %v340
                  %v342 = vld [vmem:[%s238 + $0x114] sm:$0xff]
                  %343 = vst [vmem:[%s239 + $0x90] sm:$0xff] %v342
                  %v344 = vld [vmem:[%s238 + $0x11c] sm:$0xff]
                  %345 = vst [vmem:[%s239 + $0x98] sm:$0xff] %v344
                  %v346 = vld [vmem:[%s238 + $0x124] sm:$0xff]
                  %347 = vst [vmem:[%s239 + $0xa0] sm:$0xff] %v346
                  %v348 = vld [vmem:[%s238 + $0x12c] sm:$0xff]
                  %349 = vst [vmem:[%s239 + $0xa8] sm:$0xff] %v348
                  %v350 = vld [vmem:[%s238 + $0x134] sm:$0xff]
                  %351 = vst [vmem:[%s239 + $0xb0] sm:$0xff] %v350
                  %v352 = vld [vmem:[%s238 + $0x13c] sm:$0xff]
                  %353 = vst [vmem:[%s239 + $0xb8] sm:$0xff] %v352
                  %v354 = vld [vmem:[%s238 + $0x144] sm:$0xff]
                  %355 = vst [vmem:[%s239 + $0xc0] sm:$0xff] %v354
                  %v356 = vld [vmem:[%s238 + $0x14c] sm:$0xff]
                  %357 = vst [vmem:[%s239 + $0xc8] sm:$0xff] %v356
                  %v358 = vld [vmem:[%s238 + $0x154] sm:$0xff]
                  %359 = vst [vmem:[%s239 + $0xd0] sm:$0xff] %v358
                  %v360 = vld [vmem:[%s238 + $0x15c] sm:$0xff]
                  %361 = vst [vmem:[%s239 + $0xd8] sm:$0xff] %v360
                  %v362 = vld [vmem:[%s238 + $0x164] sm:$0xff]
                  %363 = vst [vmem:[%s239 + $0xe0] sm:$0xff] %v362
                  %v364 = vld [vmem:[%s238 + $0x16c] sm:$0xff]
                  %365 = vst [vmem:[%s239 + $0xe8] sm:$0xff] %v364
                  %v366 = vld [vmem:[%s238 + $0x174] sm:$0xff]
                  %367 = vst [vmem:[%s239 + $0xf0] sm:$0xff] %v366
                  %s368 = sadd.s32 1, %s237
                  %p369 = scmp.ge.s32.totalorder %s368, %s228
                  %s370 = scalar_select %p369, 0, %s368
                  %s371 = smul.u32 %s370, 128
                  %s372 = smul.u32 %s370, 128
                  %s373 = scalar_lea.vmem %s193, %s371
                  %s374 = scalar_lea.vmem %s183, %s372 [#allocation3]
                $region56: #{_conv1d_pallas.1} parent=50 // loop_footer
                  %s234 = sadd.s32 %s232, 1
                $region57: #{_conv1d_pallas.1} parent=50 // loop_footer_branch
                  %231 = sbr.rel target = $region53
                $region58: #{_conv1d_pallas.1} parent=50 // loop_exit
                  _
                %s375 = sshrl.u32 %s227, 4
                %s376 = sand.u32 %s227, 15
                %s377 = smul.u32 %s375, 16
                %s378 = smul.u32 128, %s377
                %s379 = sshra.s32 %s378, 4
                %s380 = scalar_lea.vmem %s193, %s379
                %s381 = smul.u32 128, %s377
                %s382 = sshra.s32 %s381, 4
                %s383 = scalar_lea.vmem %s183, %s382 [#allocation3]
                // While loop
                $region59: #{_conv1d_pallas.1} parent=50 // loop_pre_header
                  _
                $region60: #{_conv1d_pallas.1} parent=50 // loop_header
                  %s387 = sphi 0, %s389
                  %p388 = scmp.ge.s32.totalorder %s387, %s376
                  %s392 = sphi 0, %s405
                  %s393 = sphi %s380, %s408
                  %s394 = sphi %s383, %s409
                $region61: #{_conv1d_pallas.1} parent=50 // loop_header_branch
                  %391 = sbr.rel (%p388) target = $region65
                $region62: #{_conv1d_pallas.1} parent=50 // loop_body
                  %v395 = vld [vmem:[%s393] sm:$0xff]
                  %396 = vst [vmem:[%s394] sm:$0xff] %v395
                  %v397 = vld [vmem:[%s393 + $0x54] sm:$0xff]
                  %398 = vst [vmem:[%s394 + $0x28] sm:$0xff] %v397
                  %v399 = vld [vmem:[%s393 + $0xa8] sm:$0xff]
                  %400 = vst [vmem:[%s394 + $0x50] sm:$0xff] %v399
                  %v401 = vld [vmem:[%s393 + $0xfc] sm:$0xff]
                  %402 = vst [vmem:[%s394 + $0x78] sm:$0xff] %v401
                  %s403 = sadd.s32 1, %s392
                  %p404 = scmp.ge.s32.totalorder %s403, %s376
                  %s405 = scalar_select %p404, 0, %s403
                  %s406 = smul.u32 %s405, 8
                  %s407 = smul.u32 %s405, 8
                  %s408 = scalar_lea.vmem %s380, %s406
                  %s409 = scalar_lea.vmem %s383, %s407 [#allocation3]
                $region63: #{_conv1d_pallas.1} parent=50 // loop_footer
                  %s389 = sadd.s32 %s387, 1
                $region64: #{_conv1d_pallas.1} parent=50 // loop_footer_branch
                  %386 = sbr.rel target = $region60
                $region65: #{_conv1d_pallas.1} parent=50 // loop_exit
                  _
              $region51: #{_conv1d_pallas.1} parent=35 // pred_fallthru
                _
              %p410 = pneg %p223
              // Predicated region
              $region66: #{_conv1d_pallas.1} parent=35 // pred_check
                _
              $region67: #{_conv1d_pallas.1} parent=35 // pred_check_branch
                %412 = sbr.rel (%p223) target = $region69
              $region68: #{_conv1d_pallas.1} parent=35 // pred_region
                %s413 = sand.u32 %s194, 7
                %s414 = ssub.s32 %s194, %s413
                %s415 = scalar_lea.vmem %s193, %s414
                %s416 = ssub.s32 %s194, %s413
                %s417 = scalar_lea.vmem %s183, %s416 [#allocation3]
                %s418 = sshrl.u32 %s194, 3
                %s419 = sshrl.u32 %s418, 4
                // While loop
                $region70: #{_conv1d_pallas.1} parent=68 // loop_pre_header
                  _
                $region71: #{_conv1d_pallas.1} parent=68 // loop_header
                  %s423 = sphi 0, %s425
                  %p424 = scmp.ge.s32.totalorder %s423, %s419
                  %s428 = sphi 0, %s561
                  %s429 = sphi %s193, %s564
                  %s430 = sphi %s183, %s565
                $region72: #{_conv1d_pallas.1} parent=68 // loop_header_branch
                  %427 = sbr.rel (%p424) target = $region76
                $region73: #{_conv1d_pallas.1} parent=68 // loop_body
                  %v431 = vld [vmem:[%s429] sm:$0xff]
                  %432 = vst [vmem:[%s430] sm:$0xff] %v431
                  %v433 = vld [vmem:[%s429 + $0x8] sm:$0xff]
                  %434 = vst [vmem:[%s430 + $0x8] sm:$0xff] %v433
                  %v435 = vld [vmem:[%s429 + $0x10] sm:$0xff]
                  %436 = vst [vmem:[%s430 + $0x10] sm:$0xff] %v435
                  %v437 = vld [vmem:[%s429 + $0x18] sm:$0xff]
                  %438 = vst [vmem:[%s430 + $0x18] sm:$0xff] %v437
                  %v439 = vld [vmem:[%s429 + $0x20] sm:$0xff]
                  %440 = vst [vmem:[%s430 + $0x20] sm:$0xff] %v439
                  %v441 = vld [vmem:[%s429 + $0x28] sm:$0xff]
                  %442 = vst [vmem:[%s430 + $0x28] sm:$0xff] %v441
                  %v443 = vld [vmem:[%s429 + $0x30] sm:$0xff]
                  %444 = vst [vmem:[%s430 + $0x30] sm:$0xff] %v443
                  %v445 = vld [vmem:[%s429 + $0x38] sm:$0xff]
                  %446 = vst [vmem:[%s430 + $0x38] sm:$0xff] %v445
                  %v447 = vld [vmem:[%s429 + $0x40] sm:$0xff]
                  %448 = vst [vmem:[%s430 + $0x40] sm:$0xff] %v447
                  %v449 = vld [vmem:[%s429 + $0x48] sm:$0xff]
                  %450 = vst [vmem:[%s430 + $0x48] sm:$0xff] %v449
                  %v451 = vld [vmem:[%s429 + $0x50] sm:$0xff]
                  %452 = vst [vmem:[%s430 + $0x50] sm:$0xff] %v451
                  %v453 = vld [vmem:[%s429 + $0x58] sm:$0xff]
                  %454 = vst [vmem:[%s430 + $0x58] sm:$0xff] %v453
                  %v455 = vld [vmem:[%s429 + $0x60] sm:$0xff]
                  %456 = vst [vmem:[%s430 + $0x60] sm:$0xff] %v455
                  %v457 = vld [vmem:[%s429 + $0x68] sm:$0xff]
                  %458 = vst [vmem:[%s430 + $0x68] sm:$0xff] %v457
                  %v459 = vld [vmem:[%s429 + $0x70] sm:$0xff]
                  %460 = vst [vmem:[%s430 + $0x70] sm:$0xff] %v459
                  %v461 = vld [vmem:[%s429 + $0x78] sm:$0xff]
                  %462 = vst [vmem:[%s430 + $0x78] sm:$0xff] %v461
                  %v463 = vld [vmem:[%s429 + $0x54] sm:$0xff]
                  %464 = vst [vmem:[%s430 + $0x28] sm:$0xff] %v463
                  %v465 = vld [vmem:[%s429 + $0x5c] sm:$0xff]
                  %466 = vst [vmem:[%s430 + $0x30] sm:$0xff] %v465
                  %v467 = vld [vmem:[%s429 + $0x64] sm:$0xff]
                  %468 = vst [vmem:[%s430 + $0x38] sm:$0xff] %v467
                  %v469 = vld [vmem:[%s429 + $0x6c] sm:$0xff]
                  %470 = vst [vmem:[%s430 + $0x40] sm:$0xff] %v469
                  %v471 = vld [vmem:[%s429 + $0x74] sm:$0xff]
                  %472 = vst [vmem:[%s430 + $0x48] sm:$0xff] %v471
                  %v473 = vld [vmem:[%s429 + $0x7c] sm:$0xff]
                  %474 = vst [vmem:[%s430 + $0x50] sm:$0xff] %v473
                  %v475 = vld [vmem:[%s429 + $0x84] sm:$0xff]
                  %476 = vst [vmem:[%s430 + $0x58] sm:$0xff] %v475
                  %v477 = vld [vmem:[%s429 + $0x8c] sm:$0xff]
                  %478 = vst [vmem:[%s430 + $0x60] sm:$0xff] %v477
                  %v479 = vld [vmem:[%s429 + $0x94] sm:$0xff]
                  %480 = vst [vmem:[%s430 + $0x68] sm:$0xff] %v479
                  %v481 = vld [vmem:[%s429 + $0x9c] sm:$0xff]
                  %482 = vst [vmem:[%s430 + $0x70] sm:$0xff] %v481
                  %v483 = vld [vmem:[%s429 + $0xa4] sm:$0xff]
                  %484 = vst [vmem:[%s430 + $0x78] sm:$0xff] %v483
                  %v485 = vld [vmem:[%s429 + $0xac] sm:$0xff]
                  %486 = vst [vmem:[%s430 + $0x80] sm:$0xff] %v485
                  %v487 = vld [vmem:[%s429 + $0xb4] sm:$0xff]
                  %488 = vst [vmem:[%s430 + $0x88] sm:$0xff] %v487
                  %v489 = vld [vmem:[%s429 + $0xbc] sm:$0xff]
                  %490 = vst [vmem:[%s430 + $0x90] sm:$0xff] %v489
                  %v491 = vld [vmem:[%s429 + $0xc4] sm:$0xff]
                  %492 = vst [vmem:[%s430 + $0x98] sm:$0xff] %v491
                  %v493 = vld [vmem:[%s429 + $0xcc] sm:$0xff]
                  %494 = vst [vmem:[%s430 + $0xa0] sm:$0xff] %v493
                  %v495 = vld [vmem:[%s429 + $0xa8] sm:$0xff]
                  %496 = vst [vmem:[%s430 + $0x50] sm:$0xff] %v495
                  %v497 = vld [vmem:[%s429 + $0xb0] sm:$0xff]
                  %498 = vst [vmem:[%s430 + $0x58] sm:$0xff] %v497
                  %v499 = vld [vmem:[%s429 + $0xb8] sm:$0xff]
                  %500 = vst [vmem:[%s430 + $0x60] sm:$0xff] %v499
                  %v501 = vld [vmem:[%s429 + $0xc0] sm:$0xff]
                  %502 = vst [vmem:[%s430 + $0x68] sm:$0xff] %v501
                  %v503 = vld [vmem:[%s429 + $0xc8] sm:$0xff]
                  %504 = vst [vmem:[%s430 + $0x70] sm:$0xff] %v503
                  %v505 = vld [vmem:[%s429 + $0xd0] sm:$0xff]
                  %506 = vst [vmem:[%s430 + $0x78] sm:$0xff] %v505
                  %v507 = vld [vmem:[%s429 + $0xd8] sm:$0xff]
                  %508 = vst [vmem:[%s430 + $0x80] sm:$0xff] %v507
                  %v509 = vld [vmem:[%s429 + $0xe0] sm:$0xff]
                  %510 = vst [vmem:[%s430 + $0x88] sm:$0xff] %v509
                  %v511 = vld [vmem:[%s429 + $0xe8] sm:$0xff]
                  %512 = vst [vmem:[%s430 + $0x90] sm:$0xff] %v511
                  %v513 = vld [vmem:[%s429 + $0xf0] sm:$0xff]
                  %514 = vst [vmem:[%s430 + $0x98] sm:$0xff] %v513
                  %v515 = vld [vmem:[%s429 + $0xf8] sm:$0xff]
                  %516 = vst [vmem:[%s430 + $0xa0] sm:$0xff] %v515
                  %v517 = vld [vmem:[%s429 + $0x100] sm:$0xff]
                  %518 = vst [vmem:[%s430 + $0xa8] sm:$0xff] %v517
                  %v519 = vld [vmem:[%s429 + $0x108] sm:$0xff]
                  %520 = vst [vmem:[%s430 + $0xb0] sm:$0xff] %v519
                  %v521 = vld [vmem:[%s429 + $0x110] sm:$0xff]
                  %522 = vst [vmem:[%s430 + $0xb8] sm:$0xff] %v521
                  %v523 = vld [vmem:[%s429 + $0x118] sm:$0xff]
                  %524 = vst [vmem:[%s430 + $0xc0] sm:$0xff] %v523
                  %v525 = vld [vmem:[%s429 + $0x120] sm:$0xff]
                  %526 = vst [vmem:[%s430 + $0xc8] sm:$0xff] %v525
                  %v527 = vld [vmem:[%s429 + $0xfc] sm:$0xff]
                  %528 = vst [vmem:[%s430 + $0x78] sm:$0xff] %v527
                  %v529 = vld [vmem:[%s429 + $0x104] sm:$0xff]
                  %530 = vst [vmem:[%s430 + $0x80] sm:$0xff] %v529
                  %v531 = vld [vmem:[%s429 + $0x10c] sm:$0xff]
                  %532 = vst [vmem:[%s430 + $0x88] sm:$0xff] %v531
                  %v533 = vld [vmem:[%s429 + $0x114] sm:$0xff]
                  %534 = vst [vmem:[%s430 + $0x90] sm:$0xff] %v533
                  %v535 = vld [vmem:[%s429 + $0x11c] sm:$0xff]
                  %536 = vst [vmem:[%s430 + $0x98] sm:$0xff] %v535
                  %v537 = vld [vmem:[%s429 + $0x124] sm:$0xff]
                  %538 = vst [vmem:[%s430 + $0xa0] sm:$0xff] %v537
                  %v539 = vld [vmem:[%s429 + $0x12c] sm:$0xff]
                  %540 = vst [vmem:[%s430 + $0xa8] sm:$0xff] %v539
                  %v541 = vld [vmem:[%s429 + $0x134] sm:$0xff]
                  %542 = vst [vmem:[%s430 + $0xb0] sm:$0xff] %v541
                  %v543 = vld [vmem:[%s429 + $0x13c] sm:$0xff]
                  %544 = vst [vmem:[%s430 + $0xb8] sm:$0xff] %v543
                  %v545 = vld [vmem:[%s429 + $0x144] sm:$0xff]
                  %546 = vst [vmem:[%s430 + $0xc0] sm:$0xff] %v545
                  %v547 = vld [vmem:[%s429 + $0x14c] sm:$0xff]
                  %548 = vst [vmem:[%s430 + $0xc8] sm:$0xff] %v547
                  %v549 = vld [vmem:[%s429 + $0x154] sm:$0xff]
                  %550 = vst [vmem:[%s430 + $0xd0] sm:$0xff] %v549
                  %v551 = vld [vmem:[%s429 + $0x15c] sm:$0xff]
                  %552 = vst [vmem:[%s430 + $0xd8] sm:$0xff] %v551
                  %v553 = vld [vmem:[%s429 + $0x164] sm:$0xff]
                  %554 = vst [vmem:[%s430 + $0xe0] sm:$0xff] %v553
                  %v555 = vld [vmem:[%s429 + $0x16c] sm:$0xff]
                  %556 = vst [vmem:[%s430 + $0xe8] sm:$0xff] %v555
                  %v557 = vld [vmem:[%s429 + $0x174] sm:$0xff]
                  %558 = vst [vmem:[%s430 + $0xf0] sm:$0xff] %v557
                  %s559 = sadd.s32 1, %s428
                  %p560 = scmp.ge.s32.totalorder %s559, %s419
                  %s561 = scalar_select %p560, 0, %s559
                  %s562 = smul.u32 %s561, 128
                  %s563 = smul.u32 %s561, 128
                  %s564 = scalar_lea.vmem %s193, %s562
                  %s565 = scalar_lea.vmem %s183, %s563 [#allocation3]
                $region74: #{_conv1d_pallas.1} parent=68 // loop_footer
                  %s425 = sadd.s32 %s423, 1
                $region75: #{_conv1d_pallas.1} parent=68 // loop_footer_branch
                  %422 = sbr.rel target = $region71
                $region76: #{_conv1d_pallas.1} parent=68 // loop_exit
                  _
                %s566 = sshrl.u32 %s418, 4
                %s567 = sand.u32 %s418, 15
                %s568 = smul.u32 %s566, 16
                %s569 = smul.u32 128, %s568
                %s570 = sshra.s32 %s569, 4
                %s571 = scalar_lea.vmem %s193, %s570
                %s572 = smul.u32 128, %s568
                %s573 = sshra.s32 %s572, 4
                %s574 = scalar_lea.vmem %s183, %s573 [#allocation3]
                // While loop
                $region77: #{_conv1d_pallas.1} parent=68 // loop_pre_header
                  _
                $region78: #{_conv1d_pallas.1} parent=68 // loop_header
                  %s578 = sphi 0, %s580
                  %p579 = scmp.ge.s32.totalorder %s578, %s567
                  %s583 = sphi 0, %s596
                  %s584 = sphi %s571, %s599
                  %s585 = sphi %s574, %s600
                $region79: #{_conv1d_pallas.1} parent=68 // loop_header_branch
                  %582 = sbr.rel (%p579) target = $region83
                $region80: #{_conv1d_pallas.1} parent=68 // loop_body
                  %v586 = vld [vmem:[%s584] sm:$0xff]
                  %587 = vst [vmem:[%s585] sm:$0xff] %v586
                  %v588 = vld [vmem:[%s584 + $0x54] sm:$0xff]
                  %589 = vst [vmem:[%s585 + $0x28] sm:$0xff] %v588
                  %v590 = vld [vmem:[%s584 + $0xa8] sm:$0xff]
                  %591 = vst [vmem:[%s585 + $0x50] sm:$0xff] %v590
                  %v592 = vld [vmem:[%s584 + $0xfc] sm:$0xff]
                  %593 = vst [vmem:[%s585 + $0x78] sm:$0xff] %v592
                  %s594 = sadd.s32 1, %s583
                  %p595 = scmp.ge.s32.totalorder %s594, %s567
                  %s596 = scalar_select %p595, 0, %s594
                  %s597 = smul.u32 %s596, 8
                  %s598 = smul.u32 %s596, 8
                  %s599 = scalar_lea.vmem %s571, %s597
                  %s600 = scalar_lea.vmem %s574, %s598 [#allocation3]
                $region81: #{_conv1d_pallas.1} parent=68 // loop_footer
                  %s580 = sadd.s32 %s578, 1
                $region82: #{_conv1d_pallas.1} parent=68 // loop_footer_branch
                  %577 = sbr.rel target = $region78
                $region83: #{_conv1d_pallas.1} parent=68 // loop_exit
                  _
                %s601 = sshllo.u32 0, %s413
                loop: start=0, step=1, limit=1
                $region84: #{_conv1d_pallas.1} parent=68 // loop_pre_header
                  _
                $region85: #{_conv1d_pallas.1} parent=68 // loop_header
                  %s603 = sphi 0, %s607
                  %p604 = scmp.ge.s32.totalorder %s603, 1
                  %s608 = sphi %s415, %s415
                  %s609 = sphi %s417, %s417
                $region86: #{_conv1d_pallas.1} parent=68 // loop_header_branch
                  %606 = sbr.rel (%p604) target = $region90
                $region87: #{_conv1d_pallas.1} parent=68 // loop_body
                  %v610 = vld [vmem:[%s608] sm:%s601]
                  %611 = vst [vmem:[%s609] sm:%s601] %v610
                  %v612 = vld [vmem:[%s608 + $0x54] sm:%s601]
                  %613 = vst [vmem:[%s609 + $0x28] sm:%s601] %v612
                  %v614 = vld [vmem:[%s608 + $0xa8] sm:%s601]
                  %615 = vst [vmem:[%s609 + $0x50] sm:%s601] %v614
                  %v616 = vld [vmem:[%s608 + $0xfc] sm:%s601]
                  %617 = vst [vmem:[%s609 + $0x78] sm:%s601] %v616
                $region88: #{_conv1d_pallas.1} parent=68 // loop_footer
                  %s607 = sadd.s32 1, %s603
                $region89: #{_conv1d_pallas.1} parent=68 // loop_footer_branch
                  %602 = sbr.rel target = $region85
                $region90: #{_conv1d_pallas.1} parent=68 // loop_exit
                  _
              $region69: #{_conv1d_pallas.1} parent=35 // pred_fallthru
                _
            $region36: #{_conv1d_pallas.1} parent=31 // pred_fallthru
              _
            // Predicated region
            $region37: #{_conv1d_pallas.1} parent=31 // pred_check
              %p202 = pneg %p198
            $region38: #{_conv1d_pallas.1} parent=31 // pred_check_branch
              %204 = sbr.rel (%p202) target = $region40
            $region39: #{_conv1d_pallas.1} parent=31 // pred_region
              %s205 = sshllo.u32 0, %s194
              loop: start=0, step=1, limit=1
              $region41: #{_conv1d_pallas.1} parent=39 // loop_pre_header
                _
              $region42: #{_conv1d_pallas.1} parent=39 // loop_header
                %s207 = sphi 0, %s211
                %p208 = scmp.ge.s32.totalorder %s207, 1
                %s212 = sphi %s193, %s193
                %s213 = sphi %s183, %s183
              $region43: #{_conv1d_pallas.1} parent=39 // loop_header_branch
                %210 = sbr.rel (%p208) target = $region47
              $region44: #{_conv1d_pallas.1} parent=39 // loop_body
                %v214 = vld [vmem:[%s212] sm:%s205]
                %215 = vst [vmem:[%s213] sm:%s205] %v214
                %v216 = vld [vmem:[%s212 + $0x54] sm:%s205]
                %217 = vst [vmem:[%s213 + $0x28] sm:%s205] %v216
                %v218 = vld [vmem:[%s212 + $0xa8] sm:%s205]
                %219 = vst [vmem:[%s213 + $0x50] sm:%s205] %v218
                %v220 = vld [vmem:[%s212 + $0xfc] sm:%s205]
                %221 = vst [vmem:[%s213 + $0x78] sm:%s205] %v220
              $region45: #{_conv1d_pallas.1} parent=39 // loop_footer
                %s211 = sadd.s32 1, %s207
              $region46: #{_conv1d_pallas.1} parent=39 // loop_footer_branch
                %206 = sbr.rel target = $region42
              $region47: #{_conv1d_pallas.1} parent=39 // loop_exit
                _
            $region40: #{_conv1d_pallas.1} parent=31 // pred_fallthru
              _
          $region32: #{_conv1d_pallas.1} parent=27 // pred_fallthru
            _
          %618 = vnop
        $region28: #{_conv1d_pallas.1} parent=23 // pred_fallthru
          _
        // Predicated region
        $region91: #{_conv1d_pallas.1} parent=23 // pred_check
          %p619 = pneg %p97
        $region92: #{_conv1d_pallas.1} parent=23 // pred_check_branch
          %621 = sbr.rel (%p619) target = $region94
        $region93: #{_conv1d_pallas.1} parent=23 // pred_region
          %s622 = sand.u32 %s87, 1
          %s623 = sand.u32 %s87, 1
          %s624 = smul.addr %s623, 16
          %s625 = scalar_lea.vmem [#allocation4], %s624
          %s626 = sadd.s32 %s18, 1
          %s627 = smul.u32 %s626, 10
          %s628 = smul.addr %s17, 84
          %s629 = sadd.s32 %s627, %s628
          %s630 = smul.addr %s629, 4
          %s631 = scalar_lea.vmem %s2, %s630
          // Predicated region
          $region95: #{_conv1d_pallas.1} parent=93 // pred_check
            _
          $region96: #{_conv1d_pallas.1} parent=93 // pred_check_branch
            %633 = sbr.rel (0) target = $region98
          $region97: #{_conv1d_pallas.1} parent=93 // pred_region
            // Predicated region
            $region99: #{_conv1d_pallas.1} parent=97 // pred_check
              _
            $region100: #{_conv1d_pallas.1} parent=97 // pred_check_branch
              %635 = sbr.rel target = $region102
            $region101: #{_conv1d_pallas.1} parent=97 // pred_region
              // Predicated region
              $region114: #{_conv1d_pallas.1} parent=101 // pred_check
                _
              $region115: #{_conv1d_pallas.1} parent=101 // pred_check_branch
                %656 = sbr.rel (0) target = $region117
              $region116: #{_conv1d_pallas.1} parent=101 // pred_region
                loop: start=0, step=1, limit=1
                $region118: #{_conv1d_pallas.1} parent=116 // loop_pre_header
                  _
                $region119: #{_conv1d_pallas.1} parent=116 // loop_header
                  %s658 = sphi 0, %s662
                  %p659 = scmp.ge.s32.totalorder %s658, 1
                  %s663 = sphi %s631, %s631
                  %s664 = sphi %s625, %s625
                $region120: #{_conv1d_pallas.1} parent=116 // loop_header_branch
                  %661 = sbr.rel (%p659) target = $region124
                $region121: #{_conv1d_pallas.1} parent=116 // loop_body
                  _
                $region122: #{_conv1d_pallas.1} parent=116 // loop_footer
                  %s662 = sadd.s32 1, %s658
                $region123: #{_conv1d_pallas.1} parent=116 // loop_footer_branch
                  %657 = sbr.rel target = $region119
                $region124: #{_conv1d_pallas.1} parent=116 // loop_exit
                  _
                loop: start=0, step=1, limit=1
                $region125: #{_conv1d_pallas.1} parent=116 // loop_pre_header
                  _
                $region126: #{_conv1d_pallas.1} parent=116 // loop_header
                  %s667 = sphi 0, %s671
                  %p668 = scmp.ge.s32.totalorder %s667, 1
                  %s672 = sphi %s631, %s631
                  %s673 = sphi %s625, %s625
                $region127: #{_conv1d_pallas.1} parent=116 // loop_header_branch
                  %670 = sbr.rel (%p668) target = $region131
                $region128: #{_conv1d_pallas.1} parent=116 // loop_body
                  %v674 = vld [vmem:[%s672] sm:$0xf]
                  %675 = vst [vmem:[%s673] sm:$0xf] %v674
                  %v676 = vld [vmem:[%s672 + $0x54] sm:$0xf]
                  %677 = vst [vmem:[%s673 + $0x4] sm:$0xf] %v676
                  %v678 = vld [vmem:[%s672 + $0xa8] sm:$0xf]
                  %679 = vst [vmem:[%s673 + $0x8] sm:$0xf] %v678
                  %v680 = vld [vmem:[%s672 + $0xfc] sm:$0xf]
                  %681 = vst [vmem:[%s673 + $0xc] sm:$0xf] %v680
                $region129: #{_conv1d_pallas.1} parent=116 // loop_footer
                  %s671 = sadd.s32 1, %s667
                $region130: #{_conv1d_pallas.1} parent=116 // loop_footer_branch
                  %666 = sbr.rel target = $region126
                $region131: #{_conv1d_pallas.1} parent=116 // loop_exit
                  _
              $region117: #{_conv1d_pallas.1} parent=101 // pred_fallthru
                _
            $region102: #{_conv1d_pallas.1} parent=97 // pred_fallthru
              _
            // Predicated region
            $region103: #{_conv1d_pallas.1} parent=97 // pred_check
              _
            $region104: #{_conv1d_pallas.1} parent=97 // pred_check_branch
              %637 = sbr.rel (0) target = $region106
            $region105: #{_conv1d_pallas.1} parent=97 // pred_region
              loop: start=0, step=1, limit=1
              $region107: #{_conv1d_pallas.1} parent=105 // loop_pre_header
                _
              $region108: #{_conv1d_pallas.1} parent=105 // loop_header
                %s640 = sphi 0, %s644
                %p641 = scmp.ge.s32.totalorder %s640, 1
                %s645 = sphi %s631, %s631
                %s646 = sphi %s625, %s625
              $region109: #{_conv1d_pallas.1} parent=105 // loop_header_branch
                %643 = sbr.rel (%p641) target = $region113
              $region110: #{_conv1d_pallas.1} parent=105 // loop_body
                %v647 = vld [vmem:[%s645] sm:$0xf]
                %648 = vst [vmem:[%s646] sm:$0xf] %v647
                %v649 = vld [vmem:[%s645 + $0x54] sm:$0xf]
                %650 = vst [vmem:[%s646 + $0x4] sm:$0xf] %v649
                %v651 = vld [vmem:[%s645 + $0xa8] sm:$0xf]
                %652 = vst [vmem:[%s646 + $0x8] sm:$0xf] %v651
                %v653 = vld [vmem:[%s645 + $0xfc] sm:$0xf]
                %654 = vst [vmem:[%s646 + $0xc] sm:$0xf] %v653
              $region111: #{_conv1d_pallas.1} parent=105 // loop_footer
                %s644 = sadd.s32 1, %s640
              $region112: #{_conv1d_pallas.1} parent=105 // loop_footer_branch
                %639 = sbr.rel target = $region108
              $region113: #{_conv1d_pallas.1} parent=105 // loop_exit
                _
            $region106: #{_conv1d_pallas.1} parent=97 // pred_fallthru
              _
          $region98: #{_conv1d_pallas.1} parent=93 // pred_fallthru
            _
          %682 = vnop
        $region94: #{_conv1d_pallas.1} parent=23 // pred_fallthru
          _
      $region24: #{_conv1d_pallas.1} parent=5 // pred_fallthru
        _
      %p683 = scmp.le.s32.totalorder 1, %s10
      %p684 = scmp.lt.s32.totalorder %s10, 5
      %p685 = pnand %p683, %p684
      %p686 = pneg %p685
      // Predicated region
      $region132: #{_conv1d_pallas.1} parent=5 // pred_check
        _
      $region133: #{_conv1d_pallas.1} parent=5 // pred_check_branch
        %688 = sbr.rel (%p685) target = $region135
      $region134: #{_conv1d_pallas.1} parent=5 // pred_region
        %s689 = ssub.s32 %s10, 1
        %s690 = sand.u32 %s58, 1
        %s691 = sand.u32 %s58, 1
        %s692 = smul.addr %s691, 160
        %s693 = scalar_lea.vmem [#allocation3], %s692
        // Predicated region
        $region136: #{_conv1d_pallas.1} parent=134 // pred_check
          %p694 = pneg %p71
        $region137: #{_conv1d_pallas.1} parent=134 // pred_check_branch
          %696 = sbr.rel (%p694) target = $region139
        $region138: #{_conv1d_pallas.1} parent=134 // pred_region
          _
        $region139: #{_conv1d_pallas.1} parent=134 // pred_fallthru
          _
        %s697 = sand.u32 %s90, 1
        %s698 = sand.u32 %s90, 1
        %s699 = smul.addr %s698, 16
        %s700 = scalar_lea.vmem [#allocation4], %s699
        // Predicated region
        $region140: #{_conv1d_pallas.1} parent=134 // pred_check
          %p701 = pneg %p103
        $region141: #{_conv1d_pallas.1} parent=134 // pred_check_branch
          %703 = sbr.rel (%p701) target = $region143
        $region142: #{_conv1d_pallas.1} parent=134 // pred_region
          _
        $region143: #{_conv1d_pallas.1} parent=134 // pred_fallthru
          _
        %p704 = pneg %p43
        %p705 = pneg %p40
        %s706 = sand.u32 %s58, 1
        %s707 = sand.u32 %s58, 1
        %s708 = smul.addr %s707, 160
        %s709 = scalar_lea.vmem [#allocation3], %s708
        %p710 = pneg %p71
        %p711 = pneg %p68
        %s712 = sand.u32 %s90, 1
        %s713 = sand.u32 %s90, 1
        %s714 = smul.addr %s713, 16
        %s715 = scalar_lea.vmem [#allocation4], %s714
        %p716 = pneg %p103
        %p717 = pneg %p100
        %p718 = pneg %p124
        %p719 = pneg %p121
        %p720 = pneg %p152
        %p721 = pneg %p149
        %s722 = sand.u32 %s139, 1
        %s723 = sand.u32 %s139, 1
        %s724 = smul.addr %s723, 80
        %s725 = scalar_lea.vmem [#allocation5], %s724
        %s726 = smul.u32 10, %s20
        %s727 = ssub.s32 21, %s726
        %p728 = scmp.lt.s32.totalorder %s727, 10
        %s729 = scalar_select %p728, %s727, 10
        %s730 = smul.u32 256, %s729
        %s731 = sadd.s32 %s20, 1
        %s732 = smul.u32 %s731, 10
        %s733 = smul.u32 10, %s20
        %v735 = vld [vmem:[%s693] sm:$0xff]
        %v736 = vld [vmem:[%s693 + $0x8] sm:$0xff]
        %v737 = vld [vmem:[%s693 + $0x10] sm:$0xff]
        %v738 = vld [vmem:[%s693 + $0x18] sm:$0xff]
        %v739 = vld [vmem:[%s693 + $0x20] sm:$0xff]
        %v740 = vld [vmem:[%s693 + $0x28] sm:$0xff]
        %v741 = vld [vmem:[%s693 + $0x30] sm:$0xff]
        %v742 = vld [vmem:[%s693 + $0x38] sm:$0xff]
        %v743 = vld [vmem:[%s693 + $0x40] sm:$0xff]
        %v744 = vld [vmem:[%s693 + $0x48] sm:$0xff]
        %v745 = vld [vmem:[%s693 + $0x50] sm:$0xff]
        %v746 = vld [vmem:[%s693 + $0x58] sm:$0xff]
        %v747 = vld [vmem:[%s693 + $0x60] sm:$0xff]
        %v748 = vld [vmem:[%s693 + $0x68] sm:$0xff]
        %v749 = vld [vmem:[%s693 + $0x70] sm:$0xff]
        %v750 = vld [vmem:[%s693 + $0x78] sm:$0xff]
        %v751 = vld [vmem:[%s693 + $0x80] sm:$0xff]
        %v752 = vld [vmem:[%s693 + $0x88] sm:$0xff]
        %v753 = vld [vmem:[%s693 + $0x90] sm:$0xff]
        %v754 = vld [vmem:[%s693 + $0x98] sm:$0xff]
        %v775 = vunpack.c.l.b16 %v735
        %v776 = vunpack.c.h.b16 %v735
        %v777 = vunpack.c.l.b16 %v736
        %v778 = vunpack.c.h.b16 %v736
        %v779 = vunpack.c.l.b16 %v737
        %v780 = vunpack.c.h.b16 %v737
        %v781 = vunpack.c.l.b16 %v738
        %v782 = vunpack.c.h.b16 %v738
        %v783 = vunpack.c.l.b16 %v739
        %v784 = vunpack.c.h.b16 %v739
        %v785 = vunpack.c.l.b16 %v740
        %v786 = vunpack.c.h.b16 %v740
        %v787 = vunpack.c.l.b16 %v741
        %v788 = vunpack.c.h.b16 %v741
        %v789 = vunpack.c.l.b16 %v742
        %v790 = vunpack.c.h.b16 %v742
        %v791 = vunpack.c.l.b16 %v743
        %v792 = vunpack.c.h.b16 %v743
        %v793 = vunpack.c.l.b16 %v744
        %v794 = vunpack.c.h.b16 %v744
        %v795 = vunpack.c.l.b16 %v745
        %v796 = vunpack.c.h.b16 %v745
        %v797 = vunpack.c.l.b16 %v746
        %v798 = vunpack.c.h.b16 %v746
        %v799 = vunpack.c.l.b16 %v747
        %v800 = vunpack.c.h.b16 %v747
        %v801 = vunpack.c.l.b16 %v748
        %v802 = vunpack.c.h.b16 %v748
        %v803 = vunpack.c.l.b16 %v749
        %v804 = vunpack.c.h.b16 %v749
        %v805 = vunpack.c.l.b16 %v750
        %v806 = vunpack.c.h.b16 %v750
        %v807 = vunpack.c.l.b16 %v751
        %v808 = vunpack.c.h.b16 %v751
        %v809 = vunpack.c.l.b16 %v752
        %v810 = vunpack.c.h.b16 %v752
        %v811 = vunpack.c.l.b16 %v753
        %v812 = vunpack.c.h.b16 %v753
        %v813 = vunpack.c.l.b16 %v754
        %v814 = vunpack.c.h.b16 %v754
        %v815 = vpack.c.b16 %v785, %v775
        %v816 = vpack.c.b16 %v786, %v776
        %v817 = vpack.c.b16 %v787, %v777
        %v818 = vpack.c.b16 %v788, %v778
        %v819 = vpack.c.b16 %v789, %v779
        %v820 = vpack.c.b16 %v790, %v780
        %v821 = vpack.c.b16 %v791, %v781
        %v822 = vpack.c.b16 %v792, %v782
        %v823 = vpack.c.b16 %v793, %v783
        %v824 = vpack.c.b16 %v794, %v784
        %v825 = vpack.c.b16 %v805, %v795
        %v826 = vpack.c.b16 %v806, %v796
        %v827 = vpack.c.b16 %v807, %v797
        %v828 = vpack.c.b16 %v808, %v798
        %v829 = vpack.c.b16 %v809, %v799
        %v830 = vpack.c.b16 %v810, %v800
        %v831 = vpack.c.b16 %v811, %v801
        %v832 = vpack.c.b16 %v812, %v802
        %v833 = vpack.c.b16 %v813, %v803
        %v834 = vpack.c.b16 %v814, %v804
        %855 = vst [vmem:[#allocation2] sm:$0xff] %v815
        %856 = vst [vmem:[#allocation2 + $0x8] sm:$0xff] %v816
        %857 = vst [vmem:[#allocation2 + $0x10] sm:$0xff] %v817
        %858 = vst [vmem:[#allocation2 + $0x18] sm:$0xff] %v818
        %859 = vst [vmem:[#allocation2 + $0x20] sm:$0xff] %v819
        %860 = vst [vmem:[#allocation2 + $0x28] sm:$0xff] %v820
        %861 = vst [vmem:[#allocation2 + $0x30] sm:$0xff] %v821
        %862 = vst [vmem:[#allocation2 + $0x38] sm:$0xff] %v822
        %863 = vst [vmem:[#allocation2 + $0x40] sm:$0xff] %v823
        %864 = vst [vmem:[#allocation2 + $0x48] sm:$0xff] %v824
        %865 = vst [vmem:[#allocation2 + $0x58] sm:$0xff] %v825
        %866 = vst [vmem:[#allocation2 + $0x60] sm:$0xff] %v826
        %867 = vst [vmem:[#allocation2 + $0x68] sm:$0xff] %v827
        %868 = vst [vmem:[#allocation2 + $0x70] sm:$0xff] %v828
        %869 = vst [vmem:[#allocation2 + $0x78] sm:$0xff] %v829
        %870 = vst [vmem:[#allocation2 + $0x80] sm:$0xff] %v830
        %871 = vst [vmem:[#allocation2 + $0x88] sm:$0xff] %v831
        %872 = vst [vmem:[#allocation2 + $0x90] sm:$0xff] %v832
        %873 = vst [vmem:[#allocation2 + $0x98] sm:$0xff] %v833
        %874 = vst [vmem:[#allocation2 + $0xa0] sm:$0xff] %v834
        %v875 = vld [vmem:[%s700] sm:$0xf]
        %v876 = vld [vmem:[%s700 + $0x4] sm:$0xf]
        %v877 = vld [vmem:[%s700 + $0x8] sm:$0xf]
        %v878 = vld [vmem:[%s700 + $0xc] sm:$0xf]
        %v883 = vunpack.c.l.b16 %v875
        %v884 = vunpack.c.l.b16 %v876
        %v885 = vunpack.c.l.b16 %v877
        %v886 = vunpack.c.l.b16 %v878
        %v887 = vpack.c.b16 %v884, %v883
        %v888 = vpack.c.b16 %v886, %v885
        %891 = vst [vmem:[#allocation2 + $0x50] sm:$0xff] %v887
        %892 = vst [vmem:[#allocation2 + $0xa8] sm:$0xff] %v888
        %v893 = vld [vmem:[#allocation2] sm:$0xff]
        %v894 = vld [vmem:[#allocation2 + $0x8] sm:$0xff]
        %v895 = vld [vmem:[#allocation2 + $0x10] sm:$0xff]
        %v896 = vld [vmem:[#allocation2 + $0x18] sm:$0xff]
        %v897 = vld [vmem:[#allocation2 + $0x20] sm:$0xff]
        %v898 = vld [vmem:[#allocation2 + $0x28] sm:$0xff]
        %v899 = vld [vmem:[#allocation2 + $0x30] sm:$0xff]
        %v900 = vld [vmem:[#allocation2 + $0x38] sm:$0xff]
        %v901 = vld [vmem:[#allocation2 + $0x40] sm:$0xff]
        %v902 = vld [vmem:[#allocation2 + $0x48] sm:$0xff]
        %v903 = vld [vmem:[#allocation2 + $0x50] sm:$0xff]
        %v904 = vld [vmem:[#allocation2 + $0x58] sm:$0xff]
        %v905 = vld [vmem:[#allocation2 + $0x60] sm:$0xff]
        %v906 = vld [vmem:[#allocation2 + $0x68] sm:$0xff]
        %v907 = vld [vmem:[#allocation2 + $0x70] sm:$0xff]
        %v908 = vld [vmem:[#allocation2 + $0x78] sm:$0xff]
        %v909 = vld [vmem:[#allocation2 + $0x80] sm:$0xff]
        %v910 = vld [vmem:[#allocation2 + $0x88] sm:$0xff]
        %v911 = vld [vmem:[#allocation2 + $0x90] sm:$0xff]
        %v912 = vld [vmem:[#allocation2 + $0x98] sm:$0xff]
        %v913 = vld [vmem:[#allocation2 + $0xa0] sm:$0xff]
        %v914 = vld [vmem:[#allocation2 + $0xa8] sm:$0xff]
        %v915 = vld [vmem:[%s0] sm:$0xf]
        %v916 = vld [vmem:[%s0 + $0x4] sm:$0xf]
        %s917 = scalar_lea.vmem %s0, 8
        %v918 = vld [vmem:[%s917] sm:$0xf]
        %v919 = vld [vmem:[%s917 + $0x4] sm:$0xf]
        %v922 = vunpack.c.l.b16 %v918
        %v923 = vunpack.c.l.b16 %v919
        %v924 = vpack.c.b16 %v923, %v922
        %vm925 = vcmask 130048
        %v927 = vsel %vm925, %v924, 0
        %929 = vmatprep.subr.bf16.mxu0 %v905
        %930 = vmatpush1.bf16.msra.mxu0 %v904
        %931 = vmatprep.subr.bf16.mxu0 0
        %932 = vmatpush1.bf16.msra.mxu0 0
        %933 = vmatprep.subr.bf16.mxu0 0
        %934 = vmatpush1.bf16.msra.mxu0 0
        %935 = vmatprep.subr.bf16.mxu0 0
        %936 = vmatpush1.bf16.msra.mxu0 0
        %937 = vmatprep.subr.bf16.mxu0 0
        %938 = vmatpush1.bf16.msra.mxu0 0
        %939 = vmatprep.subr.bf16.mxu0 0
        %940 = vmatpush1.bf16.msra.mxu0 0
        %941 = vmatprep.subr.bf16.mxu0 0
        %942 = vmatpush1.bf16.msra.mxu0 0
        %943 = vmatprep.subr.bf16.mxu0 0
        %944 = vmatpush1.bf16.msra.mxu0 0
        %945 = vmatprep.subr.bf16.mxu0 0
        %946 = vmatpush1.bf16.msra.mxu0 0
        %947 = vmatprep.subr.bf16.mxu0 0
        %948 = vmatpush1.bf16.msra.mxu0 0
        %949 = vmatprep.subr.bf16.mxu0 0
        %950 = vmatpush1.bf16.msra.mxu0 0
        %951 = vmatprep.subr.bf16.mxu0 0
        %952 = vmatpush1.bf16.msra.mxu0 0
        %953 = vmatprep.subr.bf16.mxu0 0
        %954 = vmatpush1.bf16.msra.mxu0 0
        %955 = vmatprep.subr.bf16.mxu0 0
        %956 = vmatpush1.bf16.msra.mxu0 0
        %957 = vmatprep.subr.bf16.mxu0 0
        %958 = vmatpush1.bf16.msra.mxu0 0
        %959 = vmatprep.subr.bf16.mxu0 0
        %960 = vmatpush1.bf16.msra.mxu0 0
        %961 = vmatprep.mubr.bf16.mxu0 0
        %962 = vmatmul.mubr.bf16.gmra.mrb[0].mxu0 %v927
        %v963 = vpop.f32.mrb[0].mxu0
        %v964 = vadd.f32 0.0, %v963
        %v965 = vpop.f32.mrb[0].mxu0
        %v966 = vadd.f32 0.0, %v965
        %v967 = vpop.f32.mrb[0].mxu0
        %v968 = vadd.f32 0.0, %v967
        %v969 = vpop.f32.mrb[0].mxu0
        %v970 = vadd.f32 0.0, %v969
        %971 = vdwg.mxu0
        %972 = vmatprep.subr.bf16.mxu0 %v907
        %973 = vmatpush1.bf16.msra.mxu0 %v906
        %974 = vmatprep.subr.bf16.mxu0 0
        %975 = vmatpush1.bf16.msra.mxu0 0
        %976 = vmatprep.subr.bf16.mxu0 0
        %977 = vmatpush1.bf16.msra.mxu0 0
        %978 = vmatprep.subr.bf16.mxu0 0
        %979 = vmatpush1.bf16.msra.mxu0 0
        %980 = vmatprep.subr.bf16.mxu0 0
        %981 = vmatpush1.bf16.msra.mxu0 0
        %982 = vmatprep.subr.bf16.mxu0 0
        %983 = vmatpush1.bf16.msra.mxu0 0
        %984 = vmatprep.subr.bf16.mxu0 0
        %985 = vmatpush1.bf16.msra.mxu0 0
        %986 = vmatprep.subr.bf16.mxu0 0
        %987 = vmatpush1.bf16.msra.mxu0 0
        %988 = vmatprep.subr.bf16.mxu0 0
        %989 = vmatpush1.bf16.msra.mxu0 0
        %990 = vmatprep.subr.bf16.mxu0 0
        %991 = vmatpush1.bf16.msra.mxu0 0
        %992 = vmatprep.subr.bf16.mxu0 0
        %993 = vmatpush1.bf16.msra.mxu0 0
        %994 = vmatprep.subr.bf16.mxu0 0
        %995 = vmatpush1.bf16.msra.mxu0 0
        %996 = vmatprep.subr.bf16.mxu0 0
        %997 = vmatpush1.bf16.msra.mxu0 0
        %998 = vmatprep.subr.bf16.mxu0 0
        %999 = vmatpush1.bf16.msra.mxu0 0
        %1000 = vmatprep.subr.bf16.mxu0 0
        %1001 = vmatpush1.bf16.msra.mxu0 0
        %1002 = vmatprep.subr.bf16.mxu0 0
        %1003 = vmatpush1.bf16.msra.mxu0 0
        %1004 = vmatprep.mubr.bf16.mxu0 0
        %1005 = vmatmul.mubr.bf16.gmra.mrb[0].mxu0 %v927
        %v1006 = vpop.f32.mrb[0].mxu0
        %v1007 = vadd.f32 0.0, %v1006
        %v1008 = vpop.f32.mrb[0].mxu0
        %v1009 = vadd.f32 0.0, %v1008
        %v1010 = vpop.f32.mrb[0].mxu0
        %v1011 = vadd.f32 0.0, %v1010
        %v1012 = vpop.f32.mrb[0].mxu0
        %v1013 = vadd.f32 0.0, %v1012
        %1014 = vdwg.mxu0
        %1015 = vmatprep.subr.bf16.mxu0 %v909
        %1016 = vmatpush1.bf16.msra.mxu0 %v908
        %1017 = vmatprep.subr.bf16.mxu0 0
        %1018 = vmatpush1.bf16.msra.mxu0 0
        %1019 = vmatprep.subr.bf16.mxu0 0
        %1020 = vmatpush1.bf16.msra.mxu0 0
        %1021 = vmatprep.subr.bf16.mxu0 0
        %1022 = vmatpush1.bf16.msra.mxu0 0
        %1023 = vmatprep.subr.bf16.mxu0 0
        %1024 = vmatpush1.bf16.msra.mxu0 0
        %1025 = vmatprep.subr.bf16.mxu0 0
        %1026 = vmatpush1.bf16.msra.mxu0 0
        %1027 = vmatprep.subr.bf16.mxu0 0
        %1028 = vmatpush1.bf16.msra.mxu0 0
        %1029 = vmatprep.subr.bf16.mxu0 0
        %1030 = vmatpush1.bf16.msra.mxu0 0
        %1031 = vmatprep.subr.bf16.mxu0 0
        %1032 = vmatpush1.bf16.msra.mxu0 0
        %1033 = vmatprep.subr.bf16.mxu0 0
        %1034 = vmatpush1.bf16.msra.mxu0 0
        %1035 = vmatprep.subr.bf16.mxu0 0
        %1036 = vmatpush1.bf16.msra.mxu0 0
        %1037 = vmatprep.subr.bf16.mxu0 0
        %1038 = vmatpush1.bf16.msra.mxu0 0
        %1039 = vmatprep.subr.bf16.mxu0 0
        %1040 = vmatpush1.bf16.msra.mxu0 0
        %1041 = vmatprep.subr.bf16.mxu0 0
        %1042 = vmatpush1.bf16.msra.mxu0 0
        %1043 = vmatprep.subr.bf16.mxu0 0
        %1044 = vmatpush1.bf16.msra.mxu0 0
        %1045 = vmatprep.subr.bf16.mxu0 0
        %1046 = vmatpush1.bf16.msra.mxu0 0
        %1047 = vmatprep.mubr.bf16.mxu0 0
        %1048 = vmatmul.mubr.bf16.gmra.mrb[0].mxu0 %v927
        %v1049 = vpop.f32.mrb[0].mxu0
        %v1050 = vadd.f32 0.0, %v1049
        %v1051 = vpop.f32.mrb[0].mxu0
        %v1052 = vadd.f32 0.0, %v1051
        %v1053 = vpop.f32.mrb[0].mxu0
        %v1054 = vadd.f32 0.0, %v1053
        %v1055 = vpop.f32.mrb[0].mxu0
        %v1056 = vadd.f32 0.0, %v1055
        %1057 = vdwg.mxu0
        %1058 = vmatprep.subr.bf16.mxu0 %v911
        %1059 = vmatpush1.bf16.msra.mxu0 %v910
        %1060 = vmatprep.subr.bf16.mxu0 0
        %1061 = vmatpush1.bf16.msra.mxu0 0
        %1062 = vmatprep.subr.bf16.mxu0 0
        %1063 = vmatpush1.bf16.msra.mxu0 0
        %1064 = vmatprep.subr.bf16.mxu0 0
        %1065 = vmatpush1.bf16.msra.mxu0 0
        %1066 = vmatprep.subr.bf16.mxu0 0
        %1067 = vmatpush1.bf16.msra.mxu0 0
        %1068 = vmatprep.subr.bf16.mxu0 0
        %1069 = vmatpush1.bf16.msra.mxu0 0
        %1070 = vmatprep.subr.bf16.mxu0 0
        %1071 = vmatpush1.bf16.msra.mxu0 0
        %1072 = vmatprep.subr.bf16.mxu0 0
        %1073 = vmatpush1.bf16.msra.mxu0 0
        %1074 = vmatprep.subr.bf16.mxu0 0
        %1075 = vmatpush1.bf16.msra.mxu0 0
        %1076 = vmatprep.subr.bf16.mxu0 0
        %1077 = vmatpush1.bf16.msra.mxu0 0
        %1078 = vmatprep.subr.bf16.mxu0 0
        %1079 = vmatpush1.bf16.msra.mxu0 0
        %1080 = vmatprep.subr.bf16.mxu0 0
        %1081 = vmatpush1.bf16.msra.mxu0 0
        %1082 = vmatprep.subr.bf16.mxu0 0
        %1083 = vmatpush1.bf16.msra.mxu0 0
        %1084 = vmatprep.subr.bf16.mxu0 0
        %1085 = vmatpush1.bf16.msra.mxu0 0
        %1086 = vmatprep.subr.bf16.mxu0 0
        %1087 = vmatpush1.bf16.msra.mxu0 0
        %1088 = vmatprep.subr.bf16.mxu0 0
        %1089 = vmatpush1.bf16.msra.mxu0 0
        %1090 = vmatprep.mubr.bf16.mxu0 0
        %1091 = vmatmul.mubr.bf16.gmra.mrb[0].mxu0 %v927
        %v1092 = vpop.f32.mrb[0].mxu0
        %v1093 = vadd.f32 0.0, %v1092
        %v1094 = vpop.f32.mrb[0].mxu0
        %v1095 = vadd.f32 0.0, %v1094
        %v1096 = vpop.f32.mrb[0].mxu0
        %v1097 = vadd.f32 0.0, %v1096
        %v1098 = vpop.f32.mrb[0].mxu0
        %v1099 = vadd.f32 0.0, %v1098
        %1100 = vdwg.mxu0
        %1101 = vmatprep.subr.bf16.mxu0 %v913
        %1102 = vmatpush1.bf16.msra.mxu0 %v912
        %1103 = vmatprep.subr.bf16.mxu0 0
        %1104 = vmatpush1.bf16.msra.mxu0 0
        %1105 = vmatprep.subr.bf16.mxu0 0
        %1106 = vmatpush1.bf16.msra.mxu0 0
        %1107 = vmatprep.subr.bf16.mxu0 0
        %1108 = vmatpush1.bf16.msra.mxu0 0
        %1109 = vmatprep.subr.bf16.mxu0 0
        %1110 = vmatpush1.bf16.msra.mxu0 0
        %1111 = vmatprep.subr.bf16.mxu0 0
        %1112 = vmatpush1.bf16.msra.mxu0 0
        %1113 = vmatprep.subr.bf16.mxu0 0
        %1114 = vmatpush1.bf16.msra.mxu0 0
        %1115 = vmatprep.subr.bf16.mxu0 0
        %1116 = vmatpush1.bf16.msra.mxu0 0
        %1117 = vmatprep.subr.bf16.mxu0 0
        %1118 = vmatpush1.bf16.msra.mxu0 0
        %1119 = vmatprep.subr.bf16.mxu0 0
        %1120 = vmatpush1.bf16.msra.mxu0 0
        %1121 = vmatprep.subr.bf16.mxu0 0
        %1122 = vmatpush1.bf16.msra.mxu0 0
        %1123 = vmatprep.subr.bf16.mxu0 0
        %1124 = vmatpush1.bf16.msra.mxu0 0
        %1125 = vmatprep.subr.bf16.mxu0 0
        %1126 = vmatpush1.bf16.msra.mxu0 0
        %1127 = vmatprep.subr.bf16.mxu0 0
        %1128 = vmatpush1.bf16.msra.mxu0 0
        %1129 = vmatprep.subr.bf16.mxu0 0
        %1130 = vmatpush1.bf16.msra.mxu0 0
        %1131 = vmatprep.subr.bf16.mxu0 0
        %1132 = vmatpush1.bf16.msra.mxu0 0
        %1133 = vmatprep.mubr.bf16.mxu0 0
        %1134 = vmatmul.mubr.bf16.gmra.mrb[0].mxu0 %v927
        %v1135 = vpop.f32.mrb[0].mxu0
        %v1136 = vadd.f32 0.0, %v1135
        %v1137 = vpop.f32.mrb[0].mxu0
        %v1138 = vadd.f32 0.0, %v1137
        %v1139 = vpop.f32.mrb[0].mxu0
        %v1140 = vadd.f32 0.0, %v1139
        %v1141 = vpop.f32.mrb[0].mxu0
        %v1142 = vadd.f32 0.0, %v1141
        %1143 = vdwg.mxu0
        %v1146 = vunpack.c.l.b16 %v915
        %v1147 = vunpack.c.l.b16 %v916
        %v1148 = vpack.c.b16 %v1147, %v1146
        %v1150 = vsel %vm925, %v1148, 0
        %1152 = vmatprep.subr.bf16.mxu0 %v894
        %1153 = vmatpush1.bf16.msra.mxu0 %v893
        %1154 = vmatprep.subr.bf16.mxu0 0
        %1155 = vmatpush1.bf16.msra.mxu0 0
        %1156 = vmatprep.subr.bf16.mxu0 0
        %1157 = vmatpush1.bf16.msra.mxu0 0
        %1158 = vmatprep.subr.bf16.mxu0 0
        %1159 = vmatpush1.bf16.msra.mxu0 0
        %1160 = vmatprep.subr.bf16.mxu0 0
        %1161 = vmatpush1.bf16.msra.mxu0 0
        %1162 = vmatprep.subr.bf16.mxu0 0
        %1163 = vmatpush1.bf16.msra.mxu0 0
        %1164 = vmatprep.subr.bf16.mxu0 0
        %1165 = vmatpush1.bf16.msra.mxu0 0
        %1166 = vmatprep.subr.bf16.mxu0 0
        %1167 = vmatpush1.bf16.msra.mxu0 0
        %1168 = vmatprep.subr.bf16.mxu0 0
        %1169 = vmatpush1.bf16.msra.mxu0 0
        %1170 = vmatprep.subr.bf16.mxu0 0
        %1171 = vmatpush1.bf16.msra.mxu0 0
        %1172 = vmatprep.subr.bf16.mxu0 0
        %1173 = vmatpush1.bf16.msra.mxu0 0
        %1174 = vmatprep.subr.bf16.mxu0 0
        %1175 = vmatpush1.bf16.msra.mxu0 0
        %1176 = vmatprep.subr.bf16.mxu0 0
        %1177 = vmatpush1.bf16.msra.mxu0 0
        %1178 = vmatprep.subr.bf16.mxu0 0
        %1179 = vmatpush1.bf16.msra.mxu0 0
        %1180 = vmatprep.subr.bf16.mxu0 0
        %1181 = vmatpush1.bf16.msra.mxu0 0
        %1182 = vmatprep.subr.bf16.mxu0 0
        %1183 = vmatpush1.bf16.msra.mxu0 0
        %1184 = vmatprep.mubr.bf16.mxu0 0
        %1185 = vmatmul.mubr.bf16.gmra.mrb[0].mxu0 %v1150
        %v1186 = vpop.f32.mrb[0].mxu0
        %v1187 = vadd.f32 %v964, %v1186
        %v1188 = vpop.f32.mrb[0].mxu0
        %v1189 = vadd.f32 %v966, %v1188
        %v1190 = vpop.f32.mrb[0].mxu0
        %v1191 = vadd.f32 %v968, %v1190
        %v1192 = vpop.f32.mrb[0].mxu0
        %v1193 = vadd.f32 %v970, %v1192
        %1194 = vdwg.mxu0
        %1195 = vmatprep.subr.bf16.mxu0 %v896
        %1196 = vmatpush1.bf16.msra.mxu0 %v895
        %1197 = vmatprep.subr.bf16.mxu0 0
        %1198 = vmatpush1.bf16.msra.mxu0 0
        %1199 = vmatprep.subr.bf16.mxu0 0
        %1200 = vmatpush1.bf16.msra.mxu0 0
        %1201 = vmatprep.subr.bf16.mxu0 0
        %1202 = vmatpush1.bf16.msra.mxu0 0
        %1203 = vmatprep.subr.bf16.mxu0 0
        %1204 = vmatpush1.bf16.msra.mxu0 0
        %1205 = vmatprep.subr.bf16.mxu0 0
        %1206 = vmatpush1.bf16.msra.mxu0 0
        %1207 = vmatprep.subr.bf16.mxu0 0
        %1208 = vmatpush1.bf16.msra.mxu0 0
        %1209 = vmatprep.subr.bf16.mxu0 0
        %1210 = vmatpush1.bf16.msra.mxu0 0
        %1211 = vmatprep.subr.bf16.mxu0 0
        %1212 = vmatpush1.bf16.msra.mxu0 0
        %1213 = vmatprep.subr.bf16.mxu0 0
        %1214 = vmatpush1.bf16.msra.mxu0 0
        %1215 = vmatprep.subr.bf16.mxu0 0
        %1216 = vmatpush1.bf16.msra.mxu0 0
        %1217 = vmatprep.subr.bf16.mxu0 0
        %1218 = vmatpush1.bf16.msra.mxu0 0
        %1219 = vmatprep.subr.bf16.mxu0 0
        %1220 = vmatpush1.bf16.msra.mxu0 0
        %1221 = vmatprep.subr.bf16.mxu0 0
        %1222 = vmatpush1.bf16.msra.mxu0 0
        %1223 = vmatprep.subr.bf16.mxu0 0
        %1224 = vmatpush1.bf16.msra.mxu0 0
        %1225 = vmatprep.subr.bf16.mxu0 0
        %1226 = vmatpush1.bf16.msra.mxu0 0
        %1227 = vmatprep.mubr.bf16.mxu0 0
        %1228 = vmatmul.mubr.bf16.gmra.mrb[0].mxu0 %v1150
        %v1229 = vpop.f32.mrb[0].mxu0
        %v1230 = vadd.f32 %v1007, %v1229
        %v1231 = vpop.f32.mrb[0].mxu0
        %v1232 = vadd.f32 %v1009, %v1231
        %v1233 = vpop.f32.mrb[0].mxu0
        %v1234 = vadd.f32 %v1011, %v1233
        %v1235 = vpop.f32.mrb[0].mxu0
        %v1236 = vadd.f32 %v1013, %v1235
        %1237 = vdwg.mxu0
        %1238 = vmatprep.subr.bf16.mxu0 %v898
        %1239 = vmatpush1.bf16.msra.mxu0 %v897
        %1240 = vmatprep.subr.bf16.mxu0 0
        %1241 = vmatpush1.bf16.msra.mxu0 0
        %1242 = vmatprep.subr.bf16.mxu0 0
        %1243 = vmatpush1.bf16.msra.mxu0 0
        %1244 = vmatprep.subr.bf16.mxu0 0
        %1245 = vmatpush1.bf16.msra.mxu0 0
        %1246 = vmatprep.subr.bf16.mxu0 0
        %1247 = vmatpush1.bf16.msra.mxu0 0
        %1248 = vmatprep.subr.bf16.mxu0 0
        %1249 = vmatpush1.bf16.msra.mxu0 0
        %1250 = vmatprep.subr.bf16.mxu0 0
        %1251 = vmatpush1.bf16.msra.mxu0 0
        %1252 = vmatprep.subr.bf16.mxu0 0
        %1253 = vmatpush1.bf16.msra.mxu0 0
        %1254 = vmatprep.subr.bf16.mxu0 0
        %1255 = vmatpush1.bf16.msra.mxu0 0
        %1256 = vmatprep.subr.bf16.mxu0 0
        %1257 = vmatpush1.bf16.msra.mxu0 0
        %1258 = vmatprep.subr.bf16.mxu0 0
        %1259 = vmatpush1.bf16.msra.mxu0 0
        %1260 = vmatprep.subr.bf16.mxu0 0
        %1261 = vmatpush1.bf16.msra.mxu0 0
        %1262 = vmatprep.subr.bf16.mxu0 0
        %1263 = vmatpush1.bf16.msra.mxu0 0
        %1264 = vmatprep.subr.bf16.mxu0 0
        %1265 = vmatpush1.bf16.msra.mxu0 0
        %1266 = vmatprep.subr.bf16.mxu0 0
        %1267 = vmatpush1.bf16.msra.mxu0 0
        %1268 = vmatprep.subr.bf16.mxu0 0
        %1269 = vmatpush1.bf16.msra.mxu0 0
        %1270 = vmatprep.mubr.bf16.mxu0 0
        %1271 = vmatmul.mubr.bf16.gmra.mrb[0].mxu0 %v1150
        %v1272 = vpop.f32.mrb[0].mxu0
        %v1273 = vadd.f32 %v1050, %v1272
        %v1274 = vpop.f32.mrb[0].mxu0
        %v1275 = vadd.f32 %v1052, %v1274
        %v1276 = vpop.f32.mrb[0].mxu0
        %v1277 = vadd.f32 %v1054, %v1276
        %v1278 = vpop.f32.mrb[0].mxu0
        %v1279 = vadd.f32 %v1056, %v1278
        %1280 = vdwg.mxu0
        %1281 = vmatprep.subr.bf16.mxu0 %v900
        %1282 = vmatpush1.bf16.msra.mxu0 %v899
        %1283 = vmatprep.subr.bf16.mxu0 0
        %1284 = vmatpush1.bf16.msra.mxu0 0
        %1285 = vmatprep.subr.bf16.mxu0 0
        %1286 = vmatpush1.bf16.msra.mxu0 0
        %1287 = vmatprep.subr.bf16.mxu0 0
        %1288 = vmatpush1.bf16.msra.mxu0 0
        %1289 = vmatprep.subr.bf16.mxu0 0
        %1290 = vmatpush1.bf16.msra.mxu0 0
        %1291 = vmatprep.subr.bf16.mxu0 0
        %1292 = vmatpush1.bf16.msra.mxu0 0
        %1293 = vmatprep.subr.bf16.mxu0 0
        %1294 = vmatpush1.bf16.msra.mxu0 0
        %1295 = vmatprep.subr.bf16.mxu0 0
        %1296 = vmatpush1.bf16.msra.mxu0 0
        %1297 = vmatprep.subr.bf16.mxu0 0
        %1298 = vmatpush1.bf16.msra.mxu0 0
        %1299 = vmatprep.subr.bf16.mxu0 0
        %1300 = vmatpush1.bf16.msra.mxu0 0
        %1301 = vmatprep.subr.bf16.mxu0 0
        %1302 = vmatpush1.bf16.msra.mxu0 0
        %1303 = vmatprep.subr.bf16.mxu0 0
        %1304 = vmatpush1.bf16.msra.mxu0 0
        %1305 = vmatprep.subr.bf16.mxu0 0
        %1306 = vmatpush1.bf16.msra.mxu0 0
        %1307 = vmatprep.subr.bf16.mxu0 0
        %1308 = vmatpush1.bf16.msra.mxu0 0
        %1309 = vmatprep.subr.bf16.mxu0 0
        %1310 = vmatpush1.bf16.msra.mxu0 0
        %1311 = vmatprep.subr.bf16.mxu0 0
        %1312 = vmatpush1.bf16.msra.mxu0 0
        %1313 = vmatprep.mubr.bf16.mxu0 0
        %1314 = vmatmul.mubr.bf16.gmra.mrb[0].mxu0 %v1150
        %v1315 = vpop.f32.mrb[0].mxu0
        %v1316 = vadd.f32 %v1093, %v1315
        %v1317 = vpop.f32.mrb[0].mxu0
        %v1318 = vadd.f32 %v1095, %v1317
        %v1319 = vpop.f32.mrb[0].mxu0
        %v1320 = vadd.f32 %v1097, %v1319
        %v1321 = vpop.f32.mrb[0].mxu0
        %v1322 = vadd.f32 %v1099, %v1321
        %1323 = vdwg.mxu0
        %1324 = vmatprep.subr.bf16.mxu0 %v902
        %1325 = vmatpush1.bf16.msra.mxu0 %v901
        %1326 = vmatprep.subr.bf16.mxu0 0
        %1327 = vmatpush1.bf16.msra.mxu0 0
        %1328 = vmatprep.subr.bf16.mxu0 0
        %1329 = vmatpush1.bf16.msra.mxu0 0
        %1330 = vmatprep.subr.bf16.mxu0 0
        %1331 = vmatpush1.bf16.msra.mxu0 0
        %1332 = vmatprep.subr.bf16.mxu0 0
        %1333 = vmatpush1.bf16.msra.mxu0 0
        %1334 = vmatprep.subr.bf16.mxu0 0
        %1335 = vmatpush1.bf16.msra.mxu0 0
        %1336 = vmatprep.subr.bf16.mxu0 0
        %1337 = vmatpush1.bf16.msra.mxu0 0
        %1338 = vmatprep.subr.bf16.mxu0 0
        %1339 = vmatpush1.bf16.msra.mxu0 0
        %1340 = vmatprep.subr.bf16.mxu0 0
        %1341 = vmatpush1.bf16.msra.mxu0 0
        %1342 = vmatprep.subr.bf16.mxu0 0
        %1343 = vmatpush1.bf16.msra.mxu0 0
        %1344 = vmatprep.subr.bf16.mxu0 0
        %1345 = vmatpush1.bf16.msra.mxu0 0
        %1346 = vmatprep.subr.bf16.mxu0 0
        %1347 = vmatpush1.bf16.msra.mxu0 0
        %1348 = vmatprep.subr.bf16.mxu0 0
        %1349 = vmatpush1.bf16.msra.mxu0 0
        %1350 = vmatprep.subr.bf16.mxu0 0
        %1351 = vmatpush1.bf16.msra.mxu0 0
        %1352 = vmatprep.subr.bf16.mxu0 0
        %1353 = vmatpush1.bf16.msra.mxu0 0
        %1354 = vmatprep.subr.bf16.mxu0 0
        %1355 = vmatpush1.bf16.msra.mxu0 0
        %1356 = vmatprep.mubr.bf16.mxu0 0
        %1357 = vmatmul.mubr.bf16.gmra.mrb[0].mxu0 %v1150
        %v1358 = vpop.f32.mrb[0].mxu0
        %v1359 = vadd.f32 %v1136, %v1358
        %v1360 = vpop.f32.mrb[0].mxu0
        %v1361 = vadd.f32 %v1138, %v1360
        %v1362 = vpop.f32.mrb[0].mxu0
        %v1363 = vadd.f32 %v1140, %v1362
        %v1364 = vpop.f32.mrb[0].mxu0
        %v1365 = vadd.f32 %v1142, %v1364
        %1366 = vdwg.mxu0
        %s1367 = scalar_lea.vmem %s0, 16
        %v1368 = vld [vmem:[%s1367] sm:$0xf]
        %v1369 = vld [vmem:[%s1367 + $0x4] sm:$0xf]
        %v1372 = vunpack.c.l.b16 %v1368
        %v1373 = vunpack.c.l.b16 %v1369
        %v1374 = vpack.c.b16 %v1373, %v1372
        %1386 = vrot.lane.b32.xlu0 %v893, 127
        %v1387 = vpop.permute.xlu0 %1386
        %1388 = vrot.lane.b32.xlu0 %v894, 127
        %v1389 = vpop.permute.xlu0 %1388
        %1390 = vrot.lane.b32.xlu0 %v895, 127
        %v1391 = vpop.permute.xlu0 %1390
        %1392 = vrot.lane.b32.xlu0 %v896, 127
        %v1393 = vpop.permute.xlu0 %1392
        %1394 = vrot.lane.b32.xlu0 %v897, 127
        %v1395 = vpop.permute.xlu0 %1394
        %1396 = vrot.lane.b32.xlu0 %v898, 127
        %v1397 = vpop.permute.xlu0 %1396
        %1398 = vrot.lane.b32.xlu0 %v899, 127
        %v1399 = vpop.permute.xlu0 %1398
        %1400 = vrot.lane.b32.xlu0 %v900, 127
        %v1401 = vpop.permute.xlu0 %1400
        %1402 = vrot.lane.b32.xlu0 %v901, 127
        %v1403 = vpop.permute.xlu0 %1402
        %1404 = vrot.lane.b32.xlu0 %v902, 127
        %v1405 = vpop.permute.xlu0 %1404
        %1406 = vrot.lane.b32.xlu0 %v903, 127
        %v1407 = vpop.permute.xlu0 %1406
        %vm1408 = vcmask 1039360
        %v1409 = vsel %vm1408, %v1387, %v1389
        %v1410 = vsel %vm1408, %v1389, %v1391
        %v1411 = vsel %vm1408, %v1391, %v1393
        %v1412 = vsel %vm1408, %v1393, %v1395
        %v1413 = vsel %vm1408, %v1395, %v1397
        %v1414 = vsel %vm1408, %v1397, %v1399
        %v1415 = vsel %vm1408, %v1399, %v1401
        %v1416 = vsel %vm1408, %v1401, %v1403
        %v1417 = vsel %vm1408, %v1403, %v1405
        %v1418 = vsel %vm1408, %v1405, %v1407
        %v1430 = vsel %vm925, %v1374, 0
        %1432 = vmatprep.subr.bf16.mxu0 %v1410
        %1433 = vmatpush1.bf16.msra.mxu0 %v1409
        %1434 = vmatprep.subr.bf16.mxu0 0
        %1435 = vmatpush1.bf16.msra.mxu0 0
        %1436 = vmatprep.subr.bf16.mxu0 0
        %1437 = vmatpush1.bf16.msra.mxu0 0
        %1438 = vmatprep.subr.bf16.mxu0 0
        %1439 = vmatpush1.bf16.msra.mxu0 0
        %1440 = vmatprep.subr.bf16.mxu0 0
        %1441 = vmatpush1.bf16.msra.mxu0 0
        %1442 = vmatprep.subr.bf16.mxu0 0
        %1443 = vmatpush1.bf16.msra.mxu0 0
        %1444 = vmatprep.subr.bf16.mxu0 0
        %1445 = vmatpush1.bf16.msra.mxu0 0
        %1446 = vmatprep.subr.bf16.mxu0 0
        %1447 = vmatpush1.bf16.msra.mxu0 0
        %1448 = vmatprep.subr.bf16.mxu0 0
        %1449 = vmatpush1.bf16.msra.mxu0 0
        %1450 = vmatprep.subr.bf16.mxu0 0
        %1451 = vmatpush1.bf16.msra.mxu0 0
        %1452 = vmatprep.subr.bf16.mxu0 0
        %1453 = vmatpush1.bf16.msra.mxu0 0
        %1454 = vmatprep.subr.bf16.mxu0 0
        %1455 = vmatpush1.bf16.msra.mxu0 0
        %1456 = vmatprep.subr.bf16.mxu0 0
        %1457 = vmatpush1.bf16.msra.mxu0 0
        %1458 = vmatprep.subr.bf16.mxu0 0
        %1459 = vmatpush1.bf16.msra.mxu0 0
        %1460 = vmatprep.subr.bf16.mxu0 0
        %1461 = vmatpush1.bf16.msra.mxu0 0
        %1462 = vmatprep.subr.bf16.mxu0 0
        %1463 = vmatpush1.bf16.msra.mxu0 0
        %1464 = vmatprep.mubr.bf16.mxu0 0
        %1465 = vmatmul.mubr.bf16.gmra.mrb[0].mxu0 %v1430
        %v1466 = vpop.f32.mrb[0].mxu0
        %v1467 = vadd.f32 0.0, %v1466
        %v1468 = vpop.f32.mrb[0].mxu0
        %v1469 = vadd.f32 0.0, %v1468
        %v1470 = vpop.f32.mrb[0].mxu0
        %v1471 = vadd.f32 0.0, %v1470
        %v1472 = vpop.f32.mrb[0].mxu0
        %v1473 = vadd.f32 0.0, %v1472
        %1474 = vdwg.mxu0
        %1475 = vmatprep.subr.bf16.mxu0 %v1412
        %1476 = vmatpush1.bf16.msra.mxu0 %v1411
        %1477 = vmatprep.subr.bf16.mxu0 0
        %1478 = vmatpush1.bf16.msra.mxu0 0
        %1479 = vmatprep.subr.bf16.mxu0 0
        %1480 = vmatpush1.bf16.msra.mxu0 0
        %1481 = vmatprep.subr.bf16.mxu0 0
        %1482 = vmatpush1.bf16.msra.mxu0 0
        %1483 = vmatprep.subr.bf16.mxu0 0
        %1484 = vmatpush1.bf16.msra.mxu0 0
        %1485 = vmatprep.subr.bf16.mxu0 0
        %1486 = vmatpush1.bf16.msra.mxu0 0
        %1487 = vmatprep.subr.bf16.mxu0 0
        %1488 = vmatpush1.bf16.msra.mxu0 0
        %1489 = vmatprep.subr.bf16.mxu0 0
        %1490 = vmatpush1.bf16.msra.mxu0 0
        %1491 = vmatprep.subr.bf16.mxu0 0
        %1492 = vmatpush1.bf16.msra.mxu0 0
        %1493 = vmatprep.subr.bf16.mxu0 0
        %1494 = vmatpush1.bf16.msra.mxu0 0
        %1495 = vmatprep.subr.bf16.mxu0 0
        %1496 = vmatpush1.bf16.msra.mxu0 0
        %1497 = vmatprep.subr.bf16.mxu0 0
        %1498 = vmatpush1.bf16.msra.mxu0 0
        %1499 = vmatprep.subr.bf16.mxu0 0
        %1500 = vmatpush1.bf16.msra.mxu0 0
        %1501 = vmatprep.subr.bf16.mxu0 0
        %1502 = vmatpush1.bf16.msra.mxu0 0
        %1503 = vmatprep.subr.bf16.mxu0 0
        %1504 = vmatpush1.bf16.msra.mxu0 0
        %1505 = vmatprep.subr.bf16.mxu0 0
        %1506 = vmatpush1.bf16.msra.mxu0 0
        %1507 = vmatprep.mubr.bf16.mxu0 0
        %1508 = vmatmul.mubr.bf16.gmra.mrb[0].mxu0 %v1430
        %v1509 = vpop.f32.mrb[0].mxu0
        %v1510 = vadd.f32 0.0, %v1509
        %v1511 = vpop.f32.mrb[0].mxu0
        %v1512 = vadd.f32 0.0, %v1511
        %v1513 = vpop.f32.mrb[0].mxu0
        %v1514 = vadd.f32 0.0, %v1513
        %v1515 = vpop.f32.mrb[0].mxu0
        %v1516 = vadd.f32 0.0, %v1515
        %1517 = vdwg.mxu0
        %1518 = vmatprep.subr.bf16.mxu0 %v1414
        %1519 = vmatpush1.bf16.msra.mxu0 %v1413
        %1520 = vmatprep.subr.bf16.mxu0 0
        %1521 = vmatpush1.bf16.msra.mxu0 0
        %1522 = vmatprep.subr.bf16.mxu0 0
        %1523 = vmatpush1.bf16.msra.mxu0 0
        %1524 = vmatprep.subr.bf16.mxu0 0
        %1525 = vmatpush1.bf16.msra.mxu0 0
        %1526 = vmatprep.subr.bf16.mxu0 0
        %1527 = vmatpush1.bf16.msra.mxu0 0
        %1528 = vmatprep.subr.bf16.mxu0 0
        %1529 = vmatpush1.bf16.msra.mxu0 0
        %1530 = vmatprep.subr.bf16.mxu0 0
        %1531 = vmatpush1.bf16.msra.mxu0 0
        %1532 = vmatprep.subr.bf16.mxu0 0
        %1533 = vmatpush1.bf16.msra.mxu0 0
        %1534 = vmatprep.subr.bf16.mxu0 0
        %1535 = vmatpush1.bf16.msra.mxu0 0
        %1536 = vmatprep.subr.bf16.mxu0 0
        %1537 = vmatpush1.bf16.msra.mxu0 0
        %1538 = vmatprep.subr.bf16.mxu0 0
        %1539 = vmatpush1.bf16.msra.mxu0 0
        %1540 = vmatprep.subr.bf16.mxu0 0
        %1541 = vmatpush1.bf16.msra.mxu0 0
        %1542 = vmatprep.subr.bf16.mxu0 0
        %1543 = vmatpush1.bf16.msra.mxu0 0
        %1544 = vmatprep.subr.bf16.mxu0 0
        %1545 = vmatpush1.bf16.msra.mxu0 0
        %1546 = vmatprep.subr.bf16.mxu0 0
        %1547 = vmatpush1.bf16.msra.mxu0 0
        %1548 = vmatprep.subr.bf16.mxu0 0
        %1549 = vmatpush1.bf16.msra.mxu0 0
        %1550 = vmatprep.mubr.bf16.mxu0 0
        %1551 = vmatmul.mubr.bf16.gmra.mrb[0].mxu0 %v1430
        %v1552 = vpop.f32.mrb[0].mxu0
        %v1553 = vadd.f32 0.0, %v1552
        %v1554 = vpop.f32.mrb[0].mxu0
        %v1555 = vadd.f32 0.0, %v1554
        %v1556 = vpop.f32.mrb[0].mxu0
        %v1557 = vadd.f32 0.0, %v1556
        %v1558 = vpop.f32.mrb[0].mxu0
        %v1559 = vadd.f32 0.0, %v1558
        %1560 = vdwg.mxu0
        %1561 = vmatprep.subr.bf16.mxu0 %v1416
        %1562 = vmatpush1.bf16.msra.mxu0 %v1415
        %1563 = vmatprep.subr.bf16.mxu0 0
        %1564 = vmatpush1.bf16.msra.mxu0 0
        %1565 = vmatprep.subr.bf16.mxu0 0
        %1566 = vmatpush1.bf16.msra.mxu0 0
        %1567 = vmatprep.subr.bf16.mxu0 0
        %1568 = vmatpush1.bf16.msra.mxu0 0
        %1569 = vmatprep.subr.bf16.mxu0 0
        %1570 = vmatpush1.bf16.msra.mxu0 0
        %1571 = vmatprep.subr.bf16.mxu0 0
        %1572 = vmatpush1.bf16.msra.mxu0 0
        %1573 = vmatprep.subr.bf16.mxu0 0
        %1574 = vmatpush1.bf16.msra.mxu0 0
        %1575 = vmatprep.subr.bf16.mxu0 0
        %1576 = vmatpush1.bf16.msra.mxu0 0
        %1577 = vmatprep.subr.bf16.mxu0 0
        %1578 = vmatpush1.bf16.msra.mxu0 0
        %1579 = vmatprep.subr.bf16.mxu0 0
        %1580 = vmatpush1.bf16.msra.mxu0 0
        %1581 = vmatprep.subr.bf16.mxu0 0
        %1582 = vmatpush1.bf16.msra.mxu0 0
        %1583 = vmatprep.subr.bf16.mxu0 0
        %1584 = vmatpush1.bf16.msra.mxu0 0
        %1585 = vmatprep.subr.bf16.mxu0 0
        %1586 = vmatpush1.bf16.msra.mxu0 0
        %1587 = vmatprep.subr.bf16.mxu0 0
        %1588 = vmatpush1.bf16.msra.mxu0 0
        %1589 = vmatprep.subr.bf16.mxu0 0
        %1590 = vmatpush1.bf16.msra.mxu0 0
        %1591 = vmatprep.subr.bf16.mxu0 0
        %1592 = vmatpush1.bf16.msra.mxu0 0
        %1593 = vmatprep.mubr.bf16.mxu0 0
        %1594 = vmatmul.mubr.bf16.gmra.mrb[0].mxu0 %v1430
        %v1595 = vpop.f32.mrb[0].mxu0
        %v1596 = vadd.f32 0.0, %v1595
        %v1597 = vpop.f32.mrb[0].mxu0
        %v1598 = vadd.f32 0.0, %v1597
        %v1599 = vpop.f32.mrb[0].mxu0
        %v1600 = vadd.f32 0.0, %v1599
        %v1601 = vpop.f32.mrb[0].mxu0
        %v1602 = vadd.f32 0.0, %v1601
        %1603 = vdwg.mxu0
        %1604 = vmatprep.subr.bf16.mxu0 %v1418
        %1605 = vmatpush1.bf16.msra.mxu0 %v1417
        %1606 = vmatprep.subr.bf16.mxu0 0
        %1607 = vmatpush1.bf16.msra.mxu0 0
        %1608 = vmatprep.subr.bf16.mxu0 0
        %1609 = vmatpush1.bf16.msra.mxu0 0
        %1610 = vmatprep.subr.bf16.mxu0 0
        %1611 = vmatpush1.bf16.msra.mxu0 0
        %1612 = vmatprep.subr.bf16.mxu0 0
        %1613 = vmatpush1.bf16.msra.mxu0 0
        %1614 = vmatprep.subr.bf16.mxu0 0
        %1615 = vmatpush1.bf16.msra.mxu0 0
        %1616 = vmatprep.subr.bf16.mxu0 0
        %1617 = vmatpush1.bf16.msra.mxu0 0
        %1618 = vmatprep.subr.bf16.mxu0 0
        %1619 = vmatpush1.bf16.msra.mxu0 0
        %1620 = vmatprep.subr.bf16.mxu0 0
        %1621 = vmatpush1.bf16.msra.mxu0 0
        %1622 = vmatprep.subr.bf16.mxu0 0
        %1623 = vmatpush1.bf16.msra.mxu0 0
        %1624 = vmatprep.subr.bf16.mxu0 0
        %1625 = vmatpush1.bf16.msra.mxu0 0
        %1626 = vmatprep.subr.bf16.mxu0 0
        %1627 = vmatpush1.bf16.msra.mxu0 0
        %1628 = vmatprep.subr.bf16.mxu0 0
        %1629 = vmatpush1.bf16.msra.mxu0 0
        %1630 = vmatprep.subr.bf16.mxu0 0
        %1631 = vmatpush1.bf16.msra.mxu0 0
        %1632 = vmatprep.subr.bf16.mxu0 0
        %1633 = vmatpush1.bf16.msra.mxu0 0
        %1634 = vmatprep.subr.bf16.mxu0 0
        %1635 = vmatpush1.bf16.msra.mxu0 0
        %1636 = vmatprep.mubr.bf16.mxu0 0
        %1637 = vmatmul.mubr.bf16.gmra.mrb[0].mxu0 %v1430
        %v1638 = vpop.f32.mrb[0].mxu0
        %v1639 = vadd.f32 0.0, %v1638
        %v1640 = vpop.f32.mrb[0].mxu0
        %v1641 = vadd.f32 0.0, %v1640
        %v1642 = vpop.f32.mrb[0].mxu0
        %v1643 = vadd.f32 0.0, %v1642
        %v1644 = vpop.f32.mrb[0].mxu0
        %v1645 = vadd.f32 0.0, %v1644
        %1646 = vdwg.mxu0
        %v1647 = vadd.f32 %v1187, %v1467
        %v1648 = vadd.f32 %v1189, %v1469
        %v1649 = vadd.f32 %v1230, %v1510
        %v1650 = vadd.f32 %v1232, %v1512
        %v1651 = vadd.f32 %v1273, %v1553
        %v1652 = vadd.f32 %v1275, %v1555
        %v1653 = vadd.f32 %v1316, %v1596
        %v1654 = vadd.f32 %v1318, %v1598
        %v1655 = vadd.f32 %v1359, %v1639
        %v1656 = vadd.f32 %v1361, %v1641
        %v1657 = vadd.f32 %v1191, %v1471
        %v1658 = vadd.f32 %v1193, %v1473
        %v1659 = vadd.f32 %v1234, %v1514
        %v1660 = vadd.f32 %v1236, %v1516
        %v1661 = vadd.f32 %v1277, %v1557
        %v1662 = vadd.f32 %v1279, %v1559
        %v1663 = vadd.f32 %v1320, %v1600
        %v1664 = vadd.f32 %v1322, %v1602
        %v1665 = vadd.f32 %v1363, %v1643
        %v1666 = vadd.f32 %v1365, %v1645
        %s1667 = scalar_lea.vmem %s0, 24
        %v1668 = vld [vmem:[%s1667] sm:$0xf]
        %v1669 = vld [vmem:[%s1667 + $0x4] sm:$0xf]
        %v1672 = vunpack.c.l.b16 %v1668
        %v1673 = vunpack.c.l.b16 %v1669
        %v1674 = vpack.c.b16 %v1673, %v1672
        %1686 = vrot.lane.b32.xlu0 %v904, 127
        %v1687 = vpop.permute.xlu0 %1686
        %1688 = vrot.lane.b32.xlu0 %v905, 127
        %v1689 = vpop.permute.xlu0 %1688
        %1690 = vrot.lane.b32.xlu0 %v906, 127
        %v1691 = vpop.permute.xlu0 %1690
        %1692 = vrot.lane.b32.xlu0 %v907, 127
        %v1693 = vpop.permute.xlu0 %1692
        %1694 = vrot.lane.b32.xlu0 %v908, 127
        %v1695 = vpop.permute.xlu0 %1694
        %1696 = vrot.lane.b32.xlu0 %v909, 127
        %v1697 = vpop.permute.xlu0 %1696
        %1698 = vrot.lane.b32.xlu0 %v910, 127
        %v1699 = vpop.permute.xlu0 %1698
        %1700 = vrot.lane.b32.xlu0 %v911, 127
        %v1701 = vpop.permute.xlu0 %1700
        %1702 = vrot.lane.b32.xlu0 %v912, 127
        %v1703 = vpop.permute.xlu0 %1702
        %1704 = vrot.lane.b32.xlu0 %v913, 127
        %v1705 = vpop.permute.xlu0 %1704
        %1706 = vrot.lane.b32.xlu0 %v914, 127
        %v1707 = vpop.permute.xlu0 %1706
        %v1708 = vsel %vm1408, %v1687, %v1689
        %v1709 = vsel %vm1408, %v1689, %v1691
        %v1710 = vsel %vm1408, %v1691, %v1693
        %v1711 = vsel %vm1408, %v1693, %v1695
        %v1712 = vsel %vm1408, %v1695, %v1697
        %v1713 = vsel %vm1408, %v1697, %v1699
        %v1714 = vsel %vm1408, %v1699, %v1701
        %v1715 = vsel %vm1408, %v1701, %v1703
        %v1716 = vsel %vm1408, %v1703, %v1705
        %v1717 = vsel %vm1408, %v1705, %v1707
        %v1729 = vsel %vm925, %v1674, 0
        %1731 = vmatprep.subr.bf16.mxu0 %v1709
        %1732 = vmatpush1.bf16.msra.mxu0 %v1708
        %1733 = vmatprep.subr.bf16.mxu0 0
        %1734 = vmatpush1.bf16.msra.mxu0 0
        %1735 = vmatprep.subr.bf16.mxu0 0
        %1736 = vmatpush1.bf16.msra.mxu0 0
        %1737 = vmatprep.subr.bf16.mxu0 0
        %1738 = vmatpush1.bf16.msra.mxu0 0
        %1739 = vmatprep.subr.bf16.mxu0 0
        %1740 = vmatpush1.bf16.msra.mxu0 0
        %1741 = vmatprep.subr.bf16.mxu0 0
        %1742 = vmatpush1.bf16.msra.mxu0 0
        %1743 = vmatprep.subr.bf16.mxu0 0
        %1744 = vmatpush1.bf16.msra.mxu0 0
        %1745 = vmatprep.subr.bf16.mxu0 0
        %1746 = vmatpush1.bf16.msra.mxu0 0
        %1747 = vmatprep.subr.bf16.mxu0 0
        %1748 = vmatpush1.bf16.msra.mxu0 0
        %1749 = vmatprep.subr.bf16.mxu0 0
        %1750 = vmatpush1.bf16.msra.mxu0 0
        %1751 = vmatprep.subr.bf16.mxu0 0
        %1752 = vmatpush1.bf16.msra.mxu0 0
        %1753 = vmatprep.subr.bf16.mxu0 0
        %1754 = vmatpush1.bf16.msra.mxu0 0
        %1755 = vmatprep.subr.bf16.mxu0 0
        %1756 = vmatpush1.bf16.msra.mxu0 0
        %1757 = vmatprep.subr.bf16.mxu0 0
        %1758 = vmatpush1.bf16.msra.mxu0 0
        %1759 = vmatprep.subr.bf16.mxu0 0
        %1760 = vmatpush1.bf16.msra.mxu0 0
        %1761 = vmatprep.subr.bf16.mxu0 0
        %1762 = vmatpush1.bf16.msra.mxu0 0
        %1763 = vmatprep.mubr.bf16.mxu0 0
        %1764 = vmatmul.mubr.bf16.gmra.mrb[0].mxu0 %v1729
        %v1765 = vpop.f32.mrb[0].mxu0
        %v1766 = vadd.f32 0.0, %v1765
        %v1767 = vpop.f32.mrb[0].mxu0
        %v1768 = vadd.f32 0.0, %v1767
        %v1769 = vpop.f32.mrb[0].mxu0
        %v1770 = vadd.f32 0.0, %v1769
        %v1771 = vpop.f32.mrb[0].mxu0
        %v1772 = vadd.f32 0.0, %v1771
        %1773 = vdwg.mxu0
        %1774 = vmatprep.subr.bf16.mxu0 %v1711
        %1775 = vmatpush1.bf16.msra.mxu0 %v1710
        %1776 = vmatprep.subr.bf16.mxu0 0
        %1777 = vmatpush1.bf16.msra.mxu0 0
        %1778 = vmatprep.subr.bf16.mxu0 0
        %1779 = vmatpush1.bf16.msra.mxu0 0
        %1780 = vmatprep.subr.bf16.mxu0 0
        %1781 = vmatpush1.bf16.msra.mxu0 0
        %1782 = vmatprep.subr.bf16.mxu0 0
        %1783 = vmatpush1.bf16.msra.mxu0 0
        %1784 = vmatprep.subr.bf16.mxu0 0
        %1785 = vmatpush1.bf16.msra.mxu0 0
        %1786 = vmatprep.subr.bf16.mxu0 0
        %1787 = vmatpush1.bf16.msra.mxu0 0
        %1788 = vmatprep.subr.bf16.mxu0 0
        %1789 = vmatpush1.bf16.msra.mxu0 0
        %1790 = vmatprep.subr.bf16.mxu0 0
        %1791 = vmatpush1.bf16.msra.mxu0 0
        %1792 = vmatprep.subr.bf16.mxu0 0
        %1793 = vmatpush1.bf16.msra.mxu0 0
        %1794 = vmatprep.subr.bf16.mxu0 0
        %1795 = vmatpush1.bf16.msra.mxu0 0
        %1796 = vmatprep.subr.bf16.mxu0 0
        %1797 = vmatpush1.bf16.msra.mxu0 0
        %1798 = vmatprep.subr.bf16.mxu0 0
        %1799 = vmatpush1.bf16.msra.mxu0 0
        %1800 = vmatprep.subr.bf16.mxu0 0
        %1801 = vmatpush1.bf16.msra.mxu0 0
        %1802 = vmatprep.subr.bf16.mxu0 0
        %1803 = vmatpush1.bf16.msra.mxu0 0
        %1804 = vmatprep.subr.bf16.mxu0 0
        %1805 = vmatpush1.bf16.msra.mxu0 0
        %1806 = vmatprep.mubr.bf16.mxu0 0
        %1807 = vmatmul.mubr.bf16.gmra.mrb[0].mxu0 %v1729
        %v1808 = vpop.f32.mrb[0].mxu0
        %v1809 = vadd.f32 0.0, %v1808
        %v1810 = vpop.f32.mrb[0].mxu0
        %v1811 = vadd.f32 0.0, %v1810
        %v1812 = vpop.f32.mrb[0].mxu0
        %v1813 = vadd.f32 0.0, %v1812
        %v1814 = vpop.f32.mrb[0].mxu0
        %v1815 = vadd.f32 0.0, %v1814
        %1816 = vdwg.mxu0
        %1817 = vmatprep.subr.bf16.mxu0 %v1713
        %1818 = vmatpush1.bf16.msra.mxu0 %v1712
        %1819 = vmatprep.subr.bf16.mxu0 0
        %1820 = vmatpush1.bf16.msra.mxu0 0
        %1821 = vmatprep.subr.bf16.mxu0 0
        %1822 = vmatpush1.bf16.msra.mxu0 0
        %1823 = vmatprep.subr.bf16.mxu0 0
        %1824 = vmatpush1.bf16.msra.mxu0 0
        %1825 = vmatprep.subr.bf16.mxu0 0
        %1826 = vmatpush1.bf16.msra.mxu0 0
        %1827 = vmatprep.subr.bf16.mxu0 0
        %1828 = vmatpush1.bf16.msra.mxu0 0
        %1829 = vmatprep.subr.bf16.mxu0 0
        %1830 = vmatpush1.bf16.msra.mxu0 0
        %1831 = vmatprep.subr.bf16.mxu0 0
        %1832 = vmatpush1.bf16.msra.mxu0 0
        %1833 = vmatprep.subr.bf16.mxu0 0
        %1834 = vmatpush1.bf16.msra.mxu0 0
        %1835 = vmatprep.subr.bf16.mxu0 0
        %1836 = vmatpush1.bf16.msra.mxu0 0
        %1837 = vmatprep.subr.bf16.mxu0 0
        %1838 = vmatpush1.bf16.msra.mxu0 0
        %1839 = vmatprep.subr.bf16.mxu0 0
        %1840 = vmatpush1.bf16.msra.mxu0 0
        %1841 = vmatprep.subr.bf16.mxu0 0
        %1842 = vmatpush1.bf16.msra.mxu0 0
        %1843 = vmatprep.subr.bf16.mxu0 0
        %1844 = vmatpush1.bf16.msra.mxu0 0
        %1845 = vmatprep.subr.bf16.mxu0 0
        %1846 = vmatpush1.bf16.msra.mxu0 0
        %1847 = vmatprep.subr.bf16.mxu0 0
        %1848 = vmatpush1.bf16.msra.mxu0 0
        %1849 = vmatprep.mubr.bf16.mxu0 0
        %1850 = vmatmul.mubr.bf16.gmra.mrb[0].mxu0 %v1729
        %v1851 = vpop.f32.mrb[0].mxu0
        %v1852 = vadd.f32 0.0, %v1851
        %v1853 = vpop.f32.mrb[0].mxu0
        %v1854 = vadd.f32 0.0, %v1853
        %v1855 = vpop.f32.mrb[0].mxu0
        %v1856 = vadd.f32 0.0, %v1855
        %v1857 = vpop.f32.mrb[0].mxu0
        %v1858 = vadd.f32 0.0, %v1857
        %1859 = vdwg.mxu0
        %1860 = vmatprep.subr.bf16.mxu0 %v1715
        %1861 = vmatpush1.bf16.msra.mxu0 %v1714
        %1862 = vmatprep.subr.bf16.mxu0 0
        %1863 = vmatpush1.bf16.msra.mxu0 0
        %1864 = vmatprep.subr.bf16.mxu0 0
        %1865 = vmatpush1.bf16.msra.mxu0 0
        %1866 = vmatprep.subr.bf16.mxu0 0
        %1867 = vmatpush1.bf16.msra.mxu0 0
        %1868 = vmatprep.subr.bf16.mxu0 0
        %1869 = vmatpush1.bf16.msra.mxu0 0
        %1870 = vmatprep.subr.bf16.mxu0 0
        %1871 = vmatpush1.bf16.msra.mxu0 0
        %1872 = vmatprep.subr.bf16.mxu0 0
        %1873 = vmatpush1.bf16.msra.mxu0 0
        %1874 = vmatprep.subr.bf16.mxu0 0
        %1875 = vmatpush1.bf16.msra.mxu0 0
        %1876 = vmatprep.subr.bf16.mxu0 0
        %1877 = vmatpush1.bf16.msra.mxu0 0
        %1878 = vmatprep.subr.bf16.mxu0 0
        %1879 = vmatpush1.bf16.msra.mxu0 0
        %1880 = vmatprep.subr.bf16.mxu0 0
        %1881 = vmatpush1.bf16.msra.mxu0 0
        %1882 = vmatprep.subr.bf16.mxu0 0
        %1883 = vmatpush1.bf16.msra.mxu0 0
        %1884 = vmatprep.subr.bf16.mxu0 0
        %1885 = vmatpush1.bf16.msra.mxu0 0
        %1886 = vmatprep.subr.bf16.mxu0 0
        %1887 = vmatpush1.bf16.msra.mxu0 0
        %1888 = vmatprep.subr.bf16.mxu0 0
        %1889 = vmatpush1.bf16.msra.mxu0 0
        %1890 = vmatprep.subr.bf16.mxu0 0
        %1891 = vmatpush1.bf16.msra.mxu0 0
        %1892 = vmatprep.mubr.bf16.mxu0 0
        %1893 = vmatmul.mubr.bf16.gmra.mrb[0].mxu0 %v1729
        %v1894 = vpop.f32.mrb[0].mxu0
        %v1895 = vadd.f32 0.0, %v1894
        %v1896 = vpop.f32.mrb[0].mxu0
        %v1897 = vadd.f32 0.0, %v1896
        %v1898 = vpop.f32.mrb[0].mxu0
        %v1899 = vadd.f32 0.0, %v1898
        %v1900 = vpop.f32.mrb[0].mxu0
        %v1901 = vadd.f32 0.0, %v1900
        %1902 = vdwg.mxu0
        %1903 = vmatprep.subr.bf16.mxu0 %v1717
        %1904 = vmatpush1.bf16.msra.mxu0 %v1716
        %1905 = vmatprep.subr.bf16.mxu0 0
        %1906 = vmatpush1.bf16.msra.mxu0 0
        %1907 = vmatprep.subr.bf16.mxu0 0
        %1908 = vmatpush1.bf16.msra.mxu0 0
        %1909 = vmatprep.subr.bf16.mxu0 0
        %1910 = vmatpush1.bf16.msra.mxu0 0
        %1911 = vmatprep.subr.bf16.mxu0 0
        %1912 = vmatpush1.bf16.msra.mxu0 0
        %1913 = vmatprep.subr.bf16.mxu0 0
        %1914 = vmatpush1.bf16.msra.mxu0 0
        %1915 = vmatprep.subr.bf16.mxu0 0
        %1916 = vmatpush1.bf16.msra.mxu0 0
        %1917 = vmatprep.subr.bf16.mxu0 0
        %1918 = vmatpush1.bf16.msra.mxu0 0
        %1919 = vmatprep.subr.bf16.mxu0 0
        %1920 = vmatpush1.bf16.msra.mxu0 0
        %1921 = vmatprep.subr.bf16.mxu0 0
        %1922 = vmatpush1.bf16.msra.mxu0 0
        %1923 = vmatprep.subr.bf16.mxu0 0
        %1924 = vmatpush1.bf16.msra.mxu0 0
        %1925 = vmatprep.subr.bf16.mxu0 0
        %1926 = vmatpush1.bf16.msra.mxu0 0
        %1927 = vmatprep.subr.bf16.mxu0 0
        %1928 = vmatpush1.bf16.msra.mxu0 0
        %1929 = vmatprep.subr.bf16.mxu0 0
        %1930 = vmatpush1.bf16.msra.mxu0 0
        %1931 = vmatprep.subr.bf16.mxu0 0
        %1932 = vmatpush1.bf16.msra.mxu0 0
        %1933 = vmatprep.subr.bf16.mxu0 0
        %1934 = vmatpush1.bf16.msra.mxu0 0
        %1935 = vmatprep.mubr.bf16.mxu0 0
        %1936 = vmatmul.mubr.bf16.gmra.mrb[0].mxu0 %v1729
        %v1937 = vpop.f32.mrb[0].mxu0
        %v1938 = vadd.f32 0.0, %v1937
        %v1939 = vpop.f32.mrb[0].mxu0
        %v1940 = vadd.f32 0.0, %v1939
        %v1941 = vpop.f32.mrb[0].mxu0
        %v1942 = vadd.f32 0.0, %v1941
        %v1943 = vpop.f32.mrb[0].mxu0
        %v1944 = vadd.f32 0.0, %v1943
        %1945 = vdwg.mxu0
        %v1946 = vadd.f32 %v1647, %v1766
        %v1947 = vadd.f32 %v1648, %v1768
        %v1948 = vadd.f32 %v1649, %v1809
        %v1949 = vadd.f32 %v1650, %v1811
        %v1950 = vadd.f32 %v1651, %v1852
        %v1951 = vadd.f32 %v1652, %v1854
        %v1952 = vadd.f32 %v1653, %v1895
        %v1953 = vadd.f32 %v1654, %v1897
        %v1954 = vadd.f32 %v1655, %v1938
        %v1955 = vadd.f32 %v1656, %v1940
        %v1956 = vadd.f32 %v1657, %v1770
        %v1957 = vadd.f32 %v1658, %v1772
        %v1958 = vadd.f32 %v1659, %v1813
        %v1959 = vadd.f32 %v1660, %v1815
        %v1960 = vadd.f32 %v1661, %v1856
        %v1961 = vadd.f32 %v1662, %v1858
        %v1962 = vadd.f32 %v1663, %v1899
        %v1963 = vadd.f32 %v1664, %v1901
        %v1964 = vadd.f32 %v1665, %v1942
        %v1965 = vadd.f32 %v1666, %v1944
        %s1966 = scalar_lea.vmem %s0, 32
        %v1967 = vld [vmem:[%s1966] sm:$0xf]
        %v1968 = vld [vmem:[%s1966 + $0x4] sm:$0xf]
        %v1971 = vunpack.c.l.b16 %v1967
        %v1972 = vunpack.c.l.b16 %v1968
        %v1973 = vpack.c.b16 %v1972, %v1971
        %1974 = vrot.lane.b32.xlu0 %v893, 126
        %v1975 = vpop.permute.xlu0 %1974
        %1976 = vrot.lane.b32.xlu0 %v894, 126
        %v1977 = vpop.permute.xlu0 %1976
        %1978 = vrot.lane.b32.xlu0 %v895, 126
        %v1979 = vpop.permute.xlu0 %1978
        %1980 = vrot.lane.b32.xlu0 %v896, 126
        %v1981 = vpop.permute.xlu0 %1980
        %1982 = vrot.lane.b32.xlu0 %v897, 126
        %v1983 = vpop.permute.xlu0 %1982
        %1984 = vrot.lane.b32.xlu0 %v898, 126
        %v1985 = vpop.permute.xlu0 %1984
        %1986 = vrot.lane.b32.xlu0 %v899, 126
        %v1987 = vpop.permute.xlu0 %1986
        %1988 = vrot.lane.b32.xlu0 %v900, 126
        %v1989 = vpop.permute.xlu0 %1988
        %1990 = vrot.lane.b32.xlu0 %v901, 126
        %v1991 = vpop.permute.xlu0 %1990
        %1992 = vrot.lane.b32.xlu0 %v902, 126
        %v1993 = vpop.permute.xlu0 %1992
        %1994 = vrot.lane.b32.xlu0 %v903, 126
        %v1995 = vpop.permute.xlu0 %1994
        %vm1996 = vcmask 1031168
        %v1997 = vsel %vm1996, %v1975, %v1977
        %v1998 = vsel %vm1996, %v1977, %v1979
        %v1999 = vsel %vm1996, %v1979, %v1981
        %v2000 = vsel %vm1996, %v1981, %v1983
        %v2001 = vsel %vm1996, %v1983, %v1985
        %v2002 = vsel %vm1996, %v1985, %v1987
        %v2003 = vsel %vm1996, %v1987, %v1989
        %v2004 = vsel %vm1996, %v1989, %v1991
        %v2005 = vsel %vm1996, %v1991, %v1993
        %v2006 = vsel %vm1996, %v1993, %v1995
        %v2018 = vsel %vm925, %v1973, 0
        %2020 = vmatprep.subr.bf16.mxu0 %v1998
        %2021 = vmatpush1.bf16.msra.mxu0 %v1997
        %2022 = vmatprep.subr.bf16.mxu0 0
        %2023 = vmatpush1.bf16.msra.mxu0 0
        %2024 = vmatprep.subr.bf16.mxu0 0
        %2025 = vmatpush1.bf16.msra.mxu0 0
        %2026 = vmatprep.subr.bf16.mxu0 0
        %2027 = vmatpush1.bf16.msra.mxu0 0
        %2028 = vmatprep.subr.bf16.mxu0 0
        %2029 = vmatpush1.bf16.msra.mxu0 0
        %2030 = vmatprep.subr.bf16.mxu0 0
        %2031 = vmatpush1.bf16.msra.mxu0 0
        %2032 = vmatprep.subr.bf16.mxu0 0
        %2033 = vmatpush1.bf16.msra.mxu0 0
        %2034 = vmatprep.subr.bf16.mxu0 0
        %2035 = vmatpush1.bf16.msra.mxu0 0
        %2036 = vmatprep.subr.bf16.mxu0 0
        %2037 = vmatpush1.bf16.msra.mxu0 0
        %2038 = vmatprep.subr.bf16.mxu0 0
        %2039 = vmatpush1.bf16.msra.mxu0 0
        %2040 = vmatprep.subr.bf16.mxu0 0
        %2041 = vmatpush1.bf16.msra.mxu0 0
        %2042 = vmatprep.subr.bf16.mxu0 0
        %2043 = vmatpush1.bf16.msra.mxu0 0
        %2044 = vmatprep.subr.bf16.mxu0 0
        %2045 = vmatpush1.bf16.msra.mxu0 0
        %2046 = vmatprep.subr.bf16.mxu0 0
        %2047 = vmatpush1.bf16.msra.mxu0 0
        %2048 = vmatprep.subr.bf16.mxu0 0
        %2049 = vmatpush1.bf16.msra.mxu0 0
        %2050 = vmatprep.subr.bf16.mxu0 0
        %2051 = vmatpush1.bf16.msra.mxu0 0
        %2052 = vmatprep.mubr.bf16.mxu0 0
        %2053 = vmatmul.mubr.bf16.gmra.mrb[0].mxu0 %v2018
        %v2054 = vpop.f32.mrb[0].mxu0
        %v2055 = vadd.f32 0.0, %v2054
        %v2056 = vpop.f32.mrb[0].mxu0
        %v2057 = vadd.f32 0.0, %v2056
        %v2058 = vpop.f32.mrb[0].mxu0
        %v2059 = vadd.f32 0.0, %v2058
        %v2060 = vpop.f32.mrb[0].mxu0
        %v2061 = vadd.f32 0.0, %v2060
        %2062 = vdwg.mxu0
        %2063 = vmatprep.subr.bf16.mxu0 %v2000
        %2064 = vmatpush1.bf16.msra.mxu0 %v1999
        %2065 = vmatprep.subr.bf16.mxu0 0
        %2066 = vmatpush1.bf16.msra.mxu0 0
        %2067 = vmatprep.subr.bf16.mxu0 0
        %2068 = vmatpush1.bf16.msra.mxu0 0
        %2069 = vmatprep.subr.bf16.mxu0 0
        %2070 = vmatpush1.bf16.msra.mxu0 0
        %2071 = vmatprep.subr.bf16.mxu0 0
        %2072 = vmatpush1.bf16.msra.mxu0 0
        %2073 = vmatprep.subr.bf16.mxu0 0
        %2074 = vmatpush1.bf16.msra.mxu0 0
        %2075 = vmatprep.subr.bf16.mxu0 0
        %2076 = vmatpush1.bf16.msra.mxu0 0
        %2077 = vmatprep.subr.bf16.mxu0 0
        %2078 = vmatpush1.bf16.msra.mxu0 0
        %2079 = vmatprep.subr.bf16.mxu0 0
        %2080 = vmatpush1.bf16.msra.mxu0 0
        %2081 = vmatprep.subr.bf16.mxu0 0
        %2082 = vmatpush1.bf16.msra.mxu0 0
        %2083 = vmatprep.subr.bf16.mxu0 0
        %2084 = vmatpush1.bf16.msra.mxu0 0
        %2085 = vmatprep.subr.bf16.mxu0 0
        %2086 = vmatpush1.bf16.msra.mxu0 0
        %2087 = vmatprep.subr.bf16.mxu0 0
        %2088 = vmatpush1.bf16.msra.mxu0 0
        %2089 = vmatprep.subr.bf16.mxu0 0
        %2090 = vmatpush1.bf16.msra.mxu0 0
        %2091 = vmatprep.subr.bf16.mxu0 0
        %2092 = vmatpush1.bf16.msra.mxu0 0
        %2093 = vmatprep.subr.bf16.mxu0 0
        %2094 = vmatpush1.bf16.msra.mxu0 0
        %2095 = vmatprep.mubr.bf16.mxu0 0
        %2096 = vmatmul.mubr.bf16.gmra.mrb[0].mxu0 %v2018
        %v2097 = vpop.f32.mrb[0].mxu0
        %v2098 = vadd.f32 0.0, %v2097
        %v2099 = vpop.f32.mrb[0].mxu0
        %v2100 = vadd.f32 0.0, %v2099
        %v2101 = vpop.f32.mrb[0].mxu0
        %v2102 = vadd.f32 0.0, %v2101
        %v2103 = vpop.f32.mrb[0].mxu0
        %v2104 = vadd.f32 0.0, %v2103
        %2105 = vdwg.mxu0
        %2106 = vmatprep.subr.bf16.mxu0 %v2002
        %2107 = vmatpush1.bf16.msra.mxu0 %v2001
        %2108 = vmatprep.subr.bf16.mxu0 0
        %2109 = vmatpush1.bf16.msra.mxu0 0
        %2110 = vmatprep.subr.bf16.mxu0 0
        %2111 = vmatpush1.bf16.msra.mxu0 0
        %2112 = vmatprep.subr.bf16.mxu0 0
        %2113 = vmatpush1.bf16.msra.mxu0 0
        %2114 = vmatprep.subr.bf16.mxu0 0
        %2115 = vmatpush1.bf16.msra.mxu0 0
        %2116 = vmatprep.subr.bf16.mxu0 0
        %2117 = vmatpush1.bf16.msra.mxu0 0
        %2118 = vmatprep.subr.bf16.mxu0 0
        %2119 = vmatpush1.bf16.msra.mxu0 0
        %2120 = vmatprep.subr.bf16.mxu0 0
        %2121 = vmatpush1.bf16.msra.mxu0 0
        %2122 = vmatprep.subr.bf16.mxu0 0
        %2123 = vmatpush1.bf16.msra.mxu0 0
        %2124 = vmatprep.subr.bf16.mxu0 0
        %2125 = vmatpush1.bf16.msra.mxu0 0
        %2126 = vmatprep.subr.bf16.mxu0 0
        %2127 = vmatpush1.bf16.msra.mxu0 0
        %2128 = vmatprep.subr.bf16.mxu0 0
        %2129 = vmatpush1.bf16.msra.mxu0 0
        %2130 = vmatprep.subr.bf16.mxu0 0
        %2131 = vmatpush1.bf16.msra.mxu0 0
        %2132 = vmatprep.subr.bf16.mxu0 0
        %2133 = vmatpush1.bf16.msra.mxu0 0
        %2134 = vmatprep.subr.bf16.mxu0 0
        %2135 = vmatpush1.bf16.msra.mxu0 0
        %2136 = vmatprep.subr.bf16.mxu0 0
        %2137 = vmatpush1.bf16.msra.mxu0 0
        %2138 = vmatprep.mubr.bf16.mxu0 0
        %2139 = vmatmul.mubr.bf16.gmra.mrb[0].mxu0 %v2018
        %v2140 = vpop.f32.mrb[0].mxu0
        %v2141 = vadd.f32 0.0, %v2140
        %v2142 = vpop.f32.mrb[0].mxu0
        %v2143 = vadd.f32 0.0, %v2142
        %v2144 = vpop.f32.mrb[0].mxu0
        %v2145 = vadd.f32 0.0, %v2144
        %v2146 = vpop.f32.mrb[0].mxu0
        %v2147 = vadd.f32 0.0, %v2146
        %2148 = vdwg.mxu0
        %2149 = vmatprep.subr.bf16.mxu0 %v2004
        %2150 = vmatpush1.bf16.msra.mxu0 %v2003
        %2151 = vmatprep.subr.bf16.mxu0 0
        %2152 = vmatpush1.bf16.msra.mxu0 0
        %2153 = vmatprep.subr.bf16.mxu0 0
        %2154 = vmatpush1.bf16.msra.mxu0 0
        %2155 = vmatprep.subr.bf16.mxu0 0
        %2156 = vmatpush1.bf16.msra.mxu0 0
        %2157 = vmatprep.subr.bf16.mxu0 0
        %2158 = vmatpush1.bf16.msra.mxu0 0
        %2159 = vmatprep.subr.bf16.mxu0 0
        %2160 = vmatpush1.bf16.msra.mxu0 0
        %2161 = vmatprep.subr.bf16.mxu0 0
        %2162 = vmatpush1.bf16.msra.mxu0 0
        %2163 = vmatprep.subr.bf16.mxu0 0
        %2164 = vmatpush1.bf16.msra.mxu0 0
        %2165 = vmatprep.subr.bf16.mxu0 0
        %2166 = vmatpush1.bf16.msra.mxu0 0
        %2167 = vmatprep.subr.bf16.mxu0 0
        %2168 = vmatpush1.bf16.msra.mxu0 0
        %2169 = vmatprep.subr.bf16.mxu0 0
        %2170 = vmatpush1.bf16.msra.mxu0 0
        %2171 = vmatprep.subr.bf16.mxu0 0
        %2172 = vmatpush1.bf16.msra.mxu0 0
        %2173 = vmatprep.subr.bf16.mxu0 0
        %2174 = vmatpush1.bf16.msra.mxu0 0
        %2175 = vmatprep.subr.bf16.mxu0 0
        %2176 = vmatpush1.bf16.msra.mxu0 0
        %2177 = vmatprep.subr.bf16.mxu0 0
        %2178 = vmatpush1.bf16.msra.mxu0 0
        %2179 = vmatprep.subr.bf16.mxu0 0
        %2180 = vmatpush1.bf16.msra.mxu0 0
        %2181 = vmatprep.mubr.bf16.mxu0 0
        %2182 = vmatmul.mubr.bf16.gmra.mrb[0].mxu0 %v2018
        %v2183 = vpop.f32.mrb[0].mxu0
        %v2184 = vadd.f32 0.0, %v2183
        %v2185 = vpop.f32.mrb[0].mxu0
        %v2186 = vadd.f32 0.0, %v2185
        %v2187 = vpop.f32.mrb[0].mxu0
        %v2188 = vadd.f32 0.0, %v2187
        %v2189 = vpop.f32.mrb[0].mxu0
        %v2190 = vadd.f32 0.0, %v2189
        %2191 = vdwg.mxu0
        %2192 = vmatprep.subr.bf16.mxu0 %v2006
        %2193 = vmatpush1.bf16.msra.mxu0 %v2005
        %2194 = vmatprep.subr.bf16.mxu0 0
        %2195 = vmatpush1.bf16.msra.mxu0 0
        %2196 = vmatprep.subr.bf16.mxu0 0
        %2197 = vmatpush1.bf16.msra.mxu0 0
        %2198 = vmatprep.subr.bf16.mxu0 0
        %2199 = vmatpush1.bf16.msra.mxu0 0
        %2200 = vmatprep.subr.bf16.mxu0 0
        %2201 = vmatpush1.bf16.msra.mxu0 0
        %2202 = vmatprep.subr.bf16.mxu0 0
        %2203 = vmatpush1.bf16.msra.mxu0 0
        %2204 = vmatprep.subr.bf16.mxu0 0
        %2205 = vmatpush1.bf16.msra.mxu0 0
        %2206 = vmatprep.subr.bf16.mxu0 0
        %2207 = vmatpush1.bf16.msra.mxu0 0
        %2208 = vmatprep.subr.bf16.mxu0 0
        %2209 = vmatpush1.bf16.msra.mxu0 0
        %2210 = vmatprep.subr.bf16.mxu0 0
        %2211 = vmatpush1.bf16.msra.mxu0 0
        %2212 = vmatprep.subr.bf16.mxu0 0
        %2213 = vmatpush1.bf16.msra.mxu0 0
        %2214 = vmatprep.subr.bf16.mxu0 0
        %2215 = vmatpush1.bf16.msra.mxu0 0
        %2216 = vmatprep.subr.bf16.mxu0 0
        %2217 = vmatpush1.bf16.msra.mxu0 0
        %2218 = vmatprep.subr.bf16.mxu0 0
        %2219 = vmatpush1.bf16.msra.mxu0 0
        %2220 = vmatprep.subr.bf16.mxu0 0
        %2221 = vmatpush1.bf16.msra.mxu0 0
        %2222 = vmatprep.subr.bf16.mxu0 0
        %2223 = vmatpush1.bf16.msra.mxu0 0
        %2224 = vmatprep.mubr.bf16.mxu0 0
        %2225 = vmatmul.mubr.bf16.gmra.mrb[0].mxu0 %v2018
        %v2226 = vpop.f32.mrb[0].mxu0
        %v2227 = vadd.f32 0.0, %v2226
        %v2228 = vpop.f32.mrb[0].mxu0
        %v2229 = vadd.f32 0.0, %v2228
        %v2230 = vpop.f32.mrb[0].mxu0
        %v2231 = vadd.f32 0.0, %v2230
        %v2232 = vpop.f32.mrb[0].mxu0
        %v2233 = vadd.f32 0.0, %v2232
        %2234 = vdwg.mxu0
        %v2235 = vadd.f32 %v1946, %v2055
        %v2236 = vadd.f32 %v1947, %v2057
        %v2237 = vadd.f32 %v1948, %v2098
        %v2238 = vadd.f32 %v1949, %v2100
        %v2239 = vadd.f32 %v1950, %v2141
        %v2240 = vadd.f32 %v1951, %v2143
        %v2241 = vadd.f32 %v1952, %v2184
        %v2242 = vadd.f32 %v1953, %v2186
        %v2243 = vadd.f32 %v1954, %v2227
        %v2244 = vadd.f32 %v1955, %v2229
        %v2245 = vadd.f32 %v1956, %v2059
        %v2246 = vadd.f32 %v1957, %v2061
        %v2247 = vadd.f32 %v1958, %v2102
        %v2248 = vadd.f32 %v1959, %v2104
        %v2249 = vadd.f32 %v1960, %v2145
        %v2250 = vadd.f32 %v1961, %v2147
        %v2251 = vadd.f32 %v1962, %v2188
        %v2252 = vadd.f32 %v1963, %v2190
        %v2253 = vadd.f32 %v1964, %v2231
        %v2254 = vadd.f32 %v1965, %v2233
        %s2255 = scalar_lea.vmem %s0, 40
        %v2256 = vld [vmem:[%s2255] sm:$0xf]
        %v2257 = vld [vmem:[%s2255 + $0x4] sm:$0xf]
        %v2260 = vunpack.c.l.b16 %v2256
        %v2261 = vunpack.c.l.b16 %v2257
        %v2262 = vpack.c.b16 %v2261, %v2260
        %2263 = vrot.lane.b32.xlu0 %v904, 126
        %v2264 = vpop.permute.xlu0 %2263
        %2265 = vrot.lane.b32.xlu0 %v905, 126
        %v2266 = vpop.permute.xlu0 %2265
        %2267 = vrot.lane.b32.xlu0 %v906, 126
        %v2268 = vpop.permute.xlu0 %2267
        %2269 = vrot.lane.b32.xlu0 %v907, 126
        %v2270 = vpop.permute.xlu0 %2269
        %2271 = vrot.lane.b32.xlu0 %v908, 126
        %v2272 = vpop.permute.xlu0 %2271
        %2273 = vrot.lane.b32.xlu0 %v909, 126
        %v2274 = vpop.permute.xlu0 %2273
        %2275 = vrot.lane.b32.xlu0 %v910, 126
        %v2276 = vpop.permute.xlu0 %2275
        %2277 = vrot.lane.b32.xlu0 %v911, 126
        %v2278 = vpop.permute.xlu0 %2277
        %2279 = vrot.lane.b32.xlu0 %v912, 126
        %v2280 = vpop.permute.xlu0 %2279
        %2281 = vrot.lane.b32.xlu0 %v913, 126
        %v2282 = vpop.permute.xlu0 %2281
        %2283 = vrot.lane.b32.xlu0 %v914, 126
        %v2284 = vpop.permute.xlu0 %2283
        %v2285 = vsel %vm1996, %v2264, %v2266
        %v2286 = vsel %vm1996, %v2266, %v2268
        %v2287 = vsel %vm1996, %v2268, %v2270
        %v2288 = vsel %vm1996, %v2270, %v2272
        %v2289 = vsel %vm1996, %v2272, %v2274
        %v2290 = vsel %vm1996, %v2274, %v2276
        %v2291 = vsel %vm1996, %v2276, %v2278
        %v2292 = vsel %vm1996, %v2278, %v2280
        %v2293 = vsel %vm1996, %v2280, %v2282
        %v2294 = vsel %vm1996, %v2282, %v2284
        %v2306 = vsel %vm925, %v2262, 0
        %2308 = vmatprep.subr.bf16.mxu0 %v2286
        %2309 = vmatpush1.bf16.msra.mxu0 %v2285
        %2310 = vmatprep.subr.bf16.mxu0 0
        %2311 = vmatpush1.bf16.msra.mxu0 0
        %2312 = vmatprep.subr.bf16.mxu0 0
        %2313 = vmatpush1.bf16.msra.mxu0 0
        %2314 = vmatprep.subr.bf16.mxu0 0
        %2315 = vmatpush1.bf16.msra.mxu0 0
        %2316 = vmatprep.subr.bf16.mxu0 0
        %2317 = vmatpush1.bf16.msra.mxu0 0
        %2318 = vmatprep.subr.bf16.mxu0 0
        %2319 = vmatpush1.bf16.msra.mxu0 0
        %2320 = vmatprep.subr.bf16.mxu0 0
        %2321 = vmatpush1.bf16.msra.mxu0 0
        %2322 = vmatprep.subr.bf16.mxu0 0
        %2323 = vmatpush1.bf16.msra.mxu0 0
        %2324 = vmatprep.subr.bf16.mxu0 0
        %2325 = vmatpush1.bf16.msra.mxu0 0
        %2326 = vmatprep.subr.bf16.mxu0 0
        %2327 = vmatpush1.bf16.msra.mxu0 0
        %2328 = vmatprep.subr.bf16.mxu0 0
        %2329 = vmatpush1.bf16.msra.mxu0 0
        %2330 = vmatprep.subr.bf16.mxu0 0
        %2331 = vmatpush1.bf16.msra.mxu0 0
        %2332 = vmatprep.subr.bf16.mxu0 0
        %2333 = vmatpush1.bf16.msra.mxu0 0
        %2334 = vmatprep.subr.bf16.mxu0 0
        %2335 = vmatpush1.bf16.msra.mxu0 0
        %2336 = vmatprep.subr.bf16.mxu0 0
        %2337 = vmatpush1.bf16.msra.mxu0 0
        %2338 = vmatprep.subr.bf16.mxu0 0
        %2339 = vmatpush1.bf16.msra.mxu0 0
        %2340 = vmatprep.mubr.bf16.mxu0 0
        %2341 = vmatmul.mubr.bf16.gmra.mrb[0].mxu0 %v2306
        %v2342 = vpop.f32.mrb[0].mxu0
        %v2343 = vadd.f32 0.0, %v2342
        %v2344 = vpop.f32.mrb[0].mxu0
        %v2345 = vadd.f32 0.0, %v2344
        %v2346 = vpop.f32.mrb[0].mxu0
        %v2347 = vadd.f32 0.0, %v2346
        %v2348 = vpop.f32.mrb[0].mxu0
        %v2349 = vadd.f32 0.0, %v2348
        %2350 = vdwg.mxu0
        %2351 = vmatprep.subr.bf16.mxu0 %v2288
        %2352 = vmatpush1.bf16.msra.mxu0 %v2287
        %2353 = vmatprep.subr.bf16.mxu0 0
        %2354 = vmatpush1.bf16.msra.mxu0 0
        %2355 = vmatprep.subr.bf16.mxu0 0
        %2356 = vmatpush1.bf16.msra.mxu0 0
        %2357 = vmatprep.subr.bf16.mxu0 0
        %2358 = vmatpush1.bf16.msra.mxu0 0
        %2359 = vmatprep.subr.bf16.mxu0 0
        %2360 = vmatpush1.bf16.msra.mxu0 0
        %2361 = vmatprep.subr.bf16.mxu0 0
        %2362 = vmatpush1.bf16.msra.mxu0 0
        %2363 = vmatprep.subr.bf16.mxu0 0
        %2364 = vmatpush1.bf16.msra.mxu0 0
        %2365 = vmatprep.subr.bf16.mxu0 0
        %2366 = vmatpush1.bf16.msra.mxu0 0
        %2367 = vmatprep.subr.bf16.mxu0 0
        %2368 = vmatpush1.bf16.msra.mxu0 0
        %2369 = vmatprep.subr.bf16.mxu0 0
        %2370 = vmatpush1.bf16.msra.mxu0 0
        %2371 = vmatprep.subr.bf16.mxu0 0
        %2372 = vmatpush1.bf16.msra.mxu0 0
        %2373 = vmatprep.subr.bf16.mxu0 0
        %2374 = vmatpush1.bf16.msra.mxu0 0
        %2375 = vmatprep.subr.bf16.mxu0 0
        %2376 = vmatpush1.bf16.msra.mxu0 0
        %2377 = vmatprep.subr.bf16.mxu0 0
        %2378 = vmatpush1.bf16.msra.mxu0 0
        %2379 = vmatprep.subr.bf16.mxu0 0
        %2380 = vmatpush1.bf16.msra.mxu0 0
        %2381 = vmatprep.subr.bf16.mxu0 0
        %2382 = vmatpush1.bf16.msra.mxu0 0
        %2383 = vmatprep.mubr.bf16.mxu0 0
        %2384 = vmatmul.mubr.bf16.gmra.mrb[0].mxu0 %v2306
        %v2385 = vpop.f32.mrb[0].mxu0
        %v2386 = vadd.f32 0.0, %v2385
        %v2387 = vpop.f32.mrb[0].mxu0
        %v2388 = vadd.f32 0.0, %v2387
        %v2389 = vpop.f32.mrb[0].mxu0
        %v2390 = vadd.f32 0.0, %v2389
        %v2391 = vpop.f32.mrb[0].mxu0
        %v2392 = vadd.f32 0.0, %v2391
        %2393 = vdwg.mxu0
        %2394 = vmatprep.subr.bf16.mxu0 %v2290
        %2395 = vmatpush1.bf16.msra.mxu0 %v2289
        %2396 = vmatprep.subr.bf16.mxu0 0
        %2397 = vmatpush1.bf16.msra.mxu0 0
        %2398 = vmatprep.subr.bf16.mxu0 0
        %2399 = vmatpush1.bf16.msra.mxu0 0
        %2400 = vmatprep.subr.bf16.mxu0 0
        %2401 = vmatpush1.bf16.msra.mxu0 0
        %2402 = vmatprep.subr.bf16.mxu0 0
        %2403 = vmatpush1.bf16.msra.mxu0 0
        %2404 = vmatprep.subr.bf16.mxu0 0
        %2405 = vmatpush1.bf16.msra.mxu0 0
        %2406 = vmatprep.subr.bf16.mxu0 0
        %2407 = vmatpush1.bf16.msra.mxu0 0
        %2408 = vmatprep.subr.bf16.mxu0 0
        %2409 = vmatpush1.bf16.msra.mxu0 0
        %2410 = vmatprep.subr.bf16.mxu0 0
        %2411 = vmatpush1.bf16.msra.mxu0 0
        %2412 = vmatprep.subr.bf16.mxu0 0
        %2413 = vmatpush1.bf16.msra.mxu0 0
        %2414 = vmatprep.subr.bf16.mxu0 0
        %2415 = vmatpush1.bf16.msra.mxu0 0
        %2416 = vmatprep.subr.bf16.mxu0 0
        %2417 = vmatpush1.bf16.msra.mxu0 0
        %2418 = vmatprep.subr.bf16.mxu0 0
        %2419 = vmatpush1.bf16.msra.mxu0 0
        %2420 = vmatprep.subr.bf16.mxu0 0
        %2421 = vmatpush1.bf16.msra.mxu0 0
        %2422 = vmatprep.subr.bf16.mxu0 0
        %2423 = vmatpush1.bf16.msra.mxu0 0
        %2424 = vmatprep.subr.bf16.mxu0 0
        %2425 = vmatpush1.bf16.msra.mxu0 0
        %2426 = vmatprep.mubr.bf16.mxu0 0
        %2427 = vmatmul.mubr.bf16.gmra.mrb[0].mxu0 %v2306
        %v2428 = vpop.f32.mrb[0].mxu0
        %v2429 = vadd.f32 0.0, %v2428
        %v2430 = vpop.f32.mrb[0].mxu0
        %v2431 = vadd.f32 0.0, %v2430
        %v2432 = vpop.f32.mrb[0].mxu0
        %v2433 = vadd.f32 0.0, %v2432
        %v2434 = vpop.f32.mrb[0].mxu0
        %v2435 = vadd.f32 0.0, %v2434
        %2436 = vdwg.mxu0
        %2437 = vmatprep.subr.bf16.mxu0 %v2292
        %2438 = vmatpush1.bf16.msra.mxu0 %v2291
        %2439 = vmatprep.subr.bf16.mxu0 0
        %2440 = vmatpush1.bf16.msra.mxu0 0
        %2441 = vmatprep.subr.bf16.mxu0 0
        %2442 = vmatpush1.bf16.msra.mxu0 0
        %2443 = vmatprep.subr.bf16.mxu0 0
        %2444 = vmatpush1.bf16.msra.mxu0 0
        %2445 = vmatprep.subr.bf16.mxu0 0
        %2446 = vmatpush1.bf16.msra.mxu0 0
        %2447 = vmatprep.subr.bf16.mxu0 0
        %2448 = vmatpush1.bf16.msra.mxu0 0
        %2449 = vmatprep.subr.bf16.mxu0 0
        %2450 = vmatpush1.bf16.msra.mxu0 0
        %2451 = vmatprep.subr.bf16.mxu0 0
        %2452 = vmatpush1.bf16.msra.mxu0 0
        %2453 = vmatprep.subr.bf16.mxu0 0
        %2454 = vmatpush1.bf16.msra.mxu0 0
        %2455 = vmatprep.subr.bf16.mxu0 0
        %2456 = vmatpush1.bf16.msra.mxu0 0
        %2457 = vmatprep.subr.bf16.mxu0 0
        %2458 = vmatpush1.bf16.msra.mxu0 0
        %2459 = vmatprep.subr.bf16.mxu0 0
        %2460 = vmatpush1.bf16.msra.mxu0 0
        %2461 = vmatprep.subr.bf16.mxu0 0
        %2462 = vmatpush1.bf16.msra.mxu0 0
        %2463 = vmatprep.subr.bf16.mxu0 0
        %2464 = vmatpush1.bf16.msra.mxu0 0
        %2465 = vmatprep.subr.bf16.mxu0 0
        %2466 = vmatpush1.bf16.msra.mxu0 0
        %2467 = vmatprep.subr.bf16.mxu0 0
        %2468 = vmatpush1.bf16.msra.mxu0 0
        %2469 = vmatprep.mubr.bf16.mxu0 0
        %2470 = vmatmul.mubr.bf16.gmra.mrb[0].mxu0 %v2306
        %v2471 = vpop.f32.mrb[0].mxu0
        %v2472 = vadd.f32 0.0, %v2471
        %v2473 = vpop.f32.mrb[0].mxu0
        %v2474 = vadd.f32 0.0, %v2473
        %v2475 = vpop.f32.mrb[0].mxu0
        %v2476 = vadd.f32 0.0, %v2475
        %v2477 = vpop.f32.mrb[0].mxu0
        %v2478 = vadd.f32 0.0, %v2477
        %2479 = vdwg.mxu0
        %2480 = vmatprep.subr.bf16.mxu0 %v2294
        %2481 = vmatpush1.bf16.msra.mxu0 %v2293
        %2482 = vmatprep.subr.bf16.mxu0 0
        %2483 = vmatpush1.bf16.msra.mxu0 0
        %2484 = vmatprep.subr.bf16.mxu0 0
        %2485 = vmatpush1.bf16.msra.mxu0 0
        %2486 = vmatprep.subr.bf16.mxu0 0
        %2487 = vmatpush1.bf16.msra.mxu0 0
        %2488 = vmatprep.subr.bf16.mxu0 0
        %2489 = vmatpush1.bf16.msra.mxu0 0
        %2490 = vmatprep.subr.bf16.mxu0 0
        %2491 = vmatpush1.bf16.msra.mxu0 0
        %2492 = vmatprep.subr.bf16.mxu0 0
        %2493 = vmatpush1.bf16.msra.mxu0 0
        %2494 = vmatprep.subr.bf16.mxu0 0
        %2495 = vmatpush1.bf16.msra.mxu0 0
        %2496 = vmatprep.subr.bf16.mxu0 0
        %2497 = vmatpush1.bf16.msra.mxu0 0
        %2498 = vmatprep.subr.bf16.mxu0 0
        %2499 = vmatpush1.bf16.msra.mxu0 0
        %2500 = vmatprep.subr.bf16.mxu0 0
        %2501 = vmatpush1.bf16.msra.mxu0 0
        %2502 = vmatprep.subr.bf16.mxu0 0
        %2503 = vmatpush1.bf16.msra.mxu0 0
        %2504 = vmatprep.subr.bf16.mxu0 0
        %2505 = vmatpush1.bf16.msra.mxu0 0
        %2506 = vmatprep.subr.bf16.mxu0 0
        %2507 = vmatpush1.bf16.msra.mxu0 0
        %2508 = vmatprep.subr.bf16.mxu0 0
        %2509 = vmatpush1.bf16.msra.mxu0 0
        %2510 = vmatprep.subr.bf16.mxu0 0
        %2511 = vmatpush1.bf16.msra.mxu0 0
        %2512 = vmatprep.mubr.bf16.mxu0 0
        %2513 = vmatmul.mubr.bf16.gmra.mrb[0].mxu0 %v2306
        %v2514 = vpop.f32.mrb[0].mxu0
        %v2515 = vadd.f32 0.0, %v2514
        %v2516 = vpop.f32.mrb[0].mxu0
        %v2517 = vadd.f32 0.0, %v2516
        %v2518 = vpop.f32.mrb[0].mxu0
        %v2519 = vadd.f32 0.0, %v2518
        %v2520 = vpop.f32.mrb[0].mxu0
        %v2521 = vadd.f32 0.0, %v2520
        %2522 = vdwg.mxu0
        %v2523 = vadd.f32 %v2235, %v2343
        %v2524 = vadd.f32 %v2236, %v2345
        %v2525 = vadd.f32 %v2237, %v2386
        %v2526 = vadd.f32 %v2238, %v2388
        %v2527 = vadd.f32 %v2239, %v2429
        %v2528 = vadd.f32 %v2240, %v2431
        %v2529 = vadd.f32 %v2241, %v2472
        %v2530 = vadd.f32 %v2242, %v2474
        %v2531 = vadd.f32 %v2243, %v2515
        %v2532 = vadd.f32 %v2244, %v2517
        %v2533 = vadd.f32 %v2245, %v2347
        %v2534 = vadd.f32 %v2246, %v2349
        %v2535 = vadd.f32 %v2247, %v2390
        %v2536 = vadd.f32 %v2248, %v2392
        %v2537 = vadd.f32 %v2249, %v2433
        %v2538 = vadd.f32 %v2250, %v2435
        %v2539 = vadd.f32 %v2251, %v2476
        %v2540 = vadd.f32 %v2252, %v2478
        %v2541 = vadd.f32 %v2253, %v2519
        %v2542 = vadd.f32 %v2254, %v2521
        %s2543 = scalar_lea.vmem %s0, 48
        %v2544 = vld [vmem:[%s2543] sm:$0xf]
        %v2545 = vld [vmem:[%s2543 + $0x4] sm:$0xf]
        %v2548 = vunpack.c.l.b16 %v2544
        %v2549 = vunpack.c.l.b16 %v2545
        %v2550 = vpack.c.b16 %v2549, %v2548
        %2551 = vrot.lane.b32.xlu0 %v893, 125
        %v2552 = vpop.permute.xlu0 %2551
        %2553 = vrot.lane.b32.xlu0 %v894, 125
        %v2554 = vpop.permute.xlu0 %2553
        %2555 = vrot.lane.b32.xlu0 %v895, 125
        %v2556 = vpop.permute.xlu0 %2555
        %2557 = vrot.lane.b32.xlu0 %v896, 125
        %v2558 = vpop.permute.xlu0 %2557
        %2559 = vrot.lane.b32.xlu0 %v897, 125
        %v2560 = vpop.permute.xlu0 %2559
        %2561 = vrot.lane.b32.xlu0 %v898, 125
        %v2562 = vpop.permute.xlu0 %2561
        %2563 = vrot.lane.b32.xlu0 %v899, 125
        %v2564 = vpop.permute.xlu0 %2563
        %2565 = vrot.lane.b32.xlu0 %v900, 125
        %v2566 = vpop.permute.xlu0 %2565
        %2567 = vrot.lane.b32.xlu0 %v901, 125
        %v2568 = vpop.permute.xlu0 %2567
        %2569 = vrot.lane.b32.xlu0 %v902, 125
        %v2570 = vpop.permute.xlu0 %2569
        %2571 = vrot.lane.b32.xlu0 %v903, 125
        %v2572 = vpop.permute.xlu0 %2571
        %vm2573 = vcmask 1022976
        %v2574 = vsel %vm2573, %v2552, %v2554
        %v2575 = vsel %vm2573, %v2554, %v2556
        %v2576 = vsel %vm2573, %v2556, %v2558
        %v2577 = vsel %vm2573, %v2558, %v2560
        %v2578 = vsel %vm2573, %v2560, %v2562
        %v2579 = vsel %vm2573, %v2562, %v2564
        %v2580 = vsel %vm2573, %v2564, %v2566
        %v2581 = vsel %vm2573, %v2566, %v2568
        %v2582 = vsel %vm2573, %v2568, %v2570
        %v2583 = vsel %vm2573, %v2570, %v2572
        %v2595 = vsel %vm925, %v2550, 0
        %2597 = vmatprep.subr.bf16.mxu0 %v2575
        %2598 = vmatpush1.bf16.msra.mxu0 %v2574
        %2599 = vmatprep.subr.bf16.mxu0 0
        %2600 = vmatpush1.bf16.msra.mxu0 0
        %2601 = vmatprep.subr.bf16.mxu0 0
        %2602 = vmatpush1.bf16.msra.mxu0 0
        %2603 = vmatprep.subr.bf16.mxu0 0
        %2604 = vmatpush1.bf16.msra.mxu0 0
        %2605 = vmatprep.subr.bf16.mxu0 0
        %2606 = vmatpush1.bf16.msra.mxu0 0
        %2607 = vmatprep.subr.bf16.mxu0 0
        %2608 = vmatpush1.bf16.msra.mxu0 0
        %2609 = vmatprep.subr.bf16.mxu0 0
        %2610 = vmatpush1.bf16.msra.mxu0 0
        %2611 = vmatprep.subr.bf16.mxu0 0
        %2612 = vmatpush1.bf16.msra.mxu0 0
        %2613 = vmatprep.subr.bf16.mxu0 0
        %2614 = vmatpush1.bf16.msra.mxu0 0
        %2615 = vmatprep.subr.bf16.mxu0 0
        %2616 = vmatpush1.bf16.msra.mxu0 0
        %2617 = vmatprep.subr.bf16.mxu0 0
        %2618 = vmatpush1.bf16.msra.mxu0 0
        %2619 = vmatprep.subr.bf16.mxu0 0
        %2620 = vmatpush1.bf16.msra.mxu0 0
        %2621 = vmatprep.subr.bf16.mxu0 0
        %2622 = vmatpush1.bf16.msra.mxu0 0
        %2623 = vmatprep.subr.bf16.mxu0 0
        %2624 = vmatpush1.bf16.msra.mxu0 0
        %2625 = vmatprep.subr.bf16.mxu0 0
        %2626 = vmatpush1.bf16.msra.mxu0 0
        %2627 = vmatprep.subr.bf16.mxu0 0
        %2628 = vmatpush1.bf16.msra.mxu0 0
        %2629 = vmatprep.mubr.bf16.mxu0 0
        %2630 = vmatmul.mubr.bf16.gmra.mrb[0].mxu0 %v2595
        %v2631 = vpop.f32.mrb[0].mxu0
        %v2632 = vadd.f32 0.0, %v2631
        %v2633 = vpop.f32.mrb[0].mxu0
        %v2634 = vadd.f32 0.0, %v2633
        %v2635 = vpop.f32.mrb[0].mxu0
        %v2636 = vadd.f32 0.0, %v2635
        %v2637 = vpop.f32.mrb[0].mxu0
        %v2638 = vadd.f32 0.0, %v2637
        %2639 = vdwg.mxu0
        %2640 = vmatprep.subr.bf16.mxu0 %v2577
        %2641 = vmatpush1.bf16.msra.mxu0 %v2576
        %2642 = vmatprep.subr.bf16.mxu0 0
        %2643 = vmatpush1.bf16.msra.mxu0 0
        %2644 = vmatprep.subr.bf16.mxu0 0
        %2645 = vmatpush1.bf16.msra.mxu0 0
        %2646 = vmatprep.subr.bf16.mxu0 0
        %2647 = vmatpush1.bf16.msra.mxu0 0
        %2648 = vmatprep.subr.bf16.mxu0 0
        %2649 = vmatpush1.bf16.msra.mxu0 0
        %2650 = vmatprep.subr.bf16.mxu0 0
        %2651 = vmatpush1.bf16.msra.mxu0 0
        %2652 = vmatprep.subr.bf16.mxu0 0
        %2653 = vmatpush1.bf16.msra.mxu0 0
        %2654 = vmatprep.subr.bf16.mxu0 0
        %2655 = vmatpush1.bf16.msra.mxu0 0
        %2656 = vmatprep.subr.bf16.mxu0 0
        %2657 = vmatpush1.bf16.msra.mxu0 0
        %2658 = vmatprep.subr.bf16.mxu0 0
        %2659 = vmatpush1.bf16.msra.mxu0 0
        %2660 = vmatprep.subr.bf16.mxu0 0
        %2661 = vmatpush1.bf16.msra.mxu0 0
        %2662 = vmatprep.subr.bf16.mxu0 0
        %2663 = vmatpush1.bf16.msra.mxu0 0
        %2664 = vmatprep.subr.bf16.mxu0 0
        %2665 = vmatpush1.bf16.msra.mxu0 0
        %2666 = vmatprep.subr.bf16.mxu0 0
        %2667 = vmatpush1.bf16.msra.mxu0 0
        %2668 = vmatprep.subr.bf16.mxu0 0
        %2669 = vmatpush1.bf16.msra.mxu0 0
        %2670 = vmatprep.subr.bf16.mxu0 0
        %2671 = vmatpush1.bf16.msra.mxu0 0
        %2672 = vmatprep.mubr.bf16.mxu0 0
        %2673 = vmatmul.mubr.bf16.gmra.mrb[0].mxu0 %v2595
        %v2674 = vpop.f32.mrb[0].mxu0
        %v2675 = vadd.f32 0.0, %v2674
        %v2676 = vpop.f32.mrb[0].mxu0
        %v2677 = vadd.f32 0.0, %v2676
        %v2678 = vpop.f32.mrb[0].mxu0
        %v2679 = vadd.f32 0.0, %v2678
        %v2680 = vpop.f32.mrb[0].mxu0
        %v2681 = vadd.f32 0.0, %v2680
        %2682 = vdwg.mxu0
        %2683 = vmatprep.subr.bf16.mxu0 %v2579
        %2684 = vmatpush1.bf16.msra.mxu0 %v2578
        %2685 = vmatprep.subr.bf16.mxu0 0
        %2686 = vmatpush1.bf16.msra.mxu0 0
        %2687 = vmatprep.subr.bf16.mxu0 0
        %2688 = vmatpush1.bf16.msra.mxu0 0
        %2689 = vmatprep.subr.bf16.mxu0 0
        %2690 = vmatpush1.bf16.msra.mxu0 0
        %2691 = vmatprep.subr.bf16.mxu0 0
        %2692 = vmatpush1.bf16.msra.mxu0 0
        %2693 = vmatprep.subr.bf16.mxu0 0
        %2694 = vmatpush1.bf16.msra.mxu0 0
        %2695 = vmatprep.subr.bf16.mxu0 0
        %2696 = vmatpush1.bf16.msra.mxu0 0
        %2697 = vmatprep.subr.bf16.mxu0 0
        %2698 = vmatpush1.bf16.msra.mxu0 0
        %2699 = vmatprep.subr.bf16.mxu0 0
        %2700 = vmatpush1.bf16.msra.mxu0 0
        %2701 = vmatprep.subr.bf16.mxu0 0
        %2702 = vmatpush1.bf16.msra.mxu0 0
        %2703 = vmatprep.subr.bf16.mxu0 0
        %2704 = vmatpush1.bf16.msra.mxu0 0
        %2705 = vmatprep.subr.bf16.mxu0 0
        %2706 = vmatpush1.bf16.msra.mxu0 0
        %2707 = vmatprep.subr.bf16.mxu0 0
        %2708 = vmatpush1.bf16.msra.mxu0 0
        %2709 = vmatprep.subr.bf16.mxu0 0
        %2710 = vmatpush1.bf16.msra.mxu0 0
        %2711 = vmatprep.subr.bf16.mxu0 0
        %2712 = vmatpush1.bf16.msra.mxu0 0
        %2713 = vmatprep.subr.bf16.mxu0 0
        %2714 = vmatpush1.bf16.msra.mxu0 0
        %2715 = vmatprep.mubr.bf16.mxu0 0
        %2716 = vmatmul.mubr.bf16.gmra.mrb[0].mxu0 %v2595
        %v2717 = vpop.f32.mrb[0].mxu0
        %v2718 = vadd.f32 0.0, %v2717
        %v2719 = vpop.f32.mrb[0].mxu0
        %v2720 = vadd.f32 0.0, %v2719
        %v2721 = vpop.f32.mrb[0].mxu0
        %v2722 = vadd.f32 0.0, %v2721
        %v2723 = vpop.f32.mrb[0].mxu0
        %v2724 = vadd.f32 0.0, %v2723
        %2725 = vdwg.mxu0
        %2726 = vmatprep.subr.bf16.mxu0 %v2581
        %2727 = vmatpush1.bf16.msra.mxu0 %v2580
        %2728 = vmatprep.subr.bf16.mxu0 0
        %2729 = vmatpush1.bf16.msra.mxu0 0
        %2730 = vmatprep.subr.bf16.mxu0 0
        %2731 = vmatpush1.bf16.msra.mxu0 0
        %2732 = vmatprep.subr.bf16.mxu0 0
        %2733 = vmatpush1.bf16.msra.mxu0 0
        %2734 = vmatprep.subr.bf16.mxu0 0
        %2735 = vmatpush1.bf16.msra.mxu0 0
        %2736 = vmatprep.subr.bf16.mxu0 0
        %2737 = vmatpush1.bf16.msra.mxu0 0
        %2738 = vmatprep.subr.bf16.mxu0 0
        %2739 = vmatpush1.bf16.msra.mxu0 0
        %2740 = vmatprep.subr.bf16.mxu0 0
        %2741 = vmatpush1.bf16.msra.mxu0 0
        %2742 = vmatprep.subr.bf16.mxu0 0
        %2743 = vmatpush1.bf16.msra.mxu0 0
        %2744 = vmatprep.subr.bf16.mxu0 0
        %2745 = vmatpush1.bf16.msra.mxu0 0
        %2746 = vmatprep.subr.bf16.mxu0 0
        %2747 = vmatpush1.bf16.msra.mxu0 0
        %2748 = vmatprep.subr.bf16.mxu0 0
        %2749 = vmatpush1.bf16.msra.mxu0 0
        %2750 = vmatprep.subr.bf16.mxu0 0
        %2751 = vmatpush1.bf16.msra.mxu0 0
        %2752 = vmatprep.subr.bf16.mxu0 0
        %2753 = vmatpush1.bf16.msra.mxu0 0
        %2754 = vmatprep.subr.bf16.mxu0 0
        %2755 = vmatpush1.bf16.msra.mxu0 0
        %2756 = vmatprep.subr.bf16.mxu0 0
        %2757 = vmatpush1.bf16.msra.mxu0 0
        %2758 = vmatprep.mubr.bf16.mxu0 0
        %2759 = vmatmul.mubr.bf16.gmra.mrb[0].mxu0 %v2595
        %v2760 = vpop.f32.mrb[0].mxu0
        %v2761 = vadd.f32 0.0, %v2760
        %v2762 = vpop.f32.mrb[0].mxu0
        %v2763 = vadd.f32 0.0, %v2762
        %v2764 = vpop.f32.mrb[0].mxu0
        %v2765 = vadd.f32 0.0, %v2764
        %v2766 = vpop.f32.mrb[0].mxu0
        %v2767 = vadd.f32 0.0, %v2766
        %2768 = vdwg.mxu0
        %2769 = vmatprep.subr.bf16.mxu0 %v2583
        %2770 = vmatpush1.bf16.msra.mxu0 %v2582
        %2771 = vmatprep.subr.bf16.mxu0 0
        %2772 = vmatpush1.bf16.msra.mxu0 0
        %2773 = vmatprep.subr.bf16.mxu0 0
        %2774 = vmatpush1.bf16.msra.mxu0 0
        %2775 = vmatprep.subr.bf16.mxu0 0
        %2776 = vmatpush1.bf16.msra.mxu0 0
        %2777 = vmatprep.subr.bf16.mxu0 0
        %2778 = vmatpush1.bf16.msra.mxu0 0
        %2779 = vmatprep.subr.bf16.mxu0 0
        %2780 = vmatpush1.bf16.msra.mxu0 0
        %2781 = vmatprep.subr.bf16.mxu0 0
        %2782 = vmatpush1.bf16.msra.mxu0 0
        %2783 = vmatprep.subr.bf16.mxu0 0
        %2784 = vmatpush1.bf16.msra.mxu0 0
        %2785 = vmatprep.subr.bf16.mxu0 0
        %2786 = vmatpush1.bf16.msra.mxu0 0
        %2787 = vmatprep.subr.bf16.mxu0 0
        %2788 = vmatpush1.bf16.msra.mxu0 0
        %2789 = vmatprep.subr.bf16.mxu0 0
        %2790 = vmatpush1.bf16.msra.mxu0 0
        %2791 = vmatprep.subr.bf16.mxu0 0
        %2792 = vmatpush1.bf16.msra.mxu0 0
        %2793 = vmatprep.subr.bf16.mxu0 0
        %2794 = vmatpush1.bf16.msra.mxu0 0
        %2795 = vmatprep.subr.bf16.mxu0 0
        %2796 = vmatpush1.bf16.msra.mxu0 0
        %2797 = vmatprep.subr.bf16.mxu0 0
        %2798 = vmatpush1.bf16.msra.mxu0 0
        %2799 = vmatprep.subr.bf16.mxu0 0
        %2800 = vmatpush1.bf16.msra.mxu0 0
        %2801 = vmatprep.mubr.bf16.mxu0 0
        %2802 = vmatmul.mubr.bf16.gmra.mrb[0].mxu0 %v2595
        %v2803 = vpop.f32.mrb[0].mxu0
        %v2804 = vadd.f32 0.0, %v2803
        %v2805 = vpop.f32.mrb[0].mxu0
        %v2806 = vadd.f32 0.0, %v2805
        %v2807 = vpop.f32.mrb[0].mxu0
        %v2808 = vadd.f32 0.0, %v2807
        %v2809 = vpop.f32.mrb[0].mxu0
        %v2810 = vadd.f32 0.0, %v2809
        %2811 = vdwg.mxu0
        %v2812 = vadd.f32 %v2523, %v2632
        %v2813 = vadd.f32 %v2524, %v2634
        %v2814 = vadd.f32 %v2525, %v2675
        %v2815 = vadd.f32 %v2526, %v2677
        %v2816 = vadd.f32 %v2527, %v2718
        %v2817 = vadd.f32 %v2528, %v2720
        %v2818 = vadd.f32 %v2529, %v2761
        %v2819 = vadd.f32 %v2530, %v2763
        %v2820 = vadd.f32 %v2531, %v2804
        %v2821 = vadd.f32 %v2532, %v2806
        %v2822 = vadd.f32 %v2533, %v2636
        %v2823 = vadd.f32 %v2534, %v2638
        %v2824 = vadd.f32 %v2535, %v2679
        %v2825 = vadd.f32 %v2536, %v2681
        %v2826 = vadd.f32 %v2537, %v2722
        %v2827 = vadd.f32 %v2538, %v2724
        %v2828 = vadd.f32 %v2539, %v2765
        %v2829 = vadd.f32 %v2540, %v2767
        %v2830 = vadd.f32 %v2541, %v2808
        %v2831 = vadd.f32 %v2542, %v2810
        %s2832 = scalar_lea.vmem %s0, 56
        %v2833 = vld [vmem:[%s2832] sm:$0xf]
        %v2834 = vld [vmem:[%s2832 + $0x4] sm:$0xf]
        %v2837 = vunpack.c.l.b16 %v2833
        %v2838 = vunpack.c.l.b16 %v2834
        %v2839 = vpack.c.b16 %v2838, %v2837
        %2840 = vrot.lane.b32.xlu0 %v904, 125
        %v2841 = vpop.permute.xlu0 %2840
        %2842 = vrot.lane.b32.xlu0 %v905, 125
        %v2843 = vpop.permute.xlu0 %2842
        %2844 = vrot.lane.b32.xlu0 %v906, 125
        %v2845 = vpop.permute.xlu0 %2844
        %2846 = vrot.lane.b32.xlu0 %v907, 125
        %v2847 = vpop.permute.xlu0 %2846
        %2848 = vrot.lane.b32.xlu0 %v908, 125
        %v2849 = vpop.permute.xlu0 %2848
        %2850 = vrot.lane.b32.xlu0 %v909, 125
        %v2851 = vpop.permute.xlu0 %2850
        %2852 = vrot.lane.b32.xlu0 %v910, 125
        %v2853 = vpop.permute.xlu0 %2852
        %2854 = vrot.lane.b32.xlu0 %v911, 125
        %v2855 = vpop.permute.xlu0 %2854
        %2856 = vrot.lane.b32.xlu0 %v912, 125
        %v2857 = vpop.permute.xlu0 %2856
        %2858 = vrot.lane.b32.xlu0 %v913, 125
        %v2859 = vpop.permute.xlu0 %2858
        %2860 = vrot.lane.b32.xlu0 %v914, 125
        %v2861 = vpop.permute.xlu0 %2860
        %v2862 = vsel %vm2573, %v2841, %v2843
        %v2863 = vsel %vm2573, %v2843, %v2845
        %v2864 = vsel %vm2573, %v2845, %v2847
        %v2865 = vsel %vm2573, %v2847, %v2849
        %v2866 = vsel %vm2573, %v2849, %v2851
        %v2867 = vsel %vm2573, %v2851, %v2853
        %v2868 = vsel %vm2573, %v2853, %v2855
        %v2869 = vsel %vm2573, %v2855, %v2857
        %v2870 = vsel %vm2573, %v2857, %v2859
        %v2871 = vsel %vm2573, %v2859, %v2861
        %v2883 = vsel %vm925, %v2839, 0
        %2885 = vmatprep.subr.bf16.mxu0 %v2863
        %2886 = vmatpush1.bf16.msra.mxu0 %v2862
        %2887 = vmatprep.subr.bf16.mxu0 0
        %2888 = vmatpush1.bf16.msra.mxu0 0
        %2889 = vmatprep.subr.bf16.mxu0 0
        %2890 = vmatpush1.bf16.msra.mxu0 0
        %2891 = vmatprep.subr.bf16.mxu0 0
        %2892 = vmatpush1.bf16.msra.mxu0 0
        %2893 = vmatprep.subr.bf16.mxu0 0
        %2894 = vmatpush1.bf16.msra.mxu0 0
        %2895 = vmatprep.subr.bf16.mxu0 0
        %2896 = vmatpush1.bf16.msra.mxu0 0
        %2897 = vmatprep.subr.bf16.mxu0 0
        %2898 = vmatpush1.bf16.msra.mxu0 0
        %2899 = vmatprep.subr.bf16.mxu0 0
        %2900 = vmatpush1.bf16.msra.mxu0 0
        %2901 = vmatprep.subr.bf16.mxu0 0
        %2902 = vmatpush1.bf16.msra.mxu0 0
        %2903 = vmatprep.subr.bf16.mxu0 0
        %2904 = vmatpush1.bf16.msra.mxu0 0
        %2905 = vmatprep.subr.bf16.mxu0 0
        %2906 = vmatpush1.bf16.msra.mxu0 0
        %2907 = vmatprep.subr.bf16.mxu0 0
        %2908 = vmatpush1.bf16.msra.mxu0 0
        %2909 = vmatprep.subr.bf16.mxu0 0
        %2910 = vmatpush1.bf16.msra.mxu0 0
        %2911 = vmatprep.subr.bf16.mxu0 0
        %2912 = vmatpush1.bf16.msra.mxu0 0
        %2913 = vmatprep.subr.bf16.mxu0 0
        %2914 = vmatpush1.bf16.msra.mxu0 0
        %2915 = vmatprep.subr.bf16.mxu0 0
        %2916 = vmatpush1.bf16.msra.mxu0 0
        %2917 = vmatprep.mubr.bf16.mxu0 0
        %2918 = vmatmul.mubr.bf16.gmra.mrb[0].mxu0 %v2883
        %v2919 = vpop.f32.mrb[0].mxu0
        %v2920 = vadd.f32 0.0, %v2919
        %v2921 = vpop.f32.mrb[0].mxu0
        %v2922 = vadd.f32 0.0, %v2921
        %v2923 = vpop.f32.mrb[0].mxu0
        %v2924 = vadd.f32 0.0, %v2923
        %v2925 = vpop.f32.mrb[0].mxu0
        %v2926 = vadd.f32 0.0, %v2925
        %2927 = vdwg.mxu0
        %2928 = vmatprep.subr.bf16.mxu0 %v2865
        %2929 = vmatpush1.bf16.msra.mxu0 %v2864
        %2930 = vmatprep.subr.bf16.mxu0 0
        %2931 = vmatpush1.bf16.msra.mxu0 0
        %2932 = vmatprep.subr.bf16.mxu0 0
        %2933 = vmatpush1.bf16.msra.mxu0 0
        %2934 = vmatprep.subr.bf16.mxu0 0
        %2935 = vmatpush1.bf16.msra.mxu0 0
        %2936 = vmatprep.subr.bf16.mxu0 0
        %2937 = vmatpush1.bf16.msra.mxu0 0
        %2938 = vmatprep.subr.bf16.mxu0 0
        %2939 = vmatpush1.bf16.msra.mxu0 0
        %2940 = vmatprep.subr.bf16.mxu0 0
        %2941 = vmatpush1.bf16.msra.mxu0 0
        %2942 = vmatprep.subr.bf16.mxu0 0
        %2943 = vmatpush1.bf16.msra.mxu0 0
        %2944 = vmatprep.subr.bf16.mxu0 0
        %2945 = vmatpush1.bf16.msra.mxu0 0
        %2946 = vmatprep.subr.bf16.mxu0 0
        %2947 = vmatpush1.bf16.msra.mxu0 0
        %2948 = vmatprep.subr.bf16.mxu0 0
        %2949 = vmatpush1.bf16.msra.mxu0 0
        %2950 = vmatprep.subr.bf16.mxu0 0
        %2951 = vmatpush1.bf16.msra.mxu0 0
        %2952 = vmatprep.subr.bf16.mxu0 0
        %2953 = vmatpush1.bf16.msra.mxu0 0
        %2954 = vmatprep.subr.bf16.mxu0 0
        %2955 = vmatpush1.bf16.msra.mxu0 0
        %2956 = vmatprep.subr.bf16.mxu0 0
        %2957 = vmatpush1.bf16.msra.mxu0 0
        %2958 = vmatprep.subr.bf16.mxu0 0
        %2959 = vmatpush1.bf16.msra.mxu0 0
        %2960 = vmatprep.mubr.bf16.mxu0 0
        %2961 = vmatmul.mubr.bf16.gmra.mrb[0].mxu0 %v2883
        %v2962 = vpop.f32.mrb[0].mxu0
        %v2963 = vadd.f32 0.0, %v2962
        %v2964 = vpop.f32.mrb[0].mxu0
        %v2965 = vadd.f32 0.0, %v2964
        %v2966 = vpop.f32.mrb[0].mxu0
        %v2967 = vadd.f32 0.0, %v2966
        %v2968 = vpop.f32.mrb[0].mxu0
        %v2969 = vadd.f32 0.0, %v2968
        %2970 = vdwg.mxu0
        %2971 = vmatprep.subr.bf16.mxu0 %v2867
        %2972 = vmatpush1.bf16.msra.mxu0 %v2866
        %2973 = vmatprep.subr.bf16.mxu0 0
        %2974 = vmatpush1.bf16.msra.mxu0 0
        %2975 = vmatprep.subr.bf16.mxu0 0
        %2976 = vmatpush1.bf16.msra.mxu0 0
        %2977 = vmatprep.subr.bf16.mxu0 0
        %2978 = vmatpush1.bf16.msra.mxu0 0
        %2979 = vmatprep.subr.bf16.mxu0 0
        %2980 = vmatpush1.bf16.msra.mxu0 0
        %2981 = vmatprep.subr.bf16.mxu0 0
        %2982 = vmatpush1.bf16.msra.mxu0 0
        %2983 = vmatprep.subr.bf16.mxu0 0
        %2984 = vmatpush1.bf16.msra.mxu0 0
        %2985 = vmatprep.subr.bf16.mxu0 0
        %2986 = vmatpush1.bf16.msra.mxu0 0
        %2987 = vmatprep.subr.bf16.mxu0 0
        %2988 = vmatpush1.bf16.msra.mxu0 0
        %2989 = vmatprep.subr.bf16.mxu0 0
        %2990 = vmatpush1.bf16.msra.mxu0 0
        %2991 = vmatprep.subr.bf16.mxu0 0
        %2992 = vmatpush1.bf16.msra.mxu0 0
        %2993 = vmatprep.subr.bf16.mxu0 0
        %2994 = vmatpush1.bf16.msra.mxu0 0
        %2995 = vmatprep.subr.bf16.mxu0 0
        %2996 = vmatpush1.bf16.msra.mxu0 0
        %2997 = vmatprep.subr.bf16.mxu0 0
        %2998 = vmatpush1.bf16.msra.mxu0 0
        %2999 = vmatprep.subr.bf16.mxu0 0
        %3000 = vmatpush1.bf16.msra.mxu0 0
        %3001 = vmatprep.subr.bf16.mxu0 0
        %3002 = vmatpush1.bf16.msra.mxu0 0
        %3003 = vmatprep.mubr.bf16.mxu0 0
        %3004 = vmatmul.mubr.bf16.gmra.mrb[0].mxu0 %v2883
        %v3005 = vpop.f32.mrb[0].mxu0
        %v3006 = vadd.f32 0.0, %v3005
        %v3007 = vpop.f32.mrb[0].mxu0
        %v3008 = vadd.f32 0.0, %v3007
        %v3009 = vpop.f32.mrb[0].mxu0
        %v3010 = vadd.f32 0.0, %v3009
        %v3011 = vpop.f32.mrb[0].mxu0
        %v3012 = vadd.f32 0.0, %v3011
        %3013 = vdwg.mxu0
        %3014 = vmatprep.subr.bf16.mxu0 %v2869
        %3015 = vmatpush1.bf16.msra.mxu0 %v2868
        %3016 = vmatprep.subr.bf16.mxu0 0
        %3017 = vmatpush1.bf16.msra.mxu0 0
        %3018 = vmatprep.subr.bf16.mxu0 0
        %3019 = vmatpush1.bf16.msra.mxu0 0
        %3020 = vmatprep.subr.bf16.mxu0 0
        %3021 = vmatpush1.bf16.msra.mxu0 0
        %3022 = vmatprep.subr.bf16.mxu0 0
        %3023 = vmatpush1.bf16.msra.mxu0 0
        %3024 = vmatprep.subr.bf16.mxu0 0
        %3025 = vmatpush1.bf16.msra.mxu0 0
        %3026 = vmatprep.subr.bf16.mxu0 0
        %3027 = vmatpush1.bf16.msra.mxu0 0
        %3028 = vmatprep.subr.bf16.mxu0 0
        %3029 = vmatpush1.bf16.msra.mxu0 0
        %3030 = vmatprep.subr.bf16.mxu0 0
        %3031 = vmatpush1.bf16.msra.mxu0 0
        %3032 = vmatprep.subr.bf16.mxu0 0
        %3033 = vmatpush1.bf16.msra.mxu0 0
        %3034 = vmatprep.subr.bf16.mxu0 0
        %3035 = vmatpush1.bf16.msra.mxu0 0
        %3036 = vmatprep.subr.bf16.mxu0 0
        %3037 = vmatpush1.bf16.msra.mxu0 0
        %3038 = vmatprep.subr.bf16.mxu0 0
        %3039 = vmatpush1.bf16.msra.mxu0 0
        %3040 = vmatprep.subr.bf16.mxu0 0
        %3041 = vmatpush1.bf16.msra.mxu0 0
        %3042 = vmatprep.subr.bf16.mxu0 0
        %3043 = vmatpush1.bf16.msra.mxu0 0
        %3044 = vmatprep.subr.bf16.mxu0 0
        %3045 = vmatpush1.bf16.msra.mxu0 0
        %3046 = vmatprep.mubr.bf16.mxu0 0
        %3047 = vmatmul.mubr.bf16.gmra.mrb[0].mxu0 %v2883
        %v3048 = vpop.f32.mrb[0].mxu0
        %v3049 = vadd.f32 0.0, %v3048
        %v3050 = vpop.f32.mrb[0].mxu0
        %v3051 = vadd.f32 0.0, %v3050
        %v3052 = vpop.f32.mrb[0].mxu0
        %v3053 = vadd.f32 0.0, %v3052
        %v3054 = vpop.f32.mrb[0].mxu0
        %v3055 = vadd.f32 0.0, %v3054
        %3056 = vdwg.mxu0
        %3057 = vmatprep.subr.bf16.mxu0 %v2871
        %3058 = vmatpush1.bf16.msra.mxu0 %v2870
        %3059 = vmatprep.subr.bf16.mxu0 0
        %3060 = vmatpush1.bf16.msra.mxu0 0
        %3061 = vmatprep.subr.bf16.mxu0 0
        %3062 = vmatpush1.bf16.msra.mxu0 0
        %3063 = vmatprep.subr.bf16.mxu0 0
        %3064 = vmatpush1.bf16.msra.mxu0 0
        %3065 = vmatprep.subr.bf16.mxu0 0
        %3066 = vmatpush1.bf16.msra.mxu0 0
        %3067 = vmatprep.subr.bf16.mxu0 0
        %3068 = vmatpush1.bf16.msra.mxu0 0
        %3069 = vmatprep.subr.bf16.mxu0 0
        %3070 = vmatpush1.bf16.msra.mxu0 0
        %3071 = vmatprep.subr.bf16.mxu0 0
        %3072 = vmatpush1.bf16.msra.mxu0 0
        %3073 = vmatprep.subr.bf16.mxu0 0
        %3074 = vmatpush1.bf16.msra.mxu0 0
        %3075 = vmatprep.subr.bf16.mxu0 0
        %3076 = vmatpush1.bf16.msra.mxu0 0
        %3077 = vmatprep.subr.bf16.mxu0 0
        %3078 = vmatpush1.bf16.msra.mxu0 0
        %3079 = vmatprep.subr.bf16.mxu0 0
        %3080 = vmatpush1.bf16.msra.mxu0 0
        %3081 = vmatprep.subr.bf16.mxu0 0
        %3082 = vmatpush1.bf16.msra.mxu0 0
        %3083 = vmatprep.subr.bf16.mxu0 0
        %3084 = vmatpush1.bf16.msra.mxu0 0
        %3085 = vmatprep.subr.bf16.mxu0 0
        %3086 = vmatpush1.bf16.msra.mxu0 0
        %3087 = vmatprep.subr.bf16.mxu0 0
        %3088 = vmatpush1.bf16.msra.mxu0 0
        %3089 = vmatprep.mubr.bf16.mxu0 0
        %3090 = vmatmul.mubr.bf16.gmra.mrb[0].mxu0 %v2883
        %v3091 = vpop.f32.mrb[0].mxu0
        %v3092 = vadd.f32 0.0, %v3091
        %v3093 = vpop.f32.mrb[0].mxu0
        %v3094 = vadd.f32 0.0, %v3093
        %v3095 = vpop.f32.mrb[0].mxu0
        %v3096 = vadd.f32 0.0, %v3095
        %v3097 = vpop.f32.mrb[0].mxu0
        %v3098 = vadd.f32 0.0, %v3097
        %3099 = vdwg.mxu0
        %v3100 = vadd.f32 %v2812, %v2920
        %v3101 = vadd.f32 %v2813, %v2922
        %v3102 = vadd.f32 %v2814, %v2963
        %v3103 = vadd.f32 %v2815, %v2965
        %v3104 = vadd.f32 %v2816, %v3006
        %v3105 = vadd.f32 %v2817, %v3008
        %v3106 = vadd.f32 %v2818, %v3049
        %v3107 = vadd.f32 %v2819, %v3051
        %v3108 = vadd.f32 %v2820, %v3092
        %v3109 = vadd.f32 %v2821, %v3094
        %v3110 = vadd.f32 %v2822, %v2924
        %v3111 = vadd.f32 %v2823, %v2926
        %v3112 = vadd.f32 %v2824, %v2967
        %v3113 = vadd.f32 %v2825, %v2969
        %v3114 = vadd.f32 %v2826, %v3010
        %v3115 = vadd.f32 %v2827, %v3012
        %v3116 = vadd.f32 %v2828, %v3053
        %v3117 = vadd.f32 %v2829, %v3055
        %v3118 = vadd.f32 %v2830, %v3096
        %v3119 = vadd.f32 %v2831, %v3098
        %s3120 = scalar_lea.vmem %s0, 64
        %v3121 = vld [vmem:[%s3120] sm:$0xf]
        %v3122 = vld [vmem:[%s3120 + $0x4] sm:$0xf]
        %v3125 = vunpack.c.l.b16 %v3121
        %v3126 = vunpack.c.l.b16 %v3122
        %v3127 = vpack.c.b16 %v3126, %v3125
        %3128 = vrot.lane.b32.xlu0 %v893, 124
        %v3129 = vpop.permute.xlu0 %3128
        %3130 = vrot.lane.b32.xlu0 %v894, 124
        %v3131 = vpop.permute.xlu0 %3130
        %3132 = vrot.lane.b32.xlu0 %v895, 124
        %v3133 = vpop.permute.xlu0 %3132
        %3134 = vrot.lane.b32.xlu0 %v896, 124
        %v3135 = vpop.permute.xlu0 %3134
        %3136 = vrot.lane.b32.xlu0 %v897, 124
        %v3137 = vpop.permute.xlu0 %3136
        %3138 = vrot.lane.b32.xlu0 %v898, 124
        %v3139 = vpop.permute.xlu0 %3138
        %3140 = vrot.lane.b32.xlu0 %v899, 124
        %v3141 = vpop.permute.xlu0 %3140
        %3142 = vrot.lane.b32.xlu0 %v900, 124
        %v3143 = vpop.permute.xlu0 %3142
        %3144 = vrot.lane.b32.xlu0 %v901, 124
        %v3145 = vpop.permute.xlu0 %3144
        %3146 = vrot.lane.b32.xlu0 %v902, 124
        %v3147 = vpop.permute.xlu0 %3146
        %3148 = vrot.lane.b32.xlu0 %v903, 124
        %v3149 = vpop.permute.xlu0 %3148
        %vm3150 = vcmask 1014784
        %v3151 = vsel %vm3150, %v3129, %v3131
        %v3152 = vsel %vm3150, %v3131, %v3133
        %v3153 = vsel %vm3150, %v3133, %v3135
        %v3154 = vsel %vm3150, %v3135, %v3137
        %v3155 = vsel %vm3150, %v3137, %v3139
        %v3156 = vsel %vm3150, %v3139, %v3141
        %v3157 = vsel %vm3150, %v3141, %v3143
        %v3158 = vsel %vm3150, %v3143, %v3145
        %v3159 = vsel %vm3150, %v3145, %v3147
        %v3160 = vsel %vm3150, %v3147, %v3149
        %v3172 = vsel %vm925, %v3127, 0
        %3174 = vmatprep.subr.bf16.mxu0 %v3152
        %3175 = vmatpush1.bf16.msra.mxu0 %v3151
        %3176 = vmatprep.subr.bf16.mxu0 0
        %3177 = vmatpush1.bf16.msra.mxu0 0
        %3178 = vmatprep.subr.bf16.mxu0 0
        %3179 = vmatpush1.bf16.msra.mxu0 0
        %3180 = vmatprep.subr.bf16.mxu0 0
        %3181 = vmatpush1.bf16.msra.mxu0 0
        %3182 = vmatprep.subr.bf16.mxu0 0
        %3183 = vmatpush1.bf16.msra.mxu0 0
        %3184 = vmatprep.subr.bf16.mxu0 0
        %3185 = vmatpush1.bf16.msra.mxu0 0
        %3186 = vmatprep.subr.bf16.mxu0 0
        %3187 = vmatpush1.bf16.msra.mxu0 0
        %3188 = vmatprep.subr.bf16.mxu0 0
        %3189 = vmatpush1.bf16.msra.mxu0 0
        %3190 = vmatprep.subr.bf16.mxu0 0
        %3191 = vmatpush1.bf16.msra.mxu0 0
        %3192 = vmatprep.subr.bf16.mxu0 0
        %3193 = vmatpush1.bf16.msra.mxu0 0
        %3194 = vmatprep.subr.bf16.mxu0 0
        %3195 = vmatpush1.bf16.msra.mxu0 0
        %3196 = vmatprep.subr.bf16.mxu0 0
        %3197 = vmatpush1.bf16.msra.mxu0 0
        %3198 = vmatprep.subr.bf16.mxu0 0
        %3199 = vmatpush1.bf16.msra.mxu0 0
        %3200 = vmatprep.subr.bf16.mxu0 0
        %3201 = vmatpush1.bf16.msra.mxu0 0
        %3202 = vmatprep.subr.bf16.mxu0 0
        %3203 = vmatpush1.bf16.msra.mxu0 0
        %3204 = vmatprep.subr.bf16.mxu0 0
        %3205 = vmatpush1.bf16.msra.mxu0 0
        %3206 = vmatprep.mubr.bf16.mxu0 0
        %3207 = vmatmul.mubr.bf16.gmra.mrb[0].mxu0 %v3172
        %v3208 = vpop.f32.mrb[0].mxu0
        %v3209 = vadd.f32 0.0, %v3208
        %v3210 = vpop.f32.mrb[0].mxu0
        %v3211 = vadd.f32 0.0, %v3210
        %v3212 = vpop.f32.mrb[0].mxu0
        %v3213 = vadd.f32 0.0, %v3212
        %v3214 = vpop.f32.mrb[0].mxu0
        %v3215 = vadd.f32 0.0, %v3214
        %3216 = vdwg.mxu0
        %3217 = vmatprep.subr.bf16.mxu0 %v3154
        %3218 = vmatpush1.bf16.msra.mxu0 %v3153
        %3219 = vmatprep.subr.bf16.mxu0 0
        %3220 = vmatpush1.bf16.msra.mxu0 0
        %3221 = vmatprep.subr.bf16.mxu0 0
        %3222 = vmatpush1.bf16.msra.mxu0 0
        %3223 = vmatprep.subr.bf16.mxu0 0
        %3224 = vmatpush1.bf16.msra.mxu0 0
        %3225 = vmatprep.subr.bf16.mxu0 0
        %3226 = vmatpush1.bf16.msra.mxu0 0
        %3227 = vmatprep.subr.bf16.mxu0 0
        %3228 = vmatpush1.bf16.msra.mxu0 0
        %3229 = vmatprep.subr.bf16.mxu0 0
        %3230 = vmatpush1.bf16.msra.mxu0 0
        %3231 = vmatprep.subr.bf16.mxu0 0
        %3232 = vmatpush1.bf16.msra.mxu0 0
        %3233 = vmatprep.subr.bf16.mxu0 0
        %3234 = vmatpush1.bf16.msra.mxu0 0
        %3235 = vmatprep.subr.bf16.mxu0 0
        %3236 = vmatpush1.bf16.msra.mxu0 0
        %3237 = vmatprep.subr.bf16.mxu0 0
        %3238 = vmatpush1.bf16.msra.mxu0 0
        %3239 = vmatprep.subr.bf16.mxu0 0
        %3240 = vmatpush1.bf16.msra.mxu0 0
        %3241 = vmatprep.subr.bf16.mxu0 0
        %3242 = vmatpush1.bf16.msra.mxu0 0
        %3243 = vmatprep.subr.bf16.mxu0 0
        %3244 = vmatpush1.bf16.msra.mxu0 0
        %3245 = vmatprep.subr.bf16.mxu0 0
        %3246 = vmatpush1.bf16.msra.mxu0 0
        %3247 = vmatprep.subr.bf16.mxu0 0
        %3248 = vmatpush1.bf16.msra.mxu0 0
        %3249 = vmatprep.mubr.bf16.mxu0 0
        %3250 = vmatmul.mubr.bf16.gmra.mrb[0].mxu0 %v3172
        %v3251 = vpop.f32.mrb[0].mxu0
        %v3252 = vadd.f32 0.0, %v3251
        %v3253 = vpop.f32.mrb[0].mxu0
        %v3254 = vadd.f32 0.0, %v3253
        %v3255 = vpop.f32.mrb[0].mxu0
        %v3256 = vadd.f32 0.0, %v3255
        %v3257 = vpop.f32.mrb[0].mxu0
        %v3258 = vadd.f32 0.0, %v3257
        %3259 = vdwg.mxu0
        %3260 = vmatprep.subr.bf16.mxu0 %v3156
        %3261 = vmatpush1.bf16.msra.mxu0 %v3155
        %3262 = vmatprep.subr.bf16.mxu0 0
        %3263 = vmatpush1.bf16.msra.mxu0 0
        %3264 = vmatprep.subr.bf16.mxu0 0
        %3265 = vmatpush1.bf16.msra.mxu0 0
        %3266 = vmatprep.subr.bf16.mxu0 0
        %3267 = vmatpush1.bf16.msra.mxu0 0
        %3268 = vmatprep.subr.bf16.mxu0 0
        %3269 = vmatpush1.bf16.msra.mxu0 0
        %3270 = vmatprep.subr.bf16.mxu0 0
        %3271 = vmatpush1.bf16.msra.mxu0 0
        %3272 = vmatprep.subr.bf16.mxu0 0
        %3273 = vmatpush1.bf16.msra.mxu0 0
        %3274 = vmatprep.subr.bf16.mxu0 0
        %3275 = vmatpush1.bf16.msra.mxu0 0
        %3276 = vmatprep.subr.bf16.mxu0 0
        %3277 = vmatpush1.bf16.msra.mxu0 0
        %3278 = vmatprep.subr.bf16.mxu0 0
        %3279 = vmatpush1.bf16.msra.mxu0 0
        %3280 = vmatprep.subr.bf16.mxu0 0
        %3281 = vmatpush1.bf16.msra.mxu0 0
        %3282 = vmatprep.subr.bf16.mxu0 0
        %3283 = vmatpush1.bf16.msra.mxu0 0
        %3284 = vmatprep.subr.bf16.mxu0 0
        %3285 = vmatpush1.bf16.msra.mxu0 0
        %3286 = vmatprep.subr.bf16.mxu0 0
        %3287 = vmatpush1.bf16.msra.mxu0 0
        %3288 = vmatprep.subr.bf16.mxu0 0
        %3289 = vmatpush1.bf16.msra.mxu0 0
        %3290 = vmatprep.subr.bf16.mxu0 0
        %3291 = vmatpush1.bf16.msra.mxu0 0
        %3292 = vmatprep.mubr.bf16.mxu0 0
        %3293 = vmatmul.mubr.bf16.gmra.mrb[0].mxu0 %v3172
        %v3294 = vpop.f32.mrb[0].mxu0
        %v3295 = vadd.f32 0.0, %v3294
        %v3296 = vpop.f32.mrb[0].mxu0
        %v3297 = vadd.f32 0.0, %v3296
        %v3298 = vpop.f32.mrb[0].mxu0
        %v3299 = vadd.f32 0.0, %v3298
        %v3300 = vpop.f32.mrb[0].mxu0
        %v3301 = vadd.f32 0.0, %v3300
        %3302 = vdwg.mxu0
        %3303 = vmatprep.subr.bf16.mxu0 %v3158
        %3304 = vmatpush1.bf16.msra.mxu0 %v3157
        %3305 = vmatprep.subr.bf16.mxu0 0
        %3306 = vmatpush1.bf16.msra.mxu0 0
        %3307 = vmatprep.subr.bf16.mxu0 0
        %3308 = vmatpush1.bf16.msra.mxu0 0
        %3309 = vmatprep.subr.bf16.mxu0 0
        %3310 = vmatpush1.bf16.msra.mxu0 0
        %3311 = vmatprep.subr.bf16.mxu0 0
        %3312 = vmatpush1.bf16.msra.mxu0 0
        %3313 = vmatprep.subr.bf16.mxu0 0
        %3314 = vmatpush1.bf16.msra.mxu0 0
        %3315 = vmatprep.subr.bf16.mxu0 0
        %3316 = vmatpush1.bf16.msra.mxu0 0
        %3317 = vmatprep.subr.bf16.mxu0 0
        %3318 = vmatpush1.bf16.msra.mxu0 0
        %3319 = vmatprep.subr.bf16.mxu0 0
        %3320 = vmatpush1.bf16.msra.mxu0 0
        %3321 = vmatprep.subr.bf16.mxu0 0
        %3322 = vmatpush1.bf16.msra.mxu0 0
        %3323 = vmatprep.subr.bf16.mxu0 0
        %3324 = vmatpush1.bf16.msra.mxu0 0
        %3325 = vmatprep.subr.bf16.mxu0 0
        %3326 = vmatpush1.bf16.msra.mxu0 0
        %3327 = vmatprep.subr.bf16.mxu0 0
        %3328 = vmatpush1.bf16.msra.mxu0 0
        %3329 = vmatprep.subr.bf16.mxu0 0
        %3330 = vmatpush1.bf16.msra.mxu0 0
        %3331 = vmatprep.subr.bf16.mxu0 0
        %3332 = vmatpush1.bf16.msra.mxu0 0
        %3333 = vmatprep.subr.bf16.mxu0 0
        %3334 = vmatpush1.bf16.msra.mxu0 0
        %3335 = vmatprep.mubr.bf16.mxu0 0
        %3336 = vmatmul.mubr.bf16.gmra.mrb[0].mxu0 %v3172
        %v3337 = vpop.f32.mrb[0].mxu0
        %v3338 = vadd.f32 0.0, %v3337
        %v3339 = vpop.f32.mrb[0].mxu0
        %v3340 = vadd.f32 0.0, %v3339
        %v3341 = vpop.f32.mrb[0].mxu0
        %v3342 = vadd.f32 0.0, %v3341
        %v3343 = vpop.f32.mrb[0].mxu0
        %v3344 = vadd.f32 0.0, %v3343
        %3345 = vdwg.mxu0
        %3346 = vmatprep.subr.bf16.mxu0 %v3160
        %3347 = vmatpush1.bf16.msra.mxu0 %v3159
        %3348 = vmatprep.subr.bf16.mxu0 0
        %3349 = vmatpush1.bf16.msra.mxu0 0
        %3350 = vmatprep.subr.bf16.mxu0 0
        %3351 = vmatpush1.bf16.msra.mxu0 0
        %3352 = vmatprep.subr.bf16.mxu0 0
        %3353 = vmatpush1.bf16.msra.mxu0 0
        %3354 = vmatprep.subr.bf16.mxu0 0
        %3355 = vmatpush1.bf16.msra.mxu0 0
        %3356 = vmatprep.subr.bf16.mxu0 0
        %3357 = vmatpush1.bf16.msra.mxu0 0
        %3358 = vmatprep.subr.bf16.mxu0 0
        %3359 = vmatpush1.bf16.msra.mxu0 0
        %3360 = vmatprep.subr.bf16.mxu0 0
        %3361 = vmatpush1.bf16.msra.mxu0 0
        %3362 = vmatprep.subr.bf16.mxu0 0
        %3363 = vmatpush1.bf16.msra.mxu0 0
        %3364 = vmatprep.subr.bf16.mxu0 0
        %3365 = vmatpush1.bf16.msra.mxu0 0
        %3366 = vmatprep.subr.bf16.mxu0 0
        %3367 = vmatpush1.bf16.msra.mxu0 0
        %3368 = vmatprep.subr.bf16.mxu0 0
        %3369 = vmatpush1.bf16.msra.mxu0 0
        %3370 = vmatprep.subr.bf16.mxu0 0
        %3371 = vmatpush1.bf16.msra.mxu0 0
        %3372 = vmatprep.subr.bf16.mxu0 0
        %3373 = vmatpush1.bf16.msra.mxu0 0
        %3374 = vmatprep.subr.bf16.mxu0 0
        %3375 = vmatpush1.bf16.msra.mxu0 0
        %3376 = vmatprep.subr.bf16.mxu0 0
        %3377 = vmatpush1.bf16.msra.mxu0 0
        %3378 = vmatprep.mubr.bf16.mxu0 0
        %3379 = vmatmul.mubr.bf16.gmra.mrb[0].mxu0 %v3172
        %v3380 = vpop.f32.mrb[0].mxu0
        %v3381 = vadd.f32 0.0, %v3380
        %v3382 = vpop.f32.mrb[0].mxu0
        %v3383 = vadd.f32 0.0, %v3382
        %v3384 = vpop.f32.mrb[0].mxu0
        %v3385 = vadd.f32 0.0, %v3384
        %v3386 = vpop.f32.mrb[0].mxu0
        %v3387 = vadd.f32 0.0, %v3386
        %3388 = vdwg.mxu0
        %v3389 = vadd.f32 %v3100, %v3209
        %v3390 = vadd.f32 %v3101, %v3211
        %v3391 = vadd.f32 %v3102, %v3252
        %v3392 = vadd.f32 %v3103, %v3254
        %v3393 = vadd.f32 %v3104, %v3295
        %v3394 = vadd.f32 %v3105, %v3297
        %v3395 = vadd.f32 %v3106, %v3338
        %v3396 = vadd.f32 %v3107, %v3340
        %v3397 = vadd.f32 %v3108, %v3381
        %v3398 = vadd.f32 %v3109, %v3383
        %v3399 = vadd.f32 %v3110, %v3213
        %v3400 = vadd.f32 %v3111, %v3215
        %v3401 = vadd.f32 %v3112, %v3256
        %v3402 = vadd.f32 %v3113, %v3258
        %v3403 = vadd.f32 %v3114, %v3299
        %v3404 = vadd.f32 %v3115, %v3301
        %v3405 = vadd.f32 %v3116, %v3342
        %v3406 = vadd.f32 %v3117, %v3344
        %v3407 = vadd.f32 %v3118, %v3385
        %v3408 = vadd.f32 %v3119, %v3387
        %s3409 = scalar_lea.vmem %s0, 72
        %v3410 = vld [vmem:[%s3409] sm:$0xf]
        %v3411 = vld [vmem:[%s3409 + $0x4] sm:$0xf]
        %v3414 = vunpack.c.l.b16 %v3410
        %v3415 = vunpack.c.l.b16 %v3411
        %v3416 = vpack.c.b16 %v3415, %v3414
        %3417 = vrot.lane.b32.xlu0 %v904, 124
        %v3418 = vpop.permute.xlu0 %3417
        %3419 = vrot.lane.b32.xlu0 %v905, 124
        %v3420 = vpop.permute.xlu0 %3419
        %3421 = vrot.lane.b32.xlu0 %v906, 124
        %v3422 = vpop.permute.xlu0 %3421
        %3423 = vrot.lane.b32.xlu0 %v907, 124
        %v3424 = vpop.permute.xlu0 %3423
        %3425 = vrot.lane.b32.xlu0 %v908, 124
        %v3426 = vpop.permute.xlu0 %3425
        %3427 = vrot.lane.b32.xlu0 %v909, 124
        %v3428 = vpop.permute.xlu0 %3427
        %3429 = vrot.lane.b32.xlu0 %v910, 124
        %v3430 = vpop.permute.xlu0 %3429
        %3431 = vrot.lane.b32.xlu0 %v911, 124
        %v3432 = vpop.permute.xlu0 %3431
        %3433 = vrot.lane.b32.xlu0 %v912, 124
        %v3434 = vpop.permute.xlu0 %3433
        %3435 = vrot.lane.b32.xlu0 %v913, 124
        %v3436 = vpop.permute.xlu0 %3435
        %3437 = vrot.lane.b32.xlu0 %v914, 124
        %v3438 = vpop.permute.xlu0 %3437
        %v3439 = vsel %vm3150, %v3418, %v3420
        %v3440 = vsel %vm3150, %v3420, %v3422
        %v3441 = vsel %vm3150, %v3422, %v3424
        %v3442 = vsel %vm3150, %v3424, %v3426
        %v3443 = vsel %vm3150, %v3426, %v3428
        %v3444 = vsel %vm3150, %v3428, %v3430
        %v3445 = vsel %vm3150, %v3430, %v3432
        %v3446 = vsel %vm3150, %v3432, %v3434
        %v3447 = vsel %vm3150, %v3434, %v3436
        %v3448 = vsel %vm3150, %v3436, %v3438
        %v3460 = vsel %vm925, %v3416, 0
        %3462 = vmatprep.subr.bf16.mxu0 %v3440
        %3463 = vmatpush1.bf16.msra.mxu0 %v3439
        %3464 = vmatprep.subr.bf16.mxu0 0
        %3465 = vmatpush1.bf16.msra.mxu0 0
        %3466 = vmatprep.subr.bf16.mxu0 0
        %3467 = vmatpush1.bf16.msra.mxu0 0
        %3468 = vmatprep.subr.bf16.mxu0 0
        %3469 = vmatpush1.bf16.msra.mxu0 0
        %3470 = vmatprep.subr.bf16.mxu0 0
        %3471 = vmatpush1.bf16.msra.mxu0 0
        %3472 = vmatprep.subr.bf16.mxu0 0
        %3473 = vmatpush1.bf16.msra.mxu0 0
        %3474 = vmatprep.subr.bf16.mxu0 0
        %3475 = vmatpush1.bf16.msra.mxu0 0
        %3476 = vmatprep.subr.bf16.mxu0 0
        %3477 = vmatpush1.bf16.msra.mxu0 0
        %3478 = vmatprep.subr.bf16.mxu0 0
        %3479 = vmatpush1.bf16.msra.mxu0 0
        %3480 = vmatprep.subr.bf16.mxu0 0
        %3481 = vmatpush1.bf16.msra.mxu0 0
        %3482 = vmatprep.subr.bf16.mxu0 0
        %3483 = vmatpush1.bf16.msra.mxu0 0
        %3484 = vmatprep.subr.bf16.mxu0 0
        %3485 = vmatpush1.bf16.msra.mxu0 0
        %3486 = vmatprep.subr.bf16.mxu0 0
        %3487 = vmatpush1.bf16.msra.mxu0 0
        %3488 = vmatprep.subr.bf16.mxu0 0
        %3489 = vmatpush1.bf16.msra.mxu0 0
        %3490 = vmatprep.subr.bf16.mxu0 0
        %3491 = vmatpush1.bf16.msra.mxu0 0
        %3492 = vmatprep.subr.bf16.mxu0 0
        %3493 = vmatpush1.bf16.msra.mxu0 0
        %3494 = vmatprep.mubr.bf16.mxu0 0
        %3495 = vmatmul.mubr.bf16.gmra.mrb[0].mxu0 %v3460
        %v3496 = vpop.f32.mrb[0].mxu0
        %v3497 = vadd.f32 0.0, %v3496
        %v3498 = vpop.f32.mrb[0].mxu0
        %v3499 = vadd.f32 0.0, %v3498
        %v3500 = vpop.f32.mrb[0].mxu0
        %v3501 = vadd.f32 0.0, %v3500
        %v3502 = vpop.f32.mrb[0].mxu0
        %v3503 = vadd.f32 0.0, %v3502
        %3504 = vdwg.mxu0
        %3505 = vmatprep.subr.bf16.mxu0 %v3442
        %3506 = vmatpush1.bf16.msra.mxu0 %v3441
        %3507 = vmatprep.subr.bf16.mxu0 0
        %3508 = vmatpush1.bf16.msra.mxu0 0
        %3509 = vmatprep.subr.bf16.mxu0 0
        %3510 = vmatpush1.bf16.msra.mxu0 0
        %3511 = vmatprep.subr.bf16.mxu0 0
        %3512 = vmatpush1.bf16.msra.mxu0 0
        %3513 = vmatprep.subr.bf16.mxu0 0
        %3514 = vmatpush1.bf16.msra.mxu0 0
        %3515 = vmatprep.subr.bf16.mxu0 0
        %3516 = vmatpush1.bf16.msra.mxu0 0
        %3517 = vmatprep.subr.bf16.mxu0 0
        %3518 = vmatpush1.bf16.msra.mxu0 0
        %3519 = vmatprep.subr.bf16.mxu0 0
        %3520 = vmatpush1.bf16.msra.mxu0 0
        %3521 = vmatprep.subr.bf16.mxu0 0
        %3522 = vmatpush1.bf16.msra.mxu0 0
        %3523 = vmatprep.subr.bf16.mxu0 0
        %3524 = vmatpush1.bf16.msra.mxu0 0
        %3525 = vmatprep.subr.bf16.mxu0 0
        %3526 = vmatpush1.bf16.msra.mxu0 0
        %3527 = vmatprep.subr.bf16.mxu0 0
        %3528 = vmatpush1.bf16.msra.mxu0 0
        %3529 = vmatprep.subr.bf16.mxu0 0
        %3530 = vmatpush1.bf16.msra.mxu0 0
        %3531 = vmatprep.subr.bf16.mxu0 0
        %3532 = vmatpush1.bf16.msra.mxu0 0
        %3533 = vmatprep.subr.bf16.mxu0 0
        %3534 = vmatpush1.bf16.msra.mxu0 0
        %3535 = vmatprep.subr.bf16.mxu0 0
        %3536 = vmatpush1.bf16.msra.mxu0 0
        %3537 = vmatprep.mubr.bf16.mxu0 0
        %3538 = vmatmul.mubr.bf16.gmra.mrb[0].mxu0 %v3460
        %v3539 = vpop.f32.mrb[0].mxu0
        %v3540 = vadd.f32 0.0, %v3539
        %v3541 = vpop.f32.mrb[0].mxu0
        %v3542 = vadd.f32 0.0, %v3541
        %v3543 = vpop.f32.mrb[0].mxu0
        %v3544 = vadd.f32 0.0, %v3543
        %v3545 = vpop.f32.mrb[0].mxu0
        %v3546 = vadd.f32 0.0, %v3545
        %3547 = vdwg.mxu0
        %3548 = vmatprep.subr.bf16.mxu0 %v3444
        %3549 = vmatpush1.bf16.msra.mxu0 %v3443
        %3550 = vmatprep.subr.bf16.mxu0 0
        %3551 = vmatpush1.bf16.msra.mxu0 0
        %3552 = vmatprep.subr.bf16.mxu0 0
        %3553 = vmatpush1.bf16.msra.mxu0 0
        %3554 = vmatprep.subr.bf16.mxu0 0
        %3555 = vmatpush1.bf16.msra.mxu0 0
        %3556 = vmatprep.subr.bf16.mxu0 0
        %3557 = vmatpush1.bf16.msra.mxu0 0
        %3558 = vmatprep.subr.bf16.mxu0 0
        %3559 = vmatpush1.bf16.msra.mxu0 0
        %3560 = vmatprep.subr.bf16.mxu0 0
        %3561 = vmatpush1.bf16.msra.mxu0 0
        %3562 = vmatprep.subr.bf16.mxu0 0
        %3563 = vmatpush1.bf16.msra.mxu0 0
        %3564 = vmatprep.subr.bf16.mxu0 0
        %3565 = vmatpush1.bf16.msra.mxu0 0
        %3566 = vmatprep.subr.bf16.mxu0 0
        %3567 = vmatpush1.bf16.msra.mxu0 0
        %3568 = vmatprep.subr.bf16.mxu0 0
        %3569 = vmatpush1.bf16.msra.mxu0 0
        %3570 = vmatprep.subr.bf16.mxu0 0
        %3571 = vmatpush1.bf16.msra.mxu0 0
        %3572 = vmatprep.subr.bf16.mxu0 0
        %3573 = vmatpush1.bf16.msra.mxu0 0
        %3574 = vmatprep.subr.bf16.mxu0 0
        %3575 = vmatpush1.bf16.msra.mxu0 0
        %3576 = vmatprep.subr.bf16.mxu0 0
        %3577 = vmatpush1.bf16.msra.mxu0 0
        %3578 = vmatprep.subr.bf16.mxu0 0
        %3579 = vmatpush1.bf16.msra.mxu0 0
        %3580 = vmatprep.mubr.bf16.mxu0 0
        %3581 = vmatmul.mubr.bf16.gmra.mrb[0].mxu0 %v3460
        %v3582 = vpop.f32.mrb[0].mxu0
        %v3583 = vadd.f32 0.0, %v3582
        %v3584 = vpop.f32.mrb[0].mxu0
        %v3585 = vadd.f32 0.0, %v3584
        %v3586 = vpop.f32.mrb[0].mxu0
        %v3587 = vadd.f32 0.0, %v3586
        %v3588 = vpop.f32.mrb[0].mxu0
        %v3589 = vadd.f32 0.0, %v3588
        %3590 = vdwg.mxu0
        %3591 = vmatprep.subr.bf16.mxu0 %v3446
        %3592 = vmatpush1.bf16.msra.mxu0 %v3445
        %3593 = vmatprep.subr.bf16.mxu0 0
        %3594 = vmatpush1.bf16.msra.mxu0 0
        %3595 = vmatprep.subr.bf16.mxu0 0
        %3596 = vmatpush1.bf16.msra.mxu0 0
        %3597 = vmatprep.subr.bf16.mxu0 0
        %3598 = vmatpush1.bf16.msra.mxu0 0
        %3599 = vmatprep.subr.bf16.mxu0 0
        %3600 = vmatpush1.bf16.msra.mxu0 0
        %3601 = vmatprep.subr.bf16.mxu0 0
        %3602 = vmatpush1.bf16.msra.mxu0 0
        %3603 = vmatprep.subr.bf16.mxu0 0
        %3604 = vmatpush1.bf16.msra.mxu0 0
        %3605 = vmatprep.subr.bf16.mxu0 0
        %3606 = vmatpush1.bf16.msra.mxu0 0
        %3607 = vmatprep.subr.bf16.mxu0 0
        %3608 = vmatpush1.bf16.msra.mxu0 0
        %3609 = vmatprep.subr.bf16.mxu0 0
        %3610 = vmatpush1.bf16.msra.mxu0 0
        %3611 = vmatprep.subr.bf16.mxu0 0
        %3612 = vmatpush1.bf16.msra.mxu0 0
        %3613 = vmatprep.subr.bf16.mxu0 0
        %3614 = vmatpush1.bf16.msra.mxu0 0
        %3615 = vmatprep.subr.bf16.mxu0 0
        %3616 = vmatpush1.bf16.msra.mxu0 0
        %3617 = vmatprep.subr.bf16.mxu0 0
        %3618 = vmatpush1.bf16.msra.mxu0 0
        %3619 = vmatprep.subr.bf16.mxu0 0
        %3620 = vmatpush1.bf16.msra.mxu0 0
        %3621 = vmatprep.subr.bf16.mxu0 0
        %3622 = vmatpush1.bf16.msra.mxu0 0
        %3623 = vmatprep.mubr.bf16.mxu0 0
        %3624 = vmatmul.mubr.bf16.gmra.mrb[0].mxu0 %v3460
        %v3625 = vpop.f32.mrb[0].mxu0
        %v3626 = vadd.f32 0.0, %v3625
        %v3627 = vpop.f32.mrb[0].mxu0
        %v3628 = vadd.f32 0.0, %v3627
        %v3629 = vpop.f32.mrb[0].mxu0
        %v3630 = vadd.f32 0.0, %v3629
        %v3631 = vpop.f32.mrb[0].mxu0
        %v3632 = vadd.f32 0.0, %v3631
        %3633 = vdwg.mxu0
        %3634 = vmatprep.subr.bf16.mxu0 %v3448
        %3635 = vmatpush1.bf16.msra.mxu0 %v3447
        %3636 = vmatprep.subr.bf16.mxu0 0
        %3637 = vmatpush1.bf16.msra.mxu0 0
        %3638 = vmatprep.subr.bf16.mxu0 0
        %3639 = vmatpush1.bf16.msra.mxu0 0
        %3640 = vmatprep.subr.bf16.mxu0 0
        %3641 = vmatpush1.bf16.msra.mxu0 0
        %3642 = vmatprep.subr.bf16.mxu0 0
        %3643 = vmatpush1.bf16.msra.mxu0 0
        %3644 = vmatprep.subr.bf16.mxu0 0
        %3645 = vmatpush1.bf16.msra.mxu0 0
        %3646 = vmatprep.subr.bf16.mxu0 0
        %3647 = vmatpush1.bf16.msra.mxu0 0
        %3648 = vmatprep.subr.bf16.mxu0 0
        %3649 = vmatpush1.bf16.msra.mxu0 0
        %3650 = vmatprep.subr.bf16.mxu0 0
        %3651 = vmatpush1.bf16.msra.mxu0 0
        %3652 = vmatprep.subr.bf16.mxu0 0
        %3653 = vmatpush1.bf16.msra.mxu0 0
        %3654 = vmatprep.subr.bf16.mxu0 0
        %3655 = vmatpush1.bf16.msra.mxu0 0
        %3656 = vmatprep.subr.bf16.mxu0 0
        %3657 = vmatpush1.bf16.msra.mxu0 0
        %3658 = vmatprep.subr.bf16.mxu0 0
        %3659 = vmatpush1.bf16.msra.mxu0 0
        %3660 = vmatprep.subr.bf16.mxu0 0
        %3661 = vmatpush1.bf16.msra.mxu0 0
        %3662 = vmatprep.subr.bf16.mxu0 0
        %3663 = vmatpush1.bf16.msra.mxu0 0
        %3664 = vmatprep.subr.bf16.mxu0 0
        %3665 = vmatpush1.bf16.msra.mxu0 0
        %3666 = vmatprep.mubr.bf16.mxu0 0
        %3667 = vmatmul.mubr.bf16.gmra.mrb[0].mxu0 %v3460
        %v3668 = vpop.f32.mrb[0].mxu0
        %v3669 = vadd.f32 0.0, %v3668
        %v3670 = vpop.f32.mrb[0].mxu0
        %v3671 = vadd.f32 0.0, %v3670
        %v3672 = vpop.f32.mrb[0].mxu0
        %v3673 = vadd.f32 0.0, %v3672
        %v3674 = vpop.f32.mrb[0].mxu0
        %v3675 = vadd.f32 0.0, %v3674
        %3676 = vdwg.mxu0
        %v3677 = vadd.f32 %v3389, %v3497
        %v3678 = vadd.f32 %v3390, %v3499
        %v3679 = vadd.f32 %v3391, %v3540
        %v3680 = vadd.f32 %v3392, %v3542
        %v3681 = vadd.f32 %v3393, %v3583
        %v3682 = vadd.f32 %v3394, %v3585
        %v3683 = vadd.f32 %v3395, %v3626
        %v3684 = vadd.f32 %v3396, %v3628
        %v3685 = vadd.f32 %v3397, %v3669
        %v3686 = vadd.f32 %v3398, %v3671
        %v3687 = vadd.f32 %v3399, %v3501
        %v3688 = vadd.f32 %v3400, %v3503
        %v3689 = vadd.f32 %v3401, %v3544
        %v3690 = vadd.f32 %v3402, %v3546
        %v3691 = vadd.f32 %v3403, %v3587
        %v3692 = vadd.f32 %v3404, %v3589
        %v3693 = vadd.f32 %v3405, %v3630
        %v3694 = vadd.f32 %v3406, %v3632
        %v3695 = vadd.f32 %v3407, %v3673
        %v3696 = vadd.f32 %v3408, %v3675
        %s3697 = scalar_lea.vmem %s0, 80
        %v3698 = vld [vmem:[%s3697] sm:$0xf]
        %v3699 = vld [vmem:[%s3697 + $0x4] sm:$0xf]
        %v3702 = vunpack.c.l.b16 %v3698
        %v3703 = vunpack.c.l.b16 %v3699
        %v3704 = vpack.c.b16 %v3703, %v3702
        %3705 = vrot.lane.b32.xlu0 %v893, 123
        %v3706 = vpop.permute.xlu0 %3705
        %3707 = vrot.lane.b32.xlu0 %v894, 123
        %v3708 = vpop.permute.xlu0 %3707
        %3709 = vrot.lane.b32.xlu0 %v895, 123
        %v3710 = vpop.permute.xlu0 %3709
        %3711 = vrot.lane.b32.xlu0 %v896, 123
        %v3712 = vpop.permute.xlu0 %3711
        %3713 = vrot.lane.b32.xlu0 %v897, 123
        %v3714 = vpop.permute.xlu0 %3713
        %3715 = vrot.lane.b32.xlu0 %v898, 123
        %v3716 = vpop.permute.xlu0 %3715
        %3717 = vrot.lane.b32.xlu0 %v899, 123
        %v3718 = vpop.permute.xlu0 %3717
        %3719 = vrot.lane.b32.xlu0 %v900, 123
        %v3720 = vpop.permute.xlu0 %3719
        %3721 = vrot.lane.b32.xlu0 %v901, 123
        %v3722 = vpop.permute.xlu0 %3721
        %3723 = vrot.lane.b32.xlu0 %v902, 123
        %v3724 = vpop.permute.xlu0 %3723
        %3725 = vrot.lane.b32.xlu0 %v903, 123
        %v3726 = vpop.permute.xlu0 %3725
        %vm3727 = vcmask 1006592
        %v3728 = vsel %vm3727, %v3706, %v3708
        %v3729 = vsel %vm3727, %v3708, %v3710
        %v3730 = vsel %vm3727, %v3710, %v3712
        %v3731 = vsel %vm3727, %v3712, %v3714
        %v3732 = vsel %vm3727, %v3714, %v3716
        %v3733 = vsel %vm3727, %v3716, %v3718
        %v3734 = vsel %vm3727, %v3718, %v3720
        %v3735 = vsel %vm3727, %v3720, %v3722
        %v3736 = vsel %vm3727, %v3722, %v3724
        %v3737 = vsel %vm3727, %v3724, %v3726
        %v3749 = vsel %vm925, %v3704, 0
        %3751 = vmatprep.subr.bf16.mxu0 %v3729
        %3752 = vmatpush1.bf16.msra.mxu0 %v3728
        %3753 = vmatprep.subr.bf16.mxu0 0
        %3754 = vmatpush1.bf16.msra.mxu0 0
        %3755 = vmatprep.subr.bf16.mxu0 0
        %3756 = vmatpush1.bf16.msra.mxu0 0
        %3757 = vmatprep.subr.bf16.mxu0 0
        %3758 = vmatpush1.bf16.msra.mxu0 0
        %3759 = vmatprep.subr.bf16.mxu0 0
        %3760 = vmatpush1.bf16.msra.mxu0 0
        %3761 = vmatprep.subr.bf16.mxu0 0
        %3762 = vmatpush1.bf16.msra.mxu0 0
        %3763 = vmatprep.subr.bf16.mxu0 0
        %3764 = vmatpush1.bf16.msra.mxu0 0
        %3765 = vmatprep.subr.bf16.mxu0 0
        %3766 = vmatpush1.bf16.msra.mxu0 0
        %3767 = vmatprep.subr.bf16.mxu0 0
        %3768 = vmatpush1.bf16.msra.mxu0 0
        %3769 = vmatprep.subr.bf16.mxu0 0
        %3770 = vmatpush1.bf16.msra.mxu0 0
        %3771 = vmatprep.subr.bf16.mxu0 0
        %3772 = vmatpush1.bf16.msra.mxu0 0
        %3773 = vmatprep.subr.bf16.mxu0 0
        %3774 = vmatpush1.bf16.msra.mxu0 0
        %3775 = vmatprep.subr.bf16.mxu0 0
        %3776 = vmatpush1.bf16.msra.mxu0 0
        %3777 = vmatprep.subr.bf16.mxu0 0
        %3778 = vmatpush1.bf16.msra.mxu0 0
        %3779 = vmatprep.subr.bf16.mxu0 0
        %3780 = vmatpush1.bf16.msra.mxu0 0
        %3781 = vmatprep.subr.bf16.mxu0 0
        %3782 = vmatpush1.bf16.msra.mxu0 0
        %3783 = vmatprep.mubr.bf16.mxu0 0
        %3784 = vmatmul.mubr.bf16.gmra.mrb[0].mxu0 %v3749
        %v3785 = vpop.f32.mrb[0].mxu0
        %v3786 = vadd.f32 0.0, %v3785
        %v3787 = vpop.f32.mrb[0].mxu0
        %v3788 = vadd.f32 0.0, %v3787
        %v3789 = vpop.f32.mrb[0].mxu0
        %v3790 = vadd.f32 0.0, %v3789
        %v3791 = vpop.f32.mrb[0].mxu0
        %v3792 = vadd.f32 0.0, %v3791
        %3793 = vdwg.mxu0
        %3794 = vmatprep.subr.bf16.mxu0 %v3731
        %3795 = vmatpush1.bf16.msra.mxu0 %v3730
        %3796 = vmatprep.subr.bf16.mxu0 0
        %3797 = vmatpush1.bf16.msra.mxu0 0
        %3798 = vmatprep.subr.bf16.mxu0 0
        %3799 = vmatpush1.bf16.msra.mxu0 0
        %3800 = vmatprep.subr.bf16.mxu0 0
        %3801 = vmatpush1.bf16.msra.mxu0 0
        %3802 = vmatprep.subr.bf16.mxu0 0
        %3803 = vmatpush1.bf16.msra.mxu0 0
        %3804 = vmatprep.subr.bf16.mxu0 0
        %3805 = vmatpush1.bf16.msra.mxu0 0
        %3806 = vmatprep.subr.bf16.mxu0 0
        %3807 = vmatpush1.bf16.msra.mxu0 0
        %3808 = vmatprep.subr.bf16.mxu0 0
        %3809 = vmatpush1.bf16.msra.mxu0 0
        %3810 = vmatprep.subr.bf16.mxu0 0
        %3811 = vmatpush1.bf16.msra.mxu0 0
        %3812 = vmatprep.subr.bf16.mxu0 0
        %3813 = vmatpush1.bf16.msra.mxu0 0
        %3814 = vmatprep.subr.bf16.mxu0 0
        %3815 = vmatpush1.bf16.msra.mxu0 0
        %3816 = vmatprep.subr.bf16.mxu0 0
        %3817 = vmatpush1.bf16.msra.mxu0 0
        %3818 = vmatprep.subr.bf16.mxu0 0
        %3819 = vmatpush1.bf16.msra.mxu0 0
        %3820 = vmatprep.subr.bf16.mxu0 0
        %3821 = vmatpush1.bf16.msra.mxu0 0
        %3822 = vmatprep.subr.bf16.mxu0 0
        %3823 = vmatpush1.bf16.msra.mxu0 0
        %3824 = vmatprep.subr.bf16.mxu0 0
        %3825 = vmatpush1.bf16.msra.mxu0 0
        %3826 = vmatprep.mubr.bf16.mxu0 0
        %3827 = vmatmul.mubr.bf16.gmra.mrb[0].mxu0 %v3749
        %v3828 = vpop.f32.mrb[0].mxu0
        %v3829 = vadd.f32 0.0, %v3828
        %v3830 = vpop.f32.mrb[0].mxu0
        %v3831 = vadd.f32 0.0, %v3830
        %v3832 = vpop.f32.mrb[0].mxu0
        %v3833 = vadd.f32 0.0, %v3832
        %v3834 = vpop.f32.mrb[0].mxu0
        %v3835 = vadd.f32 0.0, %v3834
        %3836 = vdwg.mxu0
        %3837 = vmatprep.subr.bf16.mxu0 %v3733
        %3838 = vmatpush1.bf16.msra.mxu0 %v3732
        %3839 = vmatprep.subr.bf16.mxu0 0
        %3840 = vmatpush1.bf16.msra.mxu0 0
        %3841 = vmatprep.subr.bf16.mxu0 0
        %3842 = vmatpush1.bf16.msra.mxu0 0
        %3843 = vmatprep.subr.bf16.mxu0 0
        %3844 = vmatpush1.bf16.msra.mxu0 0
        %3845 = vmatprep.subr.bf16.mxu0 0
        %3846 = vmatpush1.bf16.msra.mxu0 0
        %3847 = vmatprep.subr.bf16.mxu0 0
        %3848 = vmatpush1.bf16.msra.mxu0 0
        %3849 = vmatprep.subr.bf16.mxu0 0
        %3850 = vmatpush1.bf16.msra.mxu0 0
        %3851 = vmatprep.subr.bf16.mxu0 0
        %3852 = vmatpush1.bf16.msra.mxu0 0
        %3853 = vmatprep.subr.bf16.mxu0 0
        %3854 = vmatpush1.bf16.msra.mxu0 0
        %3855 = vmatprep.subr.bf16.mxu0 0
        %3856 = vmatpush1.bf16.msra.mxu0 0
        %3857 = vmatprep.subr.bf16.mxu0 0
        %3858 = vmatpush1.bf16.msra.mxu0 0
        %3859 = vmatprep.subr.bf16.mxu0 0
        %3860 = vmatpush1.bf16.msra.mxu0 0
        %3861 = vmatprep.subr.bf16.mxu0 0
        %3862 = vmatpush1.bf16.msra.mxu0 0
        %3863 = vmatprep.subr.bf16.mxu0 0
        %3864 = vmatpush1.bf16.msra.mxu0 0
        %3865 = vmatprep.subr.bf16.mxu0 0
        %3866 = vmatpush1.bf16.msra.mxu0 0
        %3867 = vmatprep.subr.bf16.mxu0 0
        %3868 = vmatpush1.bf16.msra.mxu0 0
        %3869 = vmatprep.mubr.bf16.mxu0 0
        %3870 = vmatmul.mubr.bf16.gmra.mrb[0].mxu0 %v3749
        %v3871 = vpop.f32.mrb[0].mxu0
        %v3872 = vadd.f32 0.0, %v3871
        %v3873 = vpop.f32.mrb[0].mxu0
        %v3874 = vadd.f32 0.0, %v3873
        %v3875 = vpop.f32.mrb[0].mxu0
        %v3876 = vadd.f32 0.0, %v3875
        %v3877 = vpop.f32.mrb[0].mxu0
        %v3878 = vadd.f32 0.0, %v3877
        %3879 = vdwg.mxu0
        %3880 = vmatprep.subr.bf16.mxu0 %v3735
        %3881 = vmatpush1.bf16.msra.mxu0 %v3734
        %3882 = vmatprep.subr.bf16.mxu0 0
        %3883 = vmatpush1.bf16.msra.mxu0 0
        %3884 = vmatprep.subr.bf16.mxu0 0
        %3885 = vmatpush1.bf16.msra.mxu0 0
        %3886 = vmatprep.subr.bf16.mxu0 0
        %3887 = vmatpush1.bf16.msra.mxu0 0
        %3888 = vmatprep.subr.bf16.mxu0 0
        %3889 = vmatpush1.bf16.msra.mxu0 0
        %3890 = vmatprep.subr.bf16.mxu0 0
        %3891 = vmatpush1.bf16.msra.mxu0 0
        %3892 = vmatprep.subr.bf16.mxu0 0
        %3893 = vmatpush1.bf16.msra.mxu0 0
        %3894 = vmatprep.subr.bf16.mxu0 0
        %3895 = vmatpush1.bf16.msra.mxu0 0
        %3896 = vmatprep.subr.bf16.mxu0 0
        %3897 = vmatpush1.bf16.msra.mxu0 0
        %3898 = vmatprep.subr.bf16.mxu0 0
        %3899 = vmatpush1.bf16.msra.mxu0 0
        %3900 = vmatprep.subr.bf16.mxu0 0
        %3901 = vmatpush1.bf16.msra.mxu0 0
        %3902 = vmatprep.subr.bf16.mxu0 0
        %3903 = vmatpush1.bf16.msra.mxu0 0
        %3904 = vmatprep.subr.bf16.mxu0 0
        %3905 = vmatpush1.bf16.msra.mxu0 0
        %3906 = vmatprep.subr.bf16.mxu0 0
        %3907 = vmatpush1.bf16.msra.mxu0 0
        %3908 = vmatprep.subr.bf16.mxu0 0
        %3909 = vmatpush1.bf16.msra.mxu0 0
        %3910 = vmatprep.subr.bf16.mxu0 0
        %3911 = vmatpush1.bf16.msra.mxu0 0
        %3912 = vmatprep.mubr.bf16.mxu0 0
        %3913 = vmatmul.mubr.bf16.gmra.mrb[0].mxu0 %v3749
        %v3914 = vpop.f32.mrb[0].mxu0
        %v3915 = vadd.f32 0.0, %v3914
        %v3916 = vpop.f32.mrb[0].mxu0
        %v3917 = vadd.f32 0.0, %v3916
        %v3918 = vpop.f32.mrb[0].mxu0
        %v3919 = vadd.f32 0.0, %v3918
        %v3920 = vpop.f32.mrb[0].mxu0
        %v3921 = vadd.f32 0.0, %v3920
        %3922 = vdwg.mxu0
        %3923 = vmatprep.subr.bf16.mxu0 %v3737
        %3924 = vmatpush1.bf16.msra.mxu0 %v3736
        %3925 = vmatprep.subr.bf16.mxu0 0
        %3926 = vmatpush1.bf16.msra.mxu0 0
        %3927 = vmatprep.subr.bf16.mxu0 0
        %3928 = vmatpush1.bf16.msra.mxu0 0
        %3929 = vmatprep.subr.bf16.mxu0 0
        %3930 = vmatpush1.bf16.msra.mxu0 0
        %3931 = vmatprep.subr.bf16.mxu0 0
        %3932 = vmatpush1.bf16.msra.mxu0 0
        %3933 = vmatprep.subr.bf16.mxu0 0
        %3934 = vmatpush1.bf16.msra.mxu0 0
        %3935 = vmatprep.subr.bf16.mxu0 0
        %3936 = vmatpush1.bf16.msra.mxu0 0
        %3937 = vmatprep.subr.bf16.mxu0 0
        %3938 = vmatpush1.bf16.msra.mxu0 0
        %3939 = vmatprep.subr.bf16.mxu0 0
        %3940 = vmatpush1.bf16.msra.mxu0 0
        %3941 = vmatprep.subr.bf16.mxu0 0
        %3942 = vmatpush1.bf16.msra.mxu0 0
        %3943 = vmatprep.subr.bf16.mxu0 0
        %3944 = vmatpush1.bf16.msra.mxu0 0
        %3945 = vmatprep.subr.bf16.mxu0 0
        %3946 = vmatpush1.bf16.msra.mxu0 0
        %3947 = vmatprep.subr.bf16.mxu0 0
        %3948 = vmatpush1.bf16.msra.mxu0 0
        %3949 = vmatprep.subr.bf16.mxu0 0
        %3950 = vmatpush1.bf16.msra.mxu0 0
        %3951 = vmatprep.subr.bf16.mxu0 0
        %3952 = vmatpush1.bf16.msra.mxu0 0
        %3953 = vmatprep.subr.bf16.mxu0 0
        %3954 = vmatpush1.bf16.msra.mxu0 0
        %3955 = vmatprep.mubr.bf16.mxu0 0
        %3956 = vmatmul.mubr.bf16.gmra.mrb[0].mxu0 %v3749
        %v3957 = vpop.f32.mrb[0].mxu0
        %v3958 = vadd.f32 0.0, %v3957
        %v3959 = vpop.f32.mrb[0].mxu0
        %v3960 = vadd.f32 0.0, %v3959
        %v3961 = vpop.f32.mrb[0].mxu0
        %v3962 = vadd.f32 0.0, %v3961
        %v3963 = vpop.f32.mrb[0].mxu0
        %v3964 = vadd.f32 0.0, %v3963
        %3965 = vdwg.mxu0
        %v3966 = vadd.f32 %v3677, %v3786
        %v3967 = vadd.f32 %v3678, %v3788
        %v3968 = vadd.f32 %v3679, %v3829
        %v3969 = vadd.f32 %v3680, %v3831
        %v3970 = vadd.f32 %v3681, %v3872
        %v3971 = vadd.f32 %v3682, %v3874
        %v3972 = vadd.f32 %v3683, %v3915
        %v3973 = vadd.f32 %v3684, %v3917
        %v3974 = vadd.f32 %v3685, %v3958
        %v3975 = vadd.f32 %v3686, %v3960
        %v3976 = vadd.f32 %v3687, %v3790
        %v3977 = vadd.f32 %v3688, %v3792
        %v3978 = vadd.f32 %v3689, %v3833
        %v3979 = vadd.f32 %v3690, %v3835
        %v3980 = vadd.f32 %v3691, %v3876
        %v3981 = vadd.f32 %v3692, %v3878
        %v3982 = vadd.f32 %v3693, %v3919
        %v3983 = vadd.f32 %v3694, %v3921
        %v3984 = vadd.f32 %v3695, %v3962
        %v3985 = vadd.f32 %v3696, %v3964
        %s3986 = scalar_lea.vmem %s0, 88
        %v3987 = vld [vmem:[%s3986] sm:$0xf]
        %v3988 = vld [vmem:[%s3986 + $0x4] sm:$0xf]
        %v3991 = vunpack.c.l.b16 %v3987
        %v3992 = vunpack.c.l.b16 %v3988
        %v3993 = vpack.c.b16 %v3992, %v3991
        %3994 = vrot.lane.b32.xlu0 %v904, 123
        %v3995 = vpop.permute.xlu0 %3994
        %3996 = vrot.lane.b32.xlu0 %v905, 123
        %v3997 = vpop.permute.xlu0 %3996
        %3998 = vrot.lane.b32.xlu0 %v906, 123
        %v3999 = vpop.permute.xlu0 %3998
        %4000 = vrot.lane.b32.xlu0 %v907, 123
        %v4001 = vpop.permute.xlu0 %4000
        %4002 = vrot.lane.b32.xlu0 %v908, 123
        %v4003 = vpop.permute.xlu0 %4002
        %4004 = vrot.lane.b32.xlu0 %v909, 123
        %v4005 = vpop.permute.xlu0 %4004
        %4006 = vrot.lane.b32.xlu0 %v910, 123
        %v4007 = vpop.permute.xlu0 %4006
        %4008 = vrot.lane.b32.xlu0 %v911, 123
        %v4009 = vpop.permute.xlu0 %4008
        %4010 = vrot.lane.b32.xlu0 %v912, 123
        %v4011 = vpop.permute.xlu0 %4010
        %4012 = vrot.lane.b32.xlu0 %v913, 123
        %v4013 = vpop.permute.xlu0 %4012
        %4014 = vrot.lane.b32.xlu0 %v914, 123
        %v4015 = vpop.permute.xlu0 %4014
        %v4016 = vsel %vm3727, %v3995, %v3997
        %v4017 = vsel %vm3727, %v3997, %v3999
        %v4018 = vsel %vm3727, %v3999, %v4001
        %v4019 = vsel %vm3727, %v4001, %v4003
        %v4020 = vsel %vm3727, %v4003, %v4005
        %v4021 = vsel %vm3727, %v4005, %v4007
        %v4022 = vsel %vm3727, %v4007, %v4009
        %v4023 = vsel %vm3727, %v4009, %v4011
        %v4024 = vsel %vm3727, %v4011, %v4013
        %v4025 = vsel %vm3727, %v4013, %v4015
        %v4037 = vsel %vm925, %v3993, 0
        %4039 = vmatprep.subr.bf16.mxu0 %v4017
        %4040 = vmatpush1.bf16.msra.mxu0 %v4016
        %4041 = vmatprep.subr.bf16.mxu0 0
        %4042 = vmatpush1.bf16.msra.mxu0 0
        %4043 = vmatprep.subr.bf16.mxu0 0
        %4044 = vmatpush1.bf16.msra.mxu0 0
        %4045 = vmatprep.subr.bf16.mxu0 0
        %4046 = vmatpush1.bf16.msra.mxu0 0
        %4047 = vmatprep.subr.bf16.mxu0 0
        %4048 = vmatpush1.bf16.msra.mxu0 0
        %4049 = vmatprep.subr.bf16.mxu0 0
        %4050 = vmatpush1.bf16.msra.mxu0 0
        %4051 = vmatprep.subr.bf16.mxu0 0
        %4052 = vmatpush1.bf16.msra.mxu0 0
        %4053 = vmatprep.subr.bf16.mxu0 0
        %4054 = vmatpush1.bf16.msra.mxu0 0
        %4055 = vmatprep.subr.bf16.mxu0 0
        %4056 = vmatpush1.bf16.msra.mxu0 0
        %4057 = vmatprep.subr.bf16.mxu0 0
        %4058 = vmatpush1.bf16.msra.mxu0 0
        %4059 = vmatprep.subr.bf16.mxu0 0
        %4060 = vmatpush1.bf16.msra.mxu0 0
        %4061 = vmatprep.subr.bf16.mxu0 0
        %4062 = vmatpush1.bf16.msra.mxu0 0
        %4063 = vmatprep.subr.bf16.mxu0 0
        %4064 = vmatpush1.bf16.msra.mxu0 0
        %4065 = vmatprep.subr.bf16.mxu0 0
        %4066 = vmatpush1.bf16.msra.mxu0 0
        %4067 = vmatprep.subr.bf16.mxu0 0
        %4068 = vmatpush1.bf16.msra.mxu0 0
        %4069 = vmatprep.subr.bf16.mxu0 0
        %4070 = vmatpush1.bf16.msra.mxu0 0
        %4071 = vmatprep.mubr.bf16.mxu0 0
        %4072 = vmatmul.mubr.bf16.gmra.mrb[0].mxu0 %v4037
        %v4073 = vpop.f32.mrb[0].mxu0
        %v4074 = vadd.f32 0.0, %v4073
        %v4075 = vpop.f32.mrb[0].mxu0
        %v4076 = vadd.f32 0.0, %v4075
        %v4077 = vpop.f32.mrb[0].mxu0
        %v4078 = vadd.f32 0.0, %v4077
        %v4079 = vpop.f32.mrb[0].mxu0
        %v4080 = vadd.f32 0.0, %v4079
        %4081 = vdwg.mxu0
        %4082 = vmatprep.subr.bf16.mxu0 %v4019
        %4083 = vmatpush1.bf16.msra.mxu0 %v4018
        %4084 = vmatprep.subr.bf16.mxu0 0
        %4085 = vmatpush1.bf16.msra.mxu0 0
        %4086 = vmatprep.subr.bf16.mxu0 0
        %4087 = vmatpush1.bf16.msra.mxu0 0
        %4088 = vmatprep.subr.bf16.mxu0 0
        %4089 = vmatpush1.bf16.msra.mxu0 0
        %4090 = vmatprep.subr.bf16.mxu0 0
        %4091 = vmatpush1.bf16.msra.mxu0 0
        %4092 = vmatprep.subr.bf16.mxu0 0
        %4093 = vmatpush1.bf16.msra.mxu0 0
        %4094 = vmatprep.subr.bf16.mxu0 0
        %4095 = vmatpush1.bf16.msra.mxu0 0
        %4096 = vmatprep.subr.bf16.mxu0 0
        %4097 = vmatpush1.bf16.msra.mxu0 0
        %4098 = vmatprep.subr.bf16.mxu0 0
        %4099 = vmatpush1.bf16.msra.mxu0 0
        %4100 = vmatprep.subr.bf16.mxu0 0
        %4101 = vmatpush1.bf16.msra.mxu0 0
        %4102 = vmatprep.subr.bf16.mxu0 0
        %4103 = vmatpush1.bf16.msra.mxu0 0
        %4104 = vmatprep.subr.bf16.mxu0 0
        %4105 = vmatpush1.bf16.msra.mxu0 0
        %4106 = vmatprep.subr.bf16.mxu0 0
        %4107 = vmatpush1.bf16.msra.mxu0 0
        %4108 = vmatprep.subr.bf16.mxu0 0
        %4109 = vmatpush1.bf16.msra.mxu0 0
        %4110 = vmatprep.subr.bf16.mxu0 0
        %4111 = vmatpush1.bf16.msra.mxu0 0
        %4112 = vmatprep.subr.bf16.mxu0 0
        %4113 = vmatpush1.bf16.msra.mxu0 0
        %4114 = vmatprep.mubr.bf16.mxu0 0
        %4115 = vmatmul.mubr.bf16.gmra.mrb[0].mxu0 %v4037
        %v4116 = vpop.f32.mrb[0].mxu0
        %v4117 = vadd.f32 0.0, %v4116
        %v4118 = vpop.f32.mrb[0].mxu0
        %v4119 = vadd.f32 0.0, %v4118
        %v4120 = vpop.f32.mrb[0].mxu0
        %v4121 = vadd.f32 0.0, %v4120
        %v4122 = vpop.f32.mrb[0].mxu0
        %v4123 = vadd.f32 0.0, %v4122
        %4124 = vdwg.mxu0
        %4125 = vmatprep.subr.bf16.mxu0 %v4021
        %4126 = vmatpush1.bf16.msra.mxu0 %v4020
        %4127 = vmatprep.subr.bf16.mxu0 0
        %4128 = vmatpush1.bf16.msra.mxu0 0
        %4129 = vmatprep.subr.bf16.mxu0 0
        %4130 = vmatpush1.bf16.msra.mxu0 0
        %4131 = vmatprep.subr.bf16.mxu0 0
        %4132 = vmatpush1.bf16.msra.mxu0 0
        %4133 = vmatprep.subr.bf16.mxu0 0
        %4134 = vmatpush1.bf16.msra.mxu0 0
        %4135 = vmatprep.subr.bf16.mxu0 0
        %4136 = vmatpush1.bf16.msra.mxu0 0
        %4137 = vmatprep.subr.bf16.mxu0 0
        %4138 = vmatpush1.bf16.msra.mxu0 0
        %4139 = vmatprep.subr.bf16.mxu0 0
        %4140 = vmatpush1.bf16.msra.mxu0 0
        %4141 = vmatprep.subr.bf16.mxu0 0
        %4142 = vmatpush1.bf16.msra.mxu0 0
        %4143 = vmatprep.subr.bf16.mxu0 0
        %4144 = vmatpush1.bf16.msra.mxu0 0
        %4145 = vmatprep.subr.bf16.mxu0 0
        %4146 = vmatpush1.bf16.msra.mxu0 0
        %4147 = vmatprep.subr.bf16.mxu0 0
        %4148 = vmatpush1.bf16.msra.mxu0 0
        %4149 = vmatprep.subr.bf16.mxu0 0
        %4150 = vmatpush1.bf16.msra.mxu0 0
        %4151 = vmatprep.subr.bf16.mxu0 0
        %4152 = vmatpush1.bf16.msra.mxu0 0
        %4153 = vmatprep.subr.bf16.mxu0 0
        %4154 = vmatpush1.bf16.msra.mxu0 0
        %4155 = vmatprep.subr.bf16.mxu0 0
        %4156 = vmatpush1.bf16.msra.mxu0 0
        %4157 = vmatprep.mubr.bf16.mxu0 0
        %4158 = vmatmul.mubr.bf16.gmra.mrb[0].mxu0 %v4037
        %v4159 = vpop.f32.mrb[0].mxu0
        %v4160 = vadd.f32 0.0, %v4159
        %v4161 = vpop.f32.mrb[0].mxu0
        %v4162 = vadd.f32 0.0, %v4161
        %v4163 = vpop.f32.mrb[0].mxu0
        %v4164 = vadd.f32 0.0, %v4163
        %v4165 = vpop.f32.mrb[0].mxu0
        %v4166 = vadd.f32 0.0, %v4165
        %4167 = vdwg.mxu0
        %4168 = vmatprep.subr.bf16.mxu0 %v4023
        %4169 = vmatpush1.bf16.msra.mxu0 %v4022
        %4170 = vmatprep.subr.bf16.mxu0 0
        %4171 = vmatpush1.bf16.msra.mxu0 0
        %4172 = vmatprep.subr.bf16.mxu0 0
        %4173 = vmatpush1.bf16.msra.mxu0 0
        %4174 = vmatprep.subr.bf16.mxu0 0
        %4175 = vmatpush1.bf16.msra.mxu0 0
        %4176 = vmatprep.subr.bf16.mxu0 0
        %4177 = vmatpush1.bf16.msra.mxu0 0
        %4178 = vmatprep.subr.bf16.mxu0 0
        %4179 = vmatpush1.bf16.msra.mxu0 0
        %4180 = vmatprep.subr.bf16.mxu0 0
        %4181 = vmatpush1.bf16.msra.mxu0 0
        %4182 = vmatprep.subr.bf16.mxu0 0
        %4183 = vmatpush1.bf16.msra.mxu0 0
        %4184 = vmatprep.subr.bf16.mxu0 0
        %4185 = vmatpush1.bf16.msra.mxu0 0
        %4186 = vmatprep.subr.bf16.mxu0 0
        %4187 = vmatpush1.bf16.msra.mxu0 0
        %4188 = vmatprep.subr.bf16.mxu0 0
        %4189 = vmatpush1.bf16.msra.mxu0 0
        %4190 = vmatprep.subr.bf16.mxu0 0
        %4191 = vmatpush1.bf16.msra.mxu0 0
        %4192 = vmatprep.subr.bf16.mxu0 0
        %4193 = vmatpush1.bf16.msra.mxu0 0
        %4194 = vmatprep.subr.bf16.mxu0 0
        %4195 = vmatpush1.bf16.msra.mxu0 0
        %4196 = vmatprep.subr.bf16.mxu0 0
        %4197 = vmatpush1.bf16.msra.mxu0 0
        %4198 = vmatprep.subr.bf16.mxu0 0
        %4199 = vmatpush1.bf16.msra.mxu0 0
        %4200 = vmatprep.mubr.bf16.mxu0 0
        %4201 = vmatmul.mubr.bf16.gmra.mrb[0].mxu0 %v4037
        %v4202 = vpop.f32.mrb[0].mxu0
        %v4203 = vadd.f32 0.0, %v4202
        %v4204 = vpop.f32.mrb[0].mxu0
        %v4205 = vadd.f32 0.0, %v4204
        %v4206 = vpop.f32.mrb[0].mxu0
        %v4207 = vadd.f32 0.0, %v4206
        %v4208 = vpop.f32.mrb[0].mxu0
        %v4209 = vadd.f32 0.0, %v4208
        %4210 = vdwg.mxu0
        %4211 = vmatprep.subr.bf16.mxu0 %v4025
        %4212 = vmatpush1.bf16.msra.mxu0 %v4024
        %4213 = vmatprep.subr.bf16.mxu0 0
        %4214 = vmatpush1.bf16.msra.mxu0 0
        %4215 = vmatprep.subr.bf16.mxu0 0
        %4216 = vmatpush1.bf16.msra.mxu0 0
        %4217 = vmatprep.subr.bf16.mxu0 0
        %4218 = vmatpush1.bf16.msra.mxu0 0
        %4219 = vmatprep.subr.bf16.mxu0 0
        %4220 = vmatpush1.bf16.msra.mxu0 0
        %4221 = vmatprep.subr.bf16.mxu0 0
        %4222 = vmatpush1.bf16.msra.mxu0 0
        %4223 = vmatprep.subr.bf16.mxu0 0
        %4224 = vmatpush1.bf16.msra.mxu0 0
        %4225 = vmatprep.subr.bf16.mxu0 0
        %4226 = vmatpush1.bf16.msra.mxu0 0
        %4227 = vmatprep.subr.bf16.mxu0 0
        %4228 = vmatpush1.bf16.msra.mxu0 0
        %4229 = vmatprep.subr.bf16.mxu0 0
        %4230 = vmatpush1.bf16.msra.mxu0 0
        %4231 = vmatprep.subr.bf16.mxu0 0
        %4232 = vmatpush1.bf16.msra.mxu0 0
        %4233 = vmatprep.subr.bf16.mxu0 0
        %4234 = vmatpush1.bf16.msra.mxu0 0
        %4235 = vmatprep.subr.bf16.mxu0 0
        %4236 = vmatpush1.bf16.msra.mxu0 0
        %4237 = vmatprep.subr.bf16.mxu0 0
        %4238 = vmatpush1.bf16.msra.mxu0 0
        %4239 = vmatprep.subr.bf16.mxu0 0
        %4240 = vmatpush1.bf16.msra.mxu0 0
        %4241 = vmatprep.subr.bf16.mxu0 0
        %4242 = vmatpush1.bf16.msra.mxu0 0
        %4243 = vmatprep.mubr.bf16.mxu0 0
        %4244 = vmatmul.mubr.bf16.gmra.mrb[0].mxu0 %v4037
        %v4245 = vpop.f32.mrb[0].mxu0
        %v4246 = vadd.f32 0.0, %v4245
        %v4247 = vpop.f32.mrb[0].mxu0
        %v4248 = vadd.f32 0.0, %v4247
        %v4249 = vpop.f32.mrb[0].mxu0
        %v4250 = vadd.f32 0.0, %v4249
        %v4251 = vpop.f32.mrb[0].mxu0
        %v4252 = vadd.f32 0.0, %v4251
        %4253 = vdwg.mxu0
        %v4254 = vadd.f32 %v3966, %v4074
        %v4255 = vadd.f32 %v3967, %v4076
        %v4256 = vadd.f32 %v3968, %v4117
        %v4257 = vadd.f32 %v3969, %v4119
        %v4258 = vadd.f32 %v3970, %v4160
        %v4259 = vadd.f32 %v3971, %v4162
        %v4260 = vadd.f32 %v3972, %v4203
        %v4261 = vadd.f32 %v3973, %v4205
        %v4262 = vadd.f32 %v3974, %v4246
        %v4263 = vadd.f32 %v3975, %v4248
        %v4264 = vadd.f32 %v3976, %v4078
        %v4265 = vadd.f32 %v3977, %v4080
        %v4266 = vadd.f32 %v3978, %v4121
        %v4267 = vadd.f32 %v3979, %v4123
        %v4268 = vadd.f32 %v3980, %v4164
        %v4269 = vadd.f32 %v3981, %v4166
        %v4270 = vadd.f32 %v3982, %v4207
        %v4271 = vadd.f32 %v3983, %v4209
        %v4272 = vadd.f32 %v3984, %v4250
        %v4273 = vadd.f32 %v3985, %v4252
        %s4274 = scalar_lea.vmem %s0, 96
        %v4275 = vld [vmem:[%s4274] sm:$0xf]
        %v4276 = vld [vmem:[%s4274 + $0x4] sm:$0xf]
        %v4279 = vunpack.c.l.b16 %v4275
        %v4280 = vunpack.c.l.b16 %v4276
        %v4281 = vpack.c.b16 %v4280, %v4279
        %4282 = vrot.lane.b32.xlu0 %v893, 122
        %v4283 = vpop.permute.xlu0 %4282
        %4284 = vrot.lane.b32.xlu0 %v894, 122
        %v4285 = vpop.permute.xlu0 %4284
        %4286 = vrot.lane.b32.xlu0 %v895, 122
        %v4287 = vpop.permute.xlu0 %4286
        %4288 = vrot.lane.b32.xlu0 %v896, 122
        %v4289 = vpop.permute.xlu0 %4288
        %4290 = vrot.lane.b32.xlu0 %v897, 122
        %v4291 = vpop.permute.xlu0 %4290
        %4292 = vrot.lane.b32.xlu0 %v898, 122
        %v4293 = vpop.permute.xlu0 %4292
        %4294 = vrot.lane.b32.xlu0 %v899, 122
        %v4295 = vpop.permute.xlu0 %4294
        %4296 = vrot.lane.b32.xlu0 %v900, 122
        %v4297 = vpop.permute.xlu0 %4296
        %4298 = vrot.lane.b32.xlu0 %v901, 122
        %v4299 = vpop.permute.xlu0 %4298
        %4300 = vrot.lane.b32.xlu0 %v902, 122
        %v4301 = vpop.permute.xlu0 %4300
        %4302 = vrot.lane.b32.xlu0 %v903, 122
        %v4303 = vpop.permute.xlu0 %4302
        %vm4304 = vcmask 998400
        %v4305 = vsel %vm4304, %v4283, %v4285
        %v4306 = vsel %vm4304, %v4285, %v4287
        %v4307 = vsel %vm4304, %v4287, %v4289
        %v4308 = vsel %vm4304, %v4289, %v4291
        %v4309 = vsel %vm4304, %v4291, %v4293
        %v4310 = vsel %vm4304, %v4293, %v4295
        %v4311 = vsel %vm4304, %v4295, %v4297
        %v4312 = vsel %vm4304, %v4297, %v4299
        %v4313 = vsel %vm4304, %v4299, %v4301
        %v4314 = vsel %vm4304, %v4301, %v4303
        %v4326 = vsel %vm925, %v4281, 0
        %4328 = vmatprep.subr.bf16.mxu0 %v4306
        %4329 = vmatpush1.bf16.msra.mxu0 %v4305
        %4330 = vmatprep.subr.bf16.mxu0 0
        %4331 = vmatpush1.bf16.msra.mxu0 0
        %4332 = vmatprep.subr.bf16.mxu0 0
        %4333 = vmatpush1.bf16.msra.mxu0 0
        %4334 = vmatprep.subr.bf16.mxu0 0
        %4335 = vmatpush1.bf16.msra.mxu0 0
        %4336 = vmatprep.subr.bf16.mxu0 0
        %4337 = vmatpush1.bf16.msra.mxu0 0
        %4338 = vmatprep.subr.bf16.mxu0 0
        %4339 = vmatpush1.bf16.msra.mxu0 0
        %4340 = vmatprep.subr.bf16.mxu0 0
        %4341 = vmatpush1.bf16.msra.mxu0 0
        %4342 = vmatprep.subr.bf16.mxu0 0
        %4343 = vmatpush1.bf16.msra.mxu0 0
        %4344 = vmatprep.subr.bf16.mxu0 0
        %4345 = vmatpush1.bf16.msra.mxu0 0
        %4346 = vmatprep.subr.bf16.mxu0 0
        %4347 = vmatpush1.bf16.msra.mxu0 0
        %4348 = vmatprep.subr.bf16.mxu0 0
        %4349 = vmatpush1.bf16.msra.mxu0 0
        %4350 = vmatprep.subr.bf16.mxu0 0
        %4351 = vmatpush1.bf16.msra.mxu0 0
        %4352 = vmatprep.subr.bf16.mxu0 0
        %4353 = vmatpush1.bf16.msra.mxu0 0
        %4354 = vmatprep.subr.bf16.mxu0 0
        %4355 = vmatpush1.bf16.msra.mxu0 0
        %4356 = vmatprep.subr.bf16.mxu0 0
        %4357 = vmatpush1.bf16.msra.mxu0 0
        %4358 = vmatprep.subr.bf16.mxu0 0
        %4359 = vmatpush1.bf16.msra.mxu0 0
        %4360 = vmatprep.mubr.bf16.mxu0 0
        %4361 = vmatmul.mubr.bf16.gmra.mrb[0].mxu0 %v4326
        %v4362 = vpop.f32.mrb[0].mxu0
        %v4363 = vadd.f32 0.0, %v4362
        %v4364 = vpop.f32.mrb[0].mxu0
        %v4365 = vadd.f32 0.0, %v4364
        %v4366 = vpop.f32.mrb[0].mxu0
        %v4367 = vadd.f32 0.0, %v4366
        %v4368 = vpop.f32.mrb[0].mxu0
        %v4369 = vadd.f32 0.0, %v4368
        %4370 = vdwg.mxu0
        %4371 = vmatprep.subr.bf16.mxu0 %v4308
        %4372 = vmatpush1.bf16.msra.mxu0 %v4307
        %4373 = vmatprep.subr.bf16.mxu0 0
        %4374 = vmatpush1.bf16.msra.mxu0 0
        %4375 = vmatprep.subr.bf16.mxu0 0
        %4376 = vmatpush1.bf16.msra.mxu0 0
        %4377 = vmatprep.subr.bf16.mxu0 0
        %4378 = vmatpush1.bf16.msra.mxu0 0
        %4379 = vmatprep.subr.bf16.mxu0 0
        %4380 = vmatpush1.bf16.msra.mxu0 0
        %4381 = vmatprep.subr.bf16.mxu0 0
        %4382 = vmatpush1.bf16.msra.mxu0 0
        %4383 = vmatprep.subr.bf16.mxu0 0
        %4384 = vmatpush1.bf16.msra.mxu0 0
        %4385 = vmatprep.subr.bf16.mxu0 0
        %4386 = vmatpush1.bf16.msra.mxu0 0
        %4387 = vmatprep.subr.bf16.mxu0 0
        %4388 = vmatpush1.bf16.msra.mxu0 0
        %4389 = vmatprep.subr.bf16.mxu0 0
        %4390 = vmatpush1.bf16.msra.mxu0 0
        %4391 = vmatprep.subr.bf16.mxu0 0
        %4392 = vmatpush1.bf16.msra.mxu0 0
        %4393 = vmatprep.subr.bf16.mxu0 0
        %4394 = vmatpush1.bf16.msra.mxu0 0
        %4395 = vmatprep.subr.bf16.mxu0 0
        %4396 = vmatpush1.bf16.msra.mxu0 0
        %4397 = vmatprep.subr.bf16.mxu0 0
        %4398 = vmatpush1.bf16.msra.mxu0 0
        %4399 = vmatprep.subr.bf16.mxu0 0
        %4400 = vmatpush1.bf16.msra.mxu0 0
        %4401 = vmatprep.subr.bf16.mxu0 0
        %4402 = vmatpush1.bf16.msra.mxu0 0
        %4403 = vmatprep.mubr.bf16.mxu0 0
        %4404 = vmatmul.mubr.bf16.gmra.mrb[0].mxu0 %v4326
        %v4405 = vpop.f32.mrb[0].mxu0
        %v4406 = vadd.f32 0.0, %v4405
        %v4407 = vpop.f32.mrb[0].mxu0
        %v4408 = vadd.f32 0.0, %v4407
        %v4409 = vpop.f32.mrb[0].mxu0
        %v4410 = vadd.f32 0.0, %v4409
        %v4411 = vpop.f32.mrb[0].mxu0
        %v4412 = vadd.f32 0.0, %v4411
        %4413 = vdwg.mxu0
        %4414 = vmatprep.subr.bf16.mxu0 %v4310
        %4415 = vmatpush1.bf16.msra.mxu0 %v4309
        %4416 = vmatprep.subr.bf16.mxu0 0
        %4417 = vmatpush1.bf16.msra.mxu0 0
        %4418 = vmatprep.subr.bf16.mxu0 0
        %4419 = vmatpush1.bf16.msra.mxu0 0
        %4420 = vmatprep.subr.bf16.mxu0 0
        %4421 = vmatpush1.bf16.msra.mxu0 0
        %4422 = vmatprep.subr.bf16.mxu0 0
        %4423 = vmatpush1.bf16.msra.mxu0 0
        %4424 = vmatprep.subr.bf16.mxu0 0
        %4425 = vmatpush1.bf16.msra.mxu0 0
        %4426 = vmatprep.subr.bf16.mxu0 0
        %4427 = vmatpush1.bf16.msra.mxu0 0
        %4428 = vmatprep.subr.bf16.mxu0 0
        %4429 = vmatpush1.bf16.msra.mxu0 0
        %4430 = vmatprep.subr.bf16.mxu0 0
        %4431 = vmatpush1.bf16.msra.mxu0 0
        %4432 = vmatprep.subr.bf16.mxu0 0
        %4433 = vmatpush1.bf16.msra.mxu0 0
        %4434 = vmatprep.subr.bf16.mxu0 0
        %4435 = vmatpush1.bf16.msra.mxu0 0
        %4436 = vmatprep.subr.bf16.mxu0 0
        %4437 = vmatpush1.bf16.msra.mxu0 0
        %4438 = vmatprep.subr.bf16.mxu0 0
        %4439 = vmatpush1.bf16.msra.mxu0 0
        %4440 = vmatprep.subr.bf16.mxu0 0
        %4441 = vmatpush1.bf16.msra.mxu0 0
        %4442 = vmatprep.subr.bf16.mxu0 0
        %4443 = vmatpush1.bf16.msra.mxu0 0
        %4444 = vmatprep.subr.bf16.mxu0 0
        %4445 = vmatpush1.bf16.msra.mxu0 0
        %4446 = vmatprep.mubr.bf16.mxu0 0
        %4447 = vmatmul.mubr.bf16.gmra.mrb[0].mxu0 %v4326
        %v4448 = vpop.f32.mrb[0].mxu0
        %v4449 = vadd.f32 0.0, %v4448
        %v4450 = vpop.f32.mrb[0].mxu0
        %v4451 = vadd.f32 0.0, %v4450
        %v4452 = vpop.f32.mrb[0].mxu0
        %v4453 = vadd.f32 0.0, %v4452
        %v4454 = vpop.f32.mrb[0].mxu0
        %v4455 = vadd.f32 0.0, %v4454
        %4456 = vdwg.mxu0
        %4457 = vmatprep.subr.bf16.mxu0 %v4312
        %4458 = vmatpush1.bf16.msra.mxu0 %v4311
        %4459 = vmatprep.subr.bf16.mxu0 0
        %4460 = vmatpush1.bf16.msra.mxu0 0
        %4461 = vmatprep.subr.bf16.mxu0 0
        %4462 = vmatpush1.bf16.msra.mxu0 0
        %4463 = vmatprep.subr.bf16.mxu0 0
        %4464 = vmatpush1.bf16.msra.mxu0 0
        %4465 = vmatprep.subr.bf16.mxu0 0
        %4466 = vmatpush1.bf16.msra.mxu0 0
        %4467 = vmatprep.subr.bf16.mxu0 0
        %4468 = vmatpush1.bf16.msra.mxu0 0
        %4469 = vmatprep.subr.bf16.mxu0 0
        %4470 = vmatpush1.bf16.msra.mxu0 0
        %4471 = vmatprep.subr.bf16.mxu0 0
        %4472 = vmatpush1.bf16.msra.mxu0 0
        %4473 = vmatprep.subr.bf16.mxu0 0
        %4474 = vmatpush1.bf16.msra.mxu0 0
        %4475 = vmatprep.subr.bf16.mxu0 0
        %4476 = vmatpush1.bf16.msra.mxu0 0
        %4477 = vmatprep.subr.bf16.mxu0 0
        %4478 = vmatpush1.bf16.msra.mxu0 0
        %4479 = vmatprep.subr.bf16.mxu0 0
        %4480 = vmatpush1.bf16.msra.mxu0 0
        %4481 = vmatprep.subr.bf16.mxu0 0
        %4482 = vmatpush1.bf16.msra.mxu0 0
        %4483 = vmatprep.subr.bf16.mxu0 0
        %4484 = vmatpush1.bf16.msra.mxu0 0
        %4485 = vmatprep.subr.bf16.mxu0 0
        %4486 = vmatpush1.bf16.msra.mxu0 0
        %4487 = vmatprep.subr.bf16.mxu0 0
        %4488 = vmatpush1.bf16.msra.mxu0 0
        %4489 = vmatprep.mubr.bf16.mxu0 0
        %4490 = vmatmul.mubr.bf16.gmra.mrb[0].mxu0 %v4326
        %v4491 = vpop.f32.mrb[0].mxu0
        %v4492 = vadd.f32 0.0, %v4491
        %v4493 = vpop.f32.mrb[0].mxu0
        %v4494 = vadd.f32 0.0, %v4493
        %v4495 = vpop.f32.mrb[0].mxu0
        %v4496 = vadd.f32 0.0, %v4495
        %v4497 = vpop.f32.mrb[0].mxu0
        %v4498 = vadd.f32 0.0, %v4497
        %4499 = vdwg.mxu0
        %4500 = vmatprep.subr.bf16.mxu0 %v4314
        %4501 = vmatpush1.bf16.msra.mxu0 %v4313
        %4502 = vmatprep.subr.bf16.mxu0 0
        %4503 = vmatpush1.bf16.msra.mxu0 0
        %4504 = vmatprep.subr.bf16.mxu0 0
        %4505 = vmatpush1.bf16.msra.mxu0 0
        %4506 = vmatprep.subr.bf16.mxu0 0
        %4507 = vmatpush1.bf16.msra.mxu0 0
        %4508 = vmatprep.subr.bf16.mxu0 0
        %4509 = vmatpush1.bf16.msra.mxu0 0
        %4510 = vmatprep.subr.bf16.mxu0 0
        %4511 = vmatpush1.bf16.msra.mxu0 0
        %4512 = vmatprep.subr.bf16.mxu0 0
        %4513 = vmatpush1.bf16.msra.mxu0 0
        %4514 = vmatprep.subr.bf16.mxu0 0
        %4515 = vmatpush1.bf16.msra.mxu0 0
        %4516 = vmatprep.subr.bf16.mxu0 0
        %4517 = vmatpush1.bf16.msra.mxu0 0
        %4518 = vmatprep.subr.bf16.mxu0 0
        %4519 = vmatpush1.bf16.msra.mxu0 0
        %4520 = vmatprep.subr.bf16.mxu0 0
        %4521 = vmatpush1.bf16.msra.mxu0 0
        %4522 = vmatprep.subr.bf16.mxu0 0
        %4523 = vmatpush1.bf16.msra.mxu0 0
        %4524 = vmatprep.subr.bf16.mxu0 0
        %4525 = vmatpush1.bf16.msra.mxu0 0
        %4526 = vmatprep.subr.bf16.mxu0 0
        %4527 = vmatpush1.bf16.msra.mxu0 0
        %4528 = vmatprep.subr.bf16.mxu0 0
        %4529 = vmatpush1.bf16.msra.mxu0 0
        %4530 = vmatprep.subr.bf16.mxu0 0
        %4531 = vmatpush1.bf16.msra.mxu0 0
        %4532 = vmatprep.mubr.bf16.mxu0 0
        %4533 = vmatmul.mubr.bf16.gmra.mrb[0].mxu0 %v4326
        %v4534 = vpop.f32.mrb[0].mxu0
        %v4535 = vadd.f32 0.0, %v4534
        %v4536 = vpop.f32.mrb[0].mxu0
        %v4537 = vadd.f32 0.0, %v4536
        %v4538 = vpop.f32.mrb[0].mxu0
        %v4539 = vadd.f32 0.0, %v4538
        %v4540 = vpop.f32.mrb[0].mxu0
        %v4541 = vadd.f32 0.0, %v4540
        %4542 = vdwg.mxu0
        %v4543 = vadd.f32 %v4254, %v4363
        %v4544 = vadd.f32 %v4255, %v4365
        %v4545 = vadd.f32 %v4256, %v4406
        %v4546 = vadd.f32 %v4257, %v4408
        %v4547 = vadd.f32 %v4258, %v4449
        %v4548 = vadd.f32 %v4259, %v4451
        %v4549 = vadd.f32 %v4260, %v4492
        %v4550 = vadd.f32 %v4261, %v4494
        %v4551 = vadd.f32 %v4262, %v4535
        %v4552 = vadd.f32 %v4263, %v4537
        %v4553 = vadd.f32 %v4264, %v4367
        %v4554 = vadd.f32 %v4265, %v4369
        %v4555 = vadd.f32 %v4266, %v4410
        %v4556 = vadd.f32 %v4267, %v4412
        %v4557 = vadd.f32 %v4268, %v4453
        %v4558 = vadd.f32 %v4269, %v4455
        %v4559 = vadd.f32 %v4270, %v4496
        %v4560 = vadd.f32 %v4271, %v4498
        %v4561 = vadd.f32 %v4272, %v4539
        %v4562 = vadd.f32 %v4273, %v4541
        %s4563 = scalar_lea.vmem %s0, 104
        %v4564 = vld [vmem:[%s4563] sm:$0xf]
        %v4565 = vld [vmem:[%s4563 + $0x4] sm:$0xf]
        %v4568 = vunpack.c.l.b16 %v4564
        %v4569 = vunpack.c.l.b16 %v4565
        %v4570 = vpack.c.b16 %v4569, %v4568
        %4571 = vrot.lane.b32.xlu0 %v904, 122
        %v4572 = vpop.permute.xlu0 %4571
        %4573 = vrot.lane.b32.xlu0 %v905, 122
        %v4574 = vpop.permute.xlu0 %4573
        %4575 = vrot.lane.b32.xlu0 %v906, 122
        %v4576 = vpop.permute.xlu0 %4575
        %4577 = vrot.lane.b32.xlu0 %v907, 122
        %v4578 = vpop.permute.xlu0 %4577
        %4579 = vrot.lane.b32.xlu0 %v908, 122
        %v4580 = vpop.permute.xlu0 %4579
        %4581 = vrot.lane.b32.xlu0 %v909, 122
        %v4582 = vpop.permute.xlu0 %4581
        %4583 = vrot.lane.b32.xlu0 %v910, 122
        %v4584 = vpop.permute.xlu0 %4583
        %4585 = vrot.lane.b32.xlu0 %v911, 122
        %v4586 = vpop.permute.xlu0 %4585
        %4587 = vrot.lane.b32.xlu0 %v912, 122
        %v4588 = vpop.permute.xlu0 %4587
        %4589 = vrot.lane.b32.xlu0 %v913, 122
        %v4590 = vpop.permute.xlu0 %4589
        %4591 = vrot.lane.b32.xlu0 %v914, 122
        %v4592 = vpop.permute.xlu0 %4591
        %v4593 = vsel %vm4304, %v4572, %v4574
        %v4594 = vsel %vm4304, %v4574, %v4576
        %v4595 = vsel %vm4304, %v4576, %v4578
        %v4596 = vsel %vm4304, %v4578, %v4580
        %v4597 = vsel %vm4304, %v4580, %v4582
        %v4598 = vsel %vm4304, %v4582, %v4584
        %v4599 = vsel %vm4304, %v4584, %v4586
        %v4600 = vsel %vm4304, %v4586, %v4588
        %v4601 = vsel %vm4304, %v4588, %v4590
        %v4602 = vsel %vm4304, %v4590, %v4592
        %v4614 = vsel %vm925, %v4570, 0
        %4616 = vmatprep.subr.bf16.mxu0 %v4594
        %4617 = vmatpush1.bf16.msra.mxu0 %v4593
        %4618 = vmatprep.subr.bf16.mxu0 0
        %4619 = vmatpush1.bf16.msra.mxu0 0
        %4620 = vmatprep.subr.bf16.mxu0 0
        %4621 = vmatpush1.bf16.msra.mxu0 0
        %4622 = vmatprep.subr.bf16.mxu0 0
        %4623 = vmatpush1.bf16.msra.mxu0 0
        %4624 = vmatprep.subr.bf16.mxu0 0
        %4625 = vmatpush1.bf16.msra.mxu0 0
        %4626 = vmatprep.subr.bf16.mxu0 0
        %4627 = vmatpush1.bf16.msra.mxu0 0
        %4628 = vmatprep.subr.bf16.mxu0 0
        %4629 = vmatpush1.bf16.msra.mxu0 0
        %4630 = vmatprep.subr.bf16.mxu0 0
        %4631 = vmatpush1.bf16.msra.mxu0 0
        %4632 = vmatprep.subr.bf16.mxu0 0
        %4633 = vmatpush1.bf16.msra.mxu0 0
        %4634 = vmatprep.subr.bf16.mxu0 0
        %4635 = vmatpush1.bf16.msra.mxu0 0
        %4636 = vmatprep.subr.bf16.mxu0 0
        %4637 = vmatpush1.bf16.msra.mxu0 0
        %4638 = vmatprep.subr.bf16.mxu0 0
        %4639 = vmatpush1.bf16.msra.mxu0 0
        %4640 = vmatprep.subr.bf16.mxu0 0
        %4641 = vmatpush1.bf16.msra.mxu0 0
        %4642 = vmatprep.subr.bf16.mxu0 0
        %4643 = vmatpush1.bf16.msra.mxu0 0
        %4644 = vmatprep.subr.bf16.mxu0 0
        %4645 = vmatpush1.bf16.msra.mxu0 0
        %4646 = vmatprep.subr.bf16.mxu0 0
        %4647 = vmatpush1.bf16.msra.mxu0 0
        %4648 = vmatprep.mubr.bf16.mxu0 0
        %4649 = vmatmul.mubr.bf16.gmra.mrb[0].mxu0 %v4614
        %v4650 = vpop.f32.mrb[0].mxu0
        %v4651 = vadd.f32 0.0, %v4650
        %v4652 = vpop.f32.mrb[0].mxu0
        %v4653 = vadd.f32 0.0, %v4652
        %v4654 = vpop.f32.mrb[0].mxu0
        %v4655 = vadd.f32 0.0, %v4654
        %v4656 = vpop.f32.mrb[0].mxu0
        %v4657 = vadd.f32 0.0, %v4656
        %4658 = vdwg.mxu0
        %4659 = vmatprep.subr.bf16.mxu0 %v4596
        %4660 = vmatpush1.bf16.msra.mxu0 %v4595
        %4661 = vmatprep.subr.bf16.mxu0 0
        %4662 = vmatpush1.bf16.msra.mxu0 0
        %4663 = vmatprep.subr.bf16.mxu0 0
        %4664 = vmatpush1.bf16.msra.mxu0 0
        %4665 = vmatprep.subr.bf16.mxu0 0
        %4666 = vmatpush1.bf16.msra.mxu0 0
        %4667 = vmatprep.subr.bf16.mxu0 0
        %4668 = vmatpush1.bf16.msra.mxu0 0
        %4669 = vmatprep.subr.bf16.mxu0 0
        %4670 = vmatpush1.bf16.msra.mxu0 0
        %4671 = vmatprep.subr.bf16.mxu0 0
        %4672 = vmatpush1.bf16.msra.mxu0 0
        %4673 = vmatprep.subr.bf16.mxu0 0
        %4674 = vmatpush1.bf16.msra.mxu0 0
        %4675 = vmatprep.subr.bf16.mxu0 0
        %4676 = vmatpush1.bf16.msra.mxu0 0
        %4677 = vmatprep.subr.bf16.mxu0 0
        %4678 = vmatpush1.bf16.msra.mxu0 0
        %4679 = vmatprep.subr.bf16.mxu0 0
        %4680 = vmatpush1.bf16.msra.mxu0 0
        %4681 = vmatprep.subr.bf16.mxu0 0
        %4682 = vmatpush1.bf16.msra.mxu0 0
        %4683 = vmatprep.subr.bf16.mxu0 0
        %4684 = vmatpush1.bf16.msra.mxu0 0
        %4685 = vmatprep.subr.bf16.mxu0 0
        %4686 = vmatpush1.bf16.msra.mxu0 0
        %4687 = vmatprep.subr.bf16.mxu0 0
        %4688 = vmatpush1.bf16.msra.mxu0 0
        %4689 = vmatprep.subr.bf16.mxu0 0
        %4690 = vmatpush1.bf16.msra.mxu0 0
        %4691 = vmatprep.mubr.bf16.mxu0 0
        %4692 = vmatmul.mubr.bf16.gmra.mrb[0].mxu0 %v4614
        %v4693 = vpop.f32.mrb[0].mxu0
        %v4694 = vadd.f32 0.0, %v4693
        %v4695 = vpop.f32.mrb[0].mxu0
        %v4696 = vadd.f32 0.0, %v4695
        %v4697 = vpop.f32.mrb[0].mxu0
        %v4698 = vadd.f32 0.0, %v4697
        %v4699 = vpop.f32.mrb[0].mxu0
        %v4700 = vadd.f32 0.0, %v4699
        %4701 = vdwg.mxu0
        %4702 = vmatprep.subr.bf16.mxu0 %v4598
        %4703 = vmatpush1.bf16.msra.mxu0 %v4597
        %4704 = vmatprep.subr.bf16.mxu0 0
        %4705 = vmatpush1.bf16.msra.mxu0 0
        %4706 = vmatprep.subr.bf16.mxu0 0
        %4707 = vmatpush1.bf16.msra.mxu0 0
        %4708 = vmatprep.subr.bf16.mxu0 0
        %4709 = vmatpush1.bf16.msra.mxu0 0
        %4710 = vmatprep.subr.bf16.mxu0 0
        %4711 = vmatpush1.bf16.msra.mxu0 0
        %4712 = vmatprep.subr.bf16.mxu0 0
        %4713 = vmatpush1.bf16.msra.mxu0 0
        %4714 = vmatprep.subr.bf16.mxu0 0
        %4715 = vmatpush1.bf16.msra.mxu0 0
        %4716 = vmatprep.subr.bf16.mxu0 0
        %4717 = vmatpush1.bf16.msra.mxu0 0
        %4718 = vmatprep.subr.bf16.mxu0 0
        %4719 = vmatpush1.bf16.msra.mxu0 0
        %4720 = vmatprep.subr.bf16.mxu0 0
        %4721 = vmatpush1.bf16.msra.mxu0 0
        %4722 = vmatprep.subr.bf16.mxu0 0
        %4723 = vmatpush1.bf16.msra.mxu0 0
        %4724 = vmatprep.subr.bf16.mxu0 0
        %4725 = vmatpush1.bf16.msra.mxu0 0
        %4726 = vmatprep.subr.bf16.mxu0 0
        %4727 = vmatpush1.bf16.msra.mxu0 0
        %4728 = vmatprep.subr.bf16.mxu0 0
        %4729 = vmatpush1.bf16.msra.mxu0 0
        %4730 = vmatprep.subr.bf16.mxu0 0
        %4731 = vmatpush1.bf16.msra.mxu0 0
        %4732 = vmatprep.subr.bf16.mxu0 0
        %4733 = vmatpush1.bf16.msra.mxu0 0
        %4734 = vmatprep.mubr.bf16.mxu0 0
        %4735 = vmatmul.mubr.bf16.gmra.mrb[0].mxu0 %v4614
        %v4736 = vpop.f32.mrb[0].mxu0
        %v4737 = vadd.f32 0.0, %v4736
        %v4738 = vpop.f32.mrb[0].mxu0
        %v4739 = vadd.f32 0.0, %v4738
        %v4740 = vpop.f32.mrb[0].mxu0
        %v4741 = vadd.f32 0.0, %v4740
        %v4742 = vpop.f32.mrb[0].mxu0
        %v4743 = vadd.f32 0.0, %v4742
        %4744 = vdwg.mxu0
        %4745 = vmatprep.subr.bf16.mxu0 %v4600
        %4746 = vmatpush1.bf16.msra.mxu0 %v4599
        %4747 = vmatprep.subr.bf16.mxu0 0
        %4748 = vmatpush1.bf16.msra.mxu0 0
        %4749 = vmatprep.subr.bf16.mxu0 0
        %4750 = vmatpush1.bf16.msra.mxu0 0
        %4751 = vmatprep.subr.bf16.mxu0 0
        %4752 = vmatpush1.bf16.msra.mxu0 0
        %4753 = vmatprep.subr.bf16.mxu0 0
        %4754 = vmatpush1.bf16.msra.mxu0 0
        %4755 = vmatprep.subr.bf16.mxu0 0
        %4756 = vmatpush1.bf16.msra.mxu0 0
        %4757 = vmatprep.subr.bf16.mxu0 0
        %4758 = vmatpush1.bf16.msra.mxu0 0
        %4759 = vmatprep.subr.bf16.mxu0 0
        %4760 = vmatpush1.bf16.msra.mxu0 0
        %4761 = vmatprep.subr.bf16.mxu0 0
        %4762 = vmatpush1.bf16.msra.mxu0 0
        %4763 = vmatprep.subr.bf16.mxu0 0
        %4764 = vmatpush1.bf16.msra.mxu0 0
        %4765 = vmatprep.subr.bf16.mxu0 0
        %4766 = vmatpush1.bf16.msra.mxu0 0
        %4767 = vmatprep.subr.bf16.mxu0 0
        %4768 = vmatpush1.bf16.msra.mxu0 0
        %4769 = vmatprep.subr.bf16.mxu0 0
        %4770 = vmatpush1.bf16.msra.mxu0 0
        %4771 = vmatprep.subr.bf16.mxu0 0
        %4772 = vmatpush1.bf16.msra.mxu0 0
        %4773 = vmatprep.subr.bf16.mxu0 0
        %4774 = vmatpush1.bf16.msra.mxu0 0
        %4775 = vmatprep.subr.bf16.mxu0 0
        %4776 = vmatpush1.bf16.msra.mxu0 0
        %4777 = vmatprep.mubr.bf16.mxu0 0
        %4778 = vmatmul.mubr.bf16.gmra.mrb[0].mxu0 %v4614
        %v4779 = vpop.f32.mrb[0].mxu0
        %v4780 = vadd.f32 0.0, %v4779
        %v4781 = vpop.f32.mrb[0].mxu0
        %v4782 = vadd.f32 0.0, %v4781
        %v4783 = vpop.f32.mrb[0].mxu0
        %v4784 = vadd.f32 0.0, %v4783
        %v4785 = vpop.f32.mrb[0].mxu0
        %v4786 = vadd.f32 0.0, %v4785
        %4787 = vdwg.mxu0
        %4788 = vmatprep.subr.bf16.mxu0 %v4602
        %4789 = vmatpush1.bf16.msra.mxu0 %v4601
        %4790 = vmatprep.subr.bf16.mxu0 0
        %4791 = vmatpush1.bf16.msra.mxu0 0
        %4792 = vmatprep.subr.bf16.mxu0 0
        %4793 = vmatpush1.bf16.msra.mxu0 0
        %4794 = vmatprep.subr.bf16.mxu0 0
        %4795 = vmatpush1.bf16.msra.mxu0 0
        %4796 = vmatprep.subr.bf16.mxu0 0
        %4797 = vmatpush1.bf16.msra.mxu0 0
        %4798 = vmatprep.subr.bf16.mxu0 0
        %4799 = vmatpush1.bf16.msra.mxu0 0
        %4800 = vmatprep.subr.bf16.mxu0 0
        %4801 = vmatpush1.bf16.msra.mxu0 0
        %4802 = vmatprep.subr.bf16.mxu0 0
        %4803 = vmatpush1.bf16.msra.mxu0 0
        %4804 = vmatprep.subr.bf16.mxu0 0
        %4805 = vmatpush1.bf16.msra.mxu0 0
        %4806 = vmatprep.subr.bf16.mxu0 0
        %4807 = vmatpush1.bf16.msra.mxu0 0
        %4808 = vmatprep.subr.bf16.mxu0 0
        %4809 = vmatpush1.bf16.msra.mxu0 0
        %4810 = vmatprep.subr.bf16.mxu0 0
        %4811 = vmatpush1.bf16.msra.mxu0 0
        %4812 = vmatprep.subr.bf16.mxu0 0
        %4813 = vmatpush1.bf16.msra.mxu0 0
        %4814 = vmatprep.subr.bf16.mxu0 0
        %4815 = vmatpush1.bf16.msra.mxu0 0
        %4816 = vmatprep.subr.bf16.mxu0 0
        %4817 = vmatpush1.bf16.msra.mxu0 0
        %4818 = vmatprep.subr.bf16.mxu0 0
        %4819 = vmatpush1.bf16.msra.mxu0 0
        %4820 = vmatprep.mubr.bf16.mxu0 0
        %4821 = vmatmul.mubr.bf16.gmra.mrb[0].mxu0 %v4614
        %v4822 = vpop.f32.mrb[0].mxu0
        %v4823 = vadd.f32 0.0, %v4822
        %v4824 = vpop.f32.mrb[0].mxu0
        %v4825 = vadd.f32 0.0, %v4824
        %v4826 = vpop.f32.mrb[0].mxu0
        %v4827 = vadd.f32 0.0, %v4826
        %v4828 = vpop.f32.mrb[0].mxu0
        %v4829 = vadd.f32 0.0, %v4828
        %4830 = vdwg.mxu0
        %v4831 = vadd.f32 %v4543, %v4651
        %v4832 = vadd.f32 %v4544, %v4653
        %v4833 = vadd.f32 %v4545, %v4694
        %v4834 = vadd.f32 %v4546, %v4696
        %v4835 = vadd.f32 %v4547, %v4737
        %v4836 = vadd.f32 %v4548, %v4739
        %v4837 = vadd.f32 %v4549, %v4780
        %v4838 = vadd.f32 %v4550, %v4782
        %v4839 = vadd.f32 %v4551, %v4823
        %v4840 = vadd.f32 %v4552, %v4825
        %v4841 = vadd.f32 %v4553, %v4655
        %v4842 = vadd.f32 %v4554, %v4657
        %v4843 = vadd.f32 %v4555, %v4698
        %v4844 = vadd.f32 %v4556, %v4700
        %v4845 = vadd.f32 %v4557, %v4741
        %v4846 = vadd.f32 %v4558, %v4743
        %v4847 = vadd.f32 %v4559, %v4784
        %v4848 = vadd.f32 %v4560, %v4786
        %v4849 = vadd.f32 %v4561, %v4827
        %v4850 = vadd.f32 %v4562, %v4829
        %s4851 = scalar_lea.vmem %s0, 112
        %v4852 = vld [vmem:[%s4851] sm:$0xf]
        %v4853 = vld [vmem:[%s4851 + $0x4] sm:$0xf]
        %v4856 = vunpack.c.l.b16 %v4852
        %v4857 = vunpack.c.l.b16 %v4853
        %v4858 = vpack.c.b16 %v4857, %v4856
        %4859 = vrot.lane.b32.xlu0 %v893, 121
        %v4860 = vpop.permute.xlu0 %4859
        %4861 = vrot.lane.b32.xlu0 %v894, 121
        %v4862 = vpop.permute.xlu0 %4861
        %4863 = vrot.lane.b32.xlu0 %v895, 121
        %v4864 = vpop.permute.xlu0 %4863
        %4865 = vrot.lane.b32.xlu0 %v896, 121
        %v4866 = vpop.permute.xlu0 %4865
        %4867 = vrot.lane.b32.xlu0 %v897, 121
        %v4868 = vpop.permute.xlu0 %4867
        %4869 = vrot.lane.b32.xlu0 %v898, 121
        %v4870 = vpop.permute.xlu0 %4869
        %4871 = vrot.lane.b32.xlu0 %v899, 121
        %v4872 = vpop.permute.xlu0 %4871
        %4873 = vrot.lane.b32.xlu0 %v900, 121
        %v4874 = vpop.permute.xlu0 %4873
        %4875 = vrot.lane.b32.xlu0 %v901, 121
        %v4876 = vpop.permute.xlu0 %4875
        %4877 = vrot.lane.b32.xlu0 %v902, 121
        %v4878 = vpop.permute.xlu0 %4877
        %4879 = vrot.lane.b32.xlu0 %v903, 121
        %v4880 = vpop.permute.xlu0 %4879
        %vm4881 = vcmask 990208
        %v4882 = vsel %vm4881, %v4860, %v4862
        %v4883 = vsel %vm4881, %v4862, %v4864
        %v4884 = vsel %vm4881, %v4864, %v4866
        %v4885 = vsel %vm4881, %v4866, %v4868
        %v4886 = vsel %vm4881, %v4868, %v4870
        %v4887 = vsel %vm4881, %v4870, %v4872
        %v4888 = vsel %vm4881, %v4872, %v4874
        %v4889 = vsel %vm4881, %v4874, %v4876
        %v4890 = vsel %vm4881, %v4876, %v4878
        %v4891 = vsel %vm4881, %v4878, %v4880
        %v4903 = vsel %vm925, %v4858, 0
        %4905 = vmatprep.subr.bf16.mxu0 %v4883
        %4906 = vmatpush1.bf16.msra.mxu0 %v4882
        %4907 = vmatprep.subr.bf16.mxu0 0
        %4908 = vmatpush1.bf16.msra.mxu0 0
        %4909 = vmatprep.subr.bf16.mxu0 0
        %4910 = vmatpush1.bf16.msra.mxu0 0
        %4911 = vmatprep.subr.bf16.mxu0 0
        %4912 = vmatpush1.bf16.msra.mxu0 0
        %4913 = vmatprep.subr.bf16.mxu0 0
        %4914 = vmatpush1.bf16.msra.mxu0 0
        %4915 = vmatprep.subr.bf16.mxu0 0
        %4916 = vmatpush1.bf16.msra.mxu0 0
        %4917 = vmatprep.subr.bf16.mxu0 0
        %4918 = vmatpush1.bf16.msra.mxu0 0
        %4919 = vmatprep.subr.bf16.mxu0 0
        %4920 = vmatpush1.bf16.msra.mxu0 0
        %4921 = vmatprep.subr.bf16.mxu0 0
        %4922 = vmatpush1.bf16.msra.mxu0 0
        %4923 = vmatprep.subr.bf16.mxu0 0
        %4924 = vmatpush1.bf16.msra.mxu0 0
        %4925 = vmatprep.subr.bf16.mxu0 0
        %4926 = vmatpush1.bf16.msra.mxu0 0
        %4927 = vmatprep.subr.bf16.mxu0 0
        %4928 = vmatpush1.bf16.msra.mxu0 0
        %4929 = vmatprep.subr.bf16.mxu0 0
        %4930 = vmatpush1.bf16.msra.mxu0 0
        %4931 = vmatprep.subr.bf16.mxu0 0
        %4932 = vmatpush1.bf16.msra.mxu0 0
        %4933 = vmatprep.subr.bf16.mxu0 0
        %4934 = vmatpush1.bf16.msra.mxu0 0
        %4935 = vmatprep.subr.bf16.mxu0 0
        %4936 = vmatpush1.bf16.msra.mxu0 0
        %4937 = vmatprep.mubr.bf16.mxu0 0
        %4938 = vmatmul.mubr.bf16.gmra.mrb[0].mxu0 %v4903
        %v4939 = vpop.f32.mrb[0].mxu0
        %v4940 = vadd.f32 0.0, %v4939
        %v4941 = vpop.f32.mrb[0].mxu0
        %v4942 = vadd.f32 0.0, %v4941
        %v4943 = vpop.f32.mrb[0].mxu0
        %v4944 = vadd.f32 0.0, %v4943
        %v4945 = vpop.f32.mrb[0].mxu0
        %v4946 = vadd.f32 0.0, %v4945
        %4947 = vdwg.mxu0
        %4948 = vmatprep.subr.bf16.mxu0 %v4885
        %4949 = vmatpush1.bf16.msra.mxu0 %v4884
        %4950 = vmatprep.subr.bf16.mxu0 0
        %4951 = vmatpush1.bf16.msra.mxu0 0
        %4952 = vmatprep.subr.bf16.mxu0 0
        %4953 = vmatpush1.bf16.msra.mxu0 0
        %4954 = vmatprep.subr.bf16.mxu0 0
        %4955 = vmatpush1.bf16.msra.mxu0 0
        %4956 = vmatprep.subr.bf16.mxu0 0
        %4957 = vmatpush1.bf16.msra.mxu0 0
        %4958 = vmatprep.subr.bf16.mxu0 0
        %4959 = vmatpush1.bf16.msra.mxu0 0
        %4960 = vmatprep.subr.bf16.mxu0 0
        %4961 = vmatpush1.bf16.msra.mxu0 0
        %4962 = vmatprep.subr.bf16.mxu0 0
        %4963 = vmatpush1.bf16.msra.mxu0 0
        %4964 = vmatprep.subr.bf16.mxu0 0
        %4965 = vmatpush1.bf16.msra.mxu0 0
        %4966 = vmatprep.subr.bf16.mxu0 0
        %4967 = vmatpush1.bf16.msra.mxu0 0
        %4968 = vmatprep.subr.bf16.mxu0 0
        %4969 = vmatpush1.bf16.msra.mxu0 0
        %4970 = vmatprep.subr.bf16.mxu0 0
        %4971 = vmatpush1.bf16.msra.mxu0 0
        %4972 = vmatprep.subr.bf16.mxu0 0
        %4973 = vmatpush1.bf16.msra.mxu0 0
        %4974 = vmatprep.subr.bf16.mxu0 0
        %4975 = vmatpush1.bf16.msra.mxu0 0
        %4976 = vmatprep.subr.bf16.mxu0 0
        %4977 = vmatpush1.bf16.msra.mxu0 0
        %4978 = vmatprep.subr.bf16.mxu0 0
        %4979 = vmatpush1.bf16.msra.mxu0 0
        %4980 = vmatprep.mubr.bf16.mxu0 0
        %4981 = vmatmul.mubr.bf16.gmra.mrb[0].mxu0 %v4903
        %v4982 = vpop.f32.mrb[0].mxu0
        %v4983 = vadd.f32 0.0, %v4982
        %v4984 = vpop.f32.mrb[0].mxu0
        %v4985 = vadd.f32 0.0, %v4984
        %v4986 = vpop.f32.mrb[0].mxu0
        %v4987 = vadd.f32 0.0, %v4986
        %v4988 = vpop.f32.mrb[0].mxu0
        %v4989 = vadd.f32 0.0, %v4988
        %4990 = vdwg.mxu0
        %4991 = vmatprep.subr.bf16.mxu0 %v4887
        %4992 = vmatpush1.bf16.msra.mxu0 %v4886
        %4993 = vmatprep.subr.bf16.mxu0 0
        %4994 = vmatpush1.bf16.msra.mxu0 0
        %4995 = vmatprep.subr.bf16.mxu0 0
        %4996 = vmatpush1.bf16.msra.mxu0 0
        %4997 = vmatprep.subr.bf16.mxu0 0
        %4998 = vmatpush1.bf16.msra.mxu0 0
        %4999 = vmatprep.subr.bf16.mxu0 0
        %5000 = vmatpush1.bf16.msra.mxu0 0
        %5001 = vmatprep.subr.bf16.mxu0 0
        %5002 = vmatpush1.bf16.msra.mxu0 0
        %5003 = vmatprep.subr.bf16.mxu0 0
        %5004 = vmatpush1.bf16.msra.mxu0 0
        %5005 = vmatprep.subr.bf16.mxu0 0
        %5006 = vmatpush1.bf16.msra.mxu0 0
        %5007 = vmatprep.subr.bf16.mxu0 0
        %5008 = vmatpush1.bf16.msra.mxu0 0
        %5009 = vmatprep.subr.bf16.mxu0 0
        %5010 = vmatpush1.bf16.msra.mxu0 0
        %5011 = vmatprep.subr.bf16.mxu0 0
        %5012 = vmatpush1.bf16.msra.mxu0 0
        %5013 = vmatprep.subr.bf16.mxu0 0
        %5014 = vmatpush1.bf16.msra.mxu0 0
        %5015 = vmatprep.subr.bf16.mxu0 0
        %5016 = vmatpush1.bf16.msra.mxu0 0
        %5017 = vmatprep.subr.bf16.mxu0 0
        %5018 = vmatpush1.bf16.msra.mxu0 0
        %5019 = vmatprep.subr.bf16.mxu0 0
        %5020 = vmatpush1.bf16.msra.mxu0 0
        %5021 = vmatprep.subr.bf16.mxu0 0
        %5022 = vmatpush1.bf16.msra.mxu0 0
        %5023 = vmatprep.mubr.bf16.mxu0 0
        %5024 = vmatmul.mubr.bf16.gmra.mrb[0].mxu0 %v4903
        %v5025 = vpop.f32.mrb[0].mxu0
        %v5026 = vadd.f32 0.0, %v5025
        %v5027 = vpop.f32.mrb[0].mxu0
        %v5028 = vadd.f32 0.0, %v5027
        %v5029 = vpop.f32.mrb[0].mxu0
        %v5030 = vadd.f32 0.0, %v5029
        %v5031 = vpop.f32.mrb[0].mxu0
        %v5032 = vadd.f32 0.0, %v5031
        %5033 = vdwg.mxu0
        %5034 = vmatprep.subr.bf16.mxu0 %v4889
        %5035 = vmatpush1.bf16.msra.mxu0 %v4888
        %5036 = vmatprep.subr.bf16.mxu0 0
        %5037 = vmatpush1.bf16.msra.mxu0 0
        %5038 = vmatprep.subr.bf16.mxu0 0
        %5039 = vmatpush1.bf16.msra.mxu0 0
        %5040 = vmatprep.subr.bf16.mxu0 0
        %5041 = vmatpush1.bf16.msra.mxu0 0
        %5042 = vmatprep.subr.bf16.mxu0 0
        %5043 = vmatpush1.bf16.msra.mxu0 0
        %5044 = vmatprep.subr.bf16.mxu0 0
        %5045 = vmatpush1.bf16.msra.mxu0 0
        %5046 = vmatprep.subr.bf16.mxu0 0
        %5047 = vmatpush1.bf16.msra.mxu0 0
        %5048 = vmatprep.subr.bf16.mxu0 0
        %5049 = vmatpush1.bf16.msra.mxu0 0
        %5050 = vmatprep.subr.bf16.mxu0 0
        %5051 = vmatpush1.bf16.msra.mxu0 0
        %5052 = vmatprep.subr.bf16.mxu0 0
        %5053 = vmatpush1.bf16.msra.mxu0 0
        %5054 = vmatprep.subr.bf16.mxu0 0
        %5055 = vmatpush1.bf16.msra.mxu0 0
        %5056 = vmatprep.subr.bf16.mxu0 0
        %5057 = vmatpush1.bf16.msra.mxu0 0
        %5058 = vmatprep.subr.bf16.mxu0 0
        %5059 = vmatpush1.bf16.msra.mxu0 0
        %5060 = vmatprep.subr.bf16.mxu0 0
        %5061 = vmatpush1.bf16.msra.mxu0 0
        %5062 = vmatprep.subr.bf16.mxu0 0
        %5063 = vmatpush1.bf16.msra.mxu0 0
        %5064 = vmatprep.subr.bf16.mxu0 0
        %5065 = vmatpush1.bf16.msra.mxu0 0
        %5066 = vmatprep.mubr.bf16.mxu0 0
        %5067 = vmatmul.mubr.bf16.gmra.mrb[0].mxu0 %v4903
        %v5068 = vpop.f32.mrb[0].mxu0
        %v5069 = vadd.f32 0.0, %v5068
        %v5070 = vpop.f32.mrb[0].mxu0
        %v5071 = vadd.f32 0.0, %v5070
        %v5072 = vpop.f32.mrb[0].mxu0
        %v5073 = vadd.f32 0.0, %v5072
        %v5074 = vpop.f32.mrb[0].mxu0
        %v5075 = vadd.f32 0.0, %v5074
        %5076 = vdwg.mxu0
        %5077 = vmatprep.subr.bf16.mxu0 %v4891
        %5078 = vmatpush1.bf16.msra.mxu0 %v4890
        %5079 = vmatprep.subr.bf16.mxu0 0
        %5080 = vmatpush1.bf16.msra.mxu0 0
        %5081 = vmatprep.subr.bf16.mxu0 0
        %5082 = vmatpush1.bf16.msra.mxu0 0
        %5083 = vmatprep.subr.bf16.mxu0 0
        %5084 = vmatpush1.bf16.msra.mxu0 0
        %5085 = vmatprep.subr.bf16.mxu0 0
        %5086 = vmatpush1.bf16.msra.mxu0 0
        %5087 = vmatprep.subr.bf16.mxu0 0
        %5088 = vmatpush1.bf16.msra.mxu0 0
        %5089 = vmatprep.subr.bf16.mxu0 0
        %5090 = vmatpush1.bf16.msra.mxu0 0
        %5091 = vmatprep.subr.bf16.mxu0 0
        %5092 = vmatpush1.bf16.msra.mxu0 0
        %5093 = vmatprep.subr.bf16.mxu0 0
        %5094 = vmatpush1.bf16.msra.mxu0 0
        %5095 = vmatprep.subr.bf16.mxu0 0
        %5096 = vmatpush1.bf16.msra.mxu0 0
        %5097 = vmatprep.subr.bf16.mxu0 0
        %5098 = vmatpush1.bf16.msra.mxu0 0
        %5099 = vmatprep.subr.bf16.mxu0 0
        %5100 = vmatpush1.bf16.msra.mxu0 0
        %5101 = vmatprep.subr.bf16.mxu0 0
        %5102 = vmatpush1.bf16.msra.mxu0 0
        %5103 = vmatprep.subr.bf16.mxu0 0
        %5104 = vmatpush1.bf16.msra.mxu0 0
        %5105 = vmatprep.subr.bf16.mxu0 0
        %5106 = vmatpush1.bf16.msra.mxu0 0
        %5107 = vmatprep.subr.bf16.mxu0 0
        %5108 = vmatpush1.bf16.msra.mxu0 0
        %5109 = vmatprep.mubr.bf16.mxu0 0
        %5110 = vmatmul.mubr.bf16.gmra.mrb[0].mxu0 %v4903
        %v5111 = vpop.f32.mrb[0].mxu0
        %v5112 = vadd.f32 0.0, %v5111
        %v5113 = vpop.f32.mrb[0].mxu0
        %v5114 = vadd.f32 0.0, %v5113
        %v5115 = vpop.f32.mrb[0].mxu0
        %v5116 = vadd.f32 0.0, %v5115
        %v5117 = vpop.f32.mrb[0].mxu0
        %v5118 = vadd.f32 0.0, %v5117
        %5119 = vdwg.mxu0
        %v5120 = vadd.f32 %v4831, %v4940
        %v5121 = vadd.f32 %v4832, %v4942
        %v5122 = vadd.f32 %v4833, %v4983
        %v5123 = vadd.f32 %v4834, %v4985
        %v5124 = vadd.f32 %v4835, %v5026
        %v5125 = vadd.f32 %v4836, %v5028
        %v5126 = vadd.f32 %v4837, %v5069
        %v5127 = vadd.f32 %v4838, %v5071
        %v5128 = vadd.f32 %v4839, %v5112
        %v5129 = vadd.f32 %v4840, %v5114
        %v5130 = vadd.f32 %v4841, %v4944
        %v5131 = vadd.f32 %v4842, %v4946
        %v5132 = vadd.f32 %v4843, %v4987
        %v5133 = vadd.f32 %v4844, %v4989
        %v5134 = vadd.f32 %v4845, %v5030
        %v5135 = vadd.f32 %v4846, %v5032
        %v5136 = vadd.f32 %v4847, %v5073
        %v5137 = vadd.f32 %v4848, %v5075
        %v5138 = vadd.f32 %v4849, %v5116
        %v5139 = vadd.f32 %v4850, %v5118
        %s5140 = scalar_lea.vmem %s0, 120
        %v5141 = vld [vmem:[%s5140] sm:$0xf]
        %v5142 = vld [vmem:[%s5140 + $0x4] sm:$0xf]
        %v5145 = vunpack.c.l.b16 %v5141
        %v5146 = vunpack.c.l.b16 %v5142
        %v5147 = vpack.c.b16 %v5146, %v5145
        %5148 = vrot.lane.b32.xlu0 %v904, 121
        %v5149 = vpop.permute.xlu0 %5148
        %5150 = vrot.lane.b32.xlu0 %v905, 121
        %v5151 = vpop.permute.xlu0 %5150
        %5152 = vrot.lane.b32.xlu0 %v906, 121
        %v5153 = vpop.permute.xlu0 %5152
        %5154 = vrot.lane.b32.xlu0 %v907, 121
        %v5155 = vpop.permute.xlu0 %5154
        %5156 = vrot.lane.b32.xlu0 %v908, 121
        %v5157 = vpop.permute.xlu0 %5156
        %5158 = vrot.lane.b32.xlu0 %v909, 121
        %v5159 = vpop.permute.xlu0 %5158
        %5160 = vrot.lane.b32.xlu0 %v910, 121
        %v5161 = vpop.permute.xlu0 %5160
        %5162 = vrot.lane.b32.xlu0 %v911, 121
        %v5163 = vpop.permute.xlu0 %5162
        %5164 = vrot.lane.b32.xlu0 %v912, 121
        %v5165 = vpop.permute.xlu0 %5164
        %5166 = vrot.lane.b32.xlu0 %v913, 121
        %v5167 = vpop.permute.xlu0 %5166
        %5168 = vrot.lane.b32.xlu0 %v914, 121
        %v5169 = vpop.permute.xlu0 %5168
        %v5170 = vsel %vm4881, %v5149, %v5151
        %v5171 = vsel %vm4881, %v5151, %v5153
        %v5172 = vsel %vm4881, %v5153, %v5155
        %v5173 = vsel %vm4881, %v5155, %v5157
        %v5174 = vsel %vm4881, %v5157, %v5159
        %v5175 = vsel %vm4881, %v5159, %v5161
        %v5176 = vsel %vm4881, %v5161, %v5163
        %v5177 = vsel %vm4881, %v5163, %v5165
        %v5178 = vsel %vm4881, %v5165, %v5167
        %v5179 = vsel %vm4881, %v5167, %v5169
        %v5191 = vsel %vm925, %v5147, 0
        %5193 = vmatprep.subr.bf16.mxu0 %v5171
        %5194 = vmatpush1.bf16.msra.mxu0 %v5170
        %5195 = vmatprep.subr.bf16.mxu0 0
        %5196 = vmatpush1.bf16.msra.mxu0 0
        %5197 = vmatprep.subr.bf16.mxu0 0
        %5198 = vmatpush1.bf16.msra.mxu0 0
        %5199 = vmatprep.subr.bf16.mxu0 0
        %5200 = vmatpush1.bf16.msra.mxu0 0
        %5201 = vmatprep.subr.bf16.mxu0 0
        %5202 = vmatpush1.bf16.msra.mxu0 0
        %5203 = vmatprep.subr.bf16.mxu0 0
        %5204 = vmatpush1.bf16.msra.mxu0 0
        %5205 = vmatprep.subr.bf16.mxu0 0
        %5206 = vmatpush1.bf16.msra.mxu0 0
        %5207 = vmatprep.subr.bf16.mxu0 0
        %5208 = vmatpush1.bf16.msra.mxu0 0
        %5209 = vmatprep.subr.bf16.mxu0 0
        %5210 = vmatpush1.bf16.msra.mxu0 0
        %5211 = vmatprep.subr.bf16.mxu0 0
        %5212 = vmatpush1.bf16.msra.mxu0 0
        %5213 = vmatprep.subr.bf16.mxu0 0
        %5214 = vmatpush1.bf16.msra.mxu0 0
        %5215 = vmatprep.subr.bf16.mxu0 0
        %5216 = vmatpush1.bf16.msra.mxu0 0
        %5217 = vmatprep.subr.bf16.mxu0 0
        %5218 = vmatpush1.bf16.msra.mxu0 0
        %5219 = vmatprep.subr.bf16.mxu0 0
        %5220 = vmatpush1.bf16.msra.mxu0 0
        %5221 = vmatprep.subr.bf16.mxu0 0
        %5222 = vmatpush1.bf16.msra.mxu0 0
        %5223 = vmatprep.subr.bf16.mxu0 0
        %5224 = vmatpush1.bf16.msra.mxu0 0
        %5225 = vmatprep.mubr.bf16.mxu0 0
        %5226 = vmatmul.mubr.bf16.gmra.mrb[0].mxu0 %v5191
        %v5227 = vpop.f32.mrb[0].mxu0
        %v5228 = vadd.f32 0.0, %v5227
        %v5229 = vpop.f32.mrb[0].mxu0
        %v5230 = vadd.f32 0.0, %v5229
        %v5231 = vpop.f32.mrb[0].mxu0
        %v5232 = vadd.f32 0.0, %v5231
        %v5233 = vpop.f32.mrb[0].mxu0
        %v5234 = vadd.f32 0.0, %v5233
        %5235 = vdwg.mxu0
        %5236 = vmatprep.subr.bf16.mxu0 %v5173
        %5237 = vmatpush1.bf16.msra.mxu0 %v5172
        %5238 = vmatprep.subr.bf16.mxu0 0
        %5239 = vmatpush1.bf16.msra.mxu0 0
        %5240 = vmatprep.subr.bf16.mxu0 0
        %5241 = vmatpush1.bf16.msra.mxu0 0
        %5242 = vmatprep.subr.bf16.mxu0 0
        %5243 = vmatpush1.bf16.msra.mxu0 0
        %5244 = vmatprep.subr.bf16.mxu0 0
        %5245 = vmatpush1.bf16.msra.mxu0 0
        %5246 = vmatprep.subr.bf16.mxu0 0
        %5247 = vmatpush1.bf16.msra.mxu0 0
        %5248 = vmatprep.subr.bf16.mxu0 0
        %5249 = vmatpush1.bf16.msra.mxu0 0
        %5250 = vmatprep.subr.bf16.mxu0 0
        %5251 = vmatpush1.bf16.msra.mxu0 0
        %5252 = vmatprep.subr.bf16.mxu0 0
        %5253 = vmatpush1.bf16.msra.mxu0 0
        %5254 = vmatprep.subr.bf16.mxu0 0
        %5255 = vmatpush1.bf16.msra.mxu0 0
        %5256 = vmatprep.subr.bf16.mxu0 0
        %5257 = vmatpush1.bf16.msra.mxu0 0
        %5258 = vmatprep.subr.bf16.mxu0 0
        %5259 = vmatpush1.bf16.msra.mxu0 0
        %5260 = vmatprep.subr.bf16.mxu0 0
        %5261 = vmatpush1.bf16.msra.mxu0 0
        %5262 = vmatprep.subr.bf16.mxu0 0
        %5263 = vmatpush1.bf16.msra.mxu0 0
        %5264 = vmatprep.subr.bf16.mxu0 0
        %5265 = vmatpush1.bf16.msra.mxu0 0
        %5266 = vmatprep.subr.bf16.mxu0 0
        %5267 = vmatpush1.bf16.msra.mxu0 0
        %5268 = vmatprep.mubr.bf16.mxu0 0
        %5269 = vmatmul.mubr.bf16.gmra.mrb[0].mxu0 %v5191
        %v5270 = vpop.f32.mrb[0].mxu0
        %v5271 = vadd.f32 0.0, %v5270
        %v5272 = vpop.f32.mrb[0].mxu0
        %v5273 = vadd.f32 0.0, %v5272
        %v5274 = vpop.f32.mrb[0].mxu0
        %v5275 = vadd.f32 0.0, %v5274
        %v5276 = vpop.f32.mrb[0].mxu0
        %v5277 = vadd.f32 0.0, %v5276
        %5278 = vdwg.mxu0
        %5279 = vmatprep.subr.bf16.mxu0 %v5175
        %5280 = vmatpush1.bf16.msra.mxu0 %v5174
        %5281 = vmatprep.subr.bf16.mxu0 0
        %5282 = vmatpush1.bf16.msra.mxu0 0
        %5283 = vmatprep.subr.bf16.mxu0 0
        %5284 = vmatpush1.bf16.msra.mxu0 0
        %5285 = vmatprep.subr.bf16.mxu0 0
        %5286 = vmatpush1.bf16.msra.mxu0 0
        %5287 = vmatprep.subr.bf16.mxu0 0
        %5288 = vmatpush1.bf16.msra.mxu0 0
        %5289 = vmatprep.subr.bf16.mxu0 0
        %5290 = vmatpush1.bf16.msra.mxu0 0
        %5291 = vmatprep.subr.bf16.mxu0 0
        %5292 = vmatpush1.bf16.msra.mxu0 0
        %5293 = vmatprep.subr.bf16.mxu0 0
        %5294 = vmatpush1.bf16.msra.mxu0 0
        %5295 = vmatprep.subr.bf16.mxu0 0
        %5296 = vmatpush1.bf16.msra.mxu0 0
        %5297 = vmatprep.subr.bf16.mxu0 0
        %5298 = vmatpush1.bf16.msra.mxu0 0
        %5299 = vmatprep.subr.bf16.mxu0 0
        %5300 = vmatpush1.bf16.msra.mxu0 0
        %5301 = vmatprep.subr.bf16.mxu0 0
        %5302 = vmatpush1.bf16.msra.mxu0 0
        %5303 = vmatprep.subr.bf16.mxu0 0
        %5304 = vmatpush1.bf16.msra.mxu0 0
        %5305 = vmatprep.subr.bf16.mxu0 0
        %5306 = vmatpush1.bf16.msra.mxu0 0
        %5307 = vmatprep.subr.bf16.mxu0 0
        %5308 = vmatpush1.bf16.msra.mxu0 0
        %5309 = vmatprep.subr.bf16.mxu0 0
        %5310 = vmatpush1.bf16.msra.mxu0 0
        %5311 = vmatprep.mubr.bf16.mxu0 0
        %5312 = vmatmul.mubr.bf16.gmra.mrb[0].mxu0 %v5191
        %v5313 = vpop.f32.mrb[0].mxu0
        %v5314 = vadd.f32 0.0, %v5313
        %v5315 = vpop.f32.mrb[0].mxu0
        %v5316 = vadd.f32 0.0, %v5315
        %v5317 = vpop.f32.mrb[0].mxu0
        %v5318 = vadd.f32 0.0, %v5317
        %v5319 = vpop.f32.mrb[0].mxu0
        %v5320 = vadd.f32 0.0, %v5319
        %5321 = vdwg.mxu0
        %5322 = vmatprep.subr.bf16.mxu0 %v5177
        %5323 = vmatpush1.bf16.msra.mxu0 %v5176
        %5324 = vmatprep.subr.bf16.mxu0 0
        %5325 = vmatpush1.bf16.msra.mxu0 0
        %5326 = vmatprep.subr.bf16.mxu0 0
        %5327 = vmatpush1.bf16.msra.mxu0 0
        %5328 = vmatprep.subr.bf16.mxu0 0
        %5329 = vmatpush1.bf16.msra.mxu0 0
        %5330 = vmatprep.subr.bf16.mxu0 0
        %5331 = vmatpush1.bf16.msra.mxu0 0
        %5332 = vmatprep.subr.bf16.mxu0 0
        %5333 = vmatpush1.bf16.msra.mxu0 0
        %5334 = vmatprep.subr.bf16.mxu0 0
        %5335 = vmatpush1.bf16.msra.mxu0 0
        %5336 = vmatprep.subr.bf16.mxu0 0
        %5337 = vmatpush1.bf16.msra.mxu0 0
        %5338 = vmatprep.subr.bf16.mxu0 0
        %5339 = vmatpush1.bf16.msra.mxu0 0
        %5340 = vmatprep.subr.bf16.mxu0 0
        %5341 = vmatpush1.bf16.msra.mxu0 0
        %5342 = vmatprep.subr.bf16.mxu0 0
        %5343 = vmatpush1.bf16.msra.mxu0 0
        %5344 = vmatprep.subr.bf16.mxu0 0
        %5345 = vmatpush1.bf16.msra.mxu0 0
        %5346 = vmatprep.subr.bf16.mxu0 0
        %5347 = vmatpush1.bf16.msra.mxu0 0
        %5348 = vmatprep.subr.bf16.mxu0 0
        %5349 = vmatpush1.bf16.msra.mxu0 0
        %5350 = vmatprep.subr.bf16.mxu0 0
        %5351 = vmatpush1.bf16.msra.mxu0 0
        %5352 = vmatprep.subr.bf16.mxu0 0
        %5353 = vmatpush1.bf16.msra.mxu0 0
        %5354 = vmatprep.mubr.bf16.mxu0 0
        %5355 = vmatmul.mubr.bf16.gmra.mrb[0].mxu0 %v5191
        %v5356 = vpop.f32.mrb[0].mxu0
        %v5357 = vadd.f32 0.0, %v5356
        %v5358 = vpop.f32.mrb[0].mxu0
        %v5359 = vadd.f32 0.0, %v5358
        %v5360 = vpop.f32.mrb[0].mxu0
        %v5361 = vadd.f32 0.0, %v5360
        %v5362 = vpop.f32.mrb[0].mxu0
        %v5363 = vadd.f32 0.0, %v5362
        %5364 = vdwg.mxu0
        %5365 = vmatprep.subr.bf16.mxu0 %v5179
        %5366 = vmatpush1.bf16.msra.mxu0 %v5178
        %5367 = vmatprep.subr.bf16.mxu0 0
        %5368 = vmatpush1.bf16.msra.mxu0 0
        %5369 = vmatprep.subr.bf16.mxu0 0
        %5370 = vmatpush1.bf16.msra.mxu0 0
        %5371 = vmatprep.subr.bf16.mxu0 0
        %5372 = vmatpush1.bf16.msra.mxu0 0
        %5373 = vmatprep.subr.bf16.mxu0 0
        %5374 = vmatpush1.bf16.msra.mxu0 0
        %5375 = vmatprep.subr.bf16.mxu0 0
        %5376 = vmatpush1.bf16.msra.mxu0 0
        %5377 = vmatprep.subr.bf16.mxu0 0
        %5378 = vmatpush1.bf16.msra.mxu0 0
        %5379 = vmatprep.subr.bf16.mxu0 0
        %5380 = vmatpush1.bf16.msra.mxu0 0
        %5381 = vmatprep.subr.bf16.mxu0 0
        %5382 = vmatpush1.bf16.msra.mxu0 0
        %5383 = vmatprep.subr.bf16.mxu0 0
        %5384 = vmatpush1.bf16.msra.mxu0 0
        %5385 = vmatprep.subr.bf16.mxu0 0
        %5386 = vmatpush1.bf16.msra.mxu0 0
        %5387 = vmatprep.subr.bf16.mxu0 0
        %5388 = vmatpush1.bf16.msra.mxu0 0
        %5389 = vmatprep.subr.bf16.mxu0 0
        %5390 = vmatpush1.bf16.msra.mxu0 0
        %5391 = vmatprep.subr.bf16.mxu0 0
        %5392 = vmatpush1.bf16.msra.mxu0 0
        %5393 = vmatprep.subr.bf16.mxu0 0
        %5394 = vmatpush1.bf16.msra.mxu0 0
        %5395 = vmatprep.subr.bf16.mxu0 0
        %5396 = vmatpush1.bf16.msra.mxu0 0
        %5397 = vmatprep.mubr.bf16.mxu0 0
        %5398 = vmatmul.mubr.bf16.gmra.mrb[0].mxu0 %v5191
        %v5399 = vpop.f32.mrb[0].mxu0
        %v5400 = vadd.f32 0.0, %v5399
        %v5401 = vpop.f32.mrb[0].mxu0
        %v5402 = vadd.f32 0.0, %v5401
        %v5403 = vpop.f32.mrb[0].mxu0
        %v5404 = vadd.f32 0.0, %v5403
        %v5405 = vpop.f32.mrb[0].mxu0
        %v5406 = vadd.f32 0.0, %v5405
        %5407 = vdwg.mxu0
        %v5408 = vadd.f32 %v5120, %v5228
        %v5409 = vadd.f32 %v5121, %v5230
        %v5410 = vadd.f32 %v5122, %v5271
        %v5411 = vadd.f32 %v5123, %v5273
        %v5412 = vadd.f32 %v5124, %v5314
        %v5413 = vadd.f32 %v5125, %v5316
        %v5414 = vadd.f32 %v5126, %v5357
        %v5415 = vadd.f32 %v5127, %v5359
        %v5416 = vadd.f32 %v5128, %v5400
        %v5417 = vadd.f32 %v5129, %v5402
        %v5418 = vadd.f32 %v5130, %v5232
        %v5419 = vadd.f32 %v5131, %v5234
        %v5420 = vadd.f32 %v5132, %v5275
        %v5421 = vadd.f32 %v5133, %v5277
        %v5422 = vadd.f32 %v5134, %v5318
        %v5423 = vadd.f32 %v5135, %v5320
        %v5424 = vadd.f32 %v5136, %v5361
        %v5425 = vadd.f32 %v5137, %v5363
        %v5426 = vadd.f32 %v5138, %v5404
        %v5427 = vadd.f32 %v5139, %v5406
        %v5428 = vld [vmem:[%s3] sm:$0xff]
        %v5429 = vld [vmem:[%s3 + $0x8] sm:$0xff]
        %5431 = vset.pattern.permute.xlu0 0
        %5432 = vperm.xlu0 %5431, %v5428
        %v5433 = vpop.permute.xlu0 %5432
        %5436 = vset.pattern.permute.xlu0 0
        %5437 = vperm.xlu0 %5436, %v5429
        %v5438 = vpop.permute.xlu0 %5437
        %v5440 = vadd.f32 %v5408, %v5433
        %v5441 = vadd.f32 %v5409, %v5433
        %v5442 = vadd.f32 %v5410, %v5433
        %v5443 = vadd.f32 %v5411, %v5433
        %v5444 = vadd.f32 %v5412, %v5433
        %v5445 = vadd.f32 %v5413, %v5433
        %v5446 = vadd.f32 %v5414, %v5433
        %v5447 = vadd.f32 %v5415, %v5433
        %v5448 = vadd.f32 %v5416, %v5433
        %v5449 = vadd.f32 %v5417, %v5433
        %v5450 = vadd.f32 %v5418, %v5438
        %v5451 = vadd.f32 %v5419, %v5438
        %v5452 = vadd.f32 %v5420, %v5438
        %v5453 = vadd.f32 %v5421, %v5438
        %v5454 = vadd.f32 %v5422, %v5438
        %v5455 = vadd.f32 %v5423, %v5438
        %v5456 = vadd.f32 %v5424, %v5438
        %v5457 = vadd.f32 %v5425, %v5438
        %v5458 = vadd.f32 %v5426, %v5438
        %v5459 = vadd.f32 %v5427, %v5438
        %v5460 = vmax.f32 %v5440, 0.0
        %v5461 = vmax.f32 %v5441, 0.0
        %v5462 = vmax.f32 %v5442, 0.0
        %v5463 = vmax.f32 %v5443, 0.0
        %v5464 = vmax.f32 %v5444, 0.0
        %v5465 = vmax.f32 %v5445, 0.0
        %v5466 = vmax.f32 %v5446, 0.0
        %v5467 = vmax.f32 %v5447, 0.0
        %v5468 = vmax.f32 %v5448, 0.0
        %v5469 = vmax.f32 %v5449, 0.0
        %v5470 = vmax.f32 %v5450, 0.0
        %v5471 = vmax.f32 %v5451, 0.0
        %v5472 = vmax.f32 %v5452, 0.0
        %v5473 = vmax.f32 %v5453, 0.0
        %v5474 = vmax.f32 %v5454, 0.0
        %v5475 = vmax.f32 %v5455, 0.0
        %v5476 = vmax.f32 %v5456, 0.0
        %v5477 = vmax.f32 %v5457, 0.0
        %v5478 = vmax.f32 %v5458, 0.0
        %v5479 = vmax.f32 %v5459, 0.0
        %v5480 = vpack.c.bf16 %v5470, %v5460
        %v5481 = vpack.c.bf16 %v5471, %v5461
        %v5482 = vpack.c.bf16 %v5472, %v5462
        %v5483 = vpack.c.bf16 %v5473, %v5463
        %v5484 = vpack.c.bf16 %v5474, %v5464
        %v5485 = vpack.c.bf16 %v5475, %v5465
        %v5486 = vpack.c.bf16 %v5476, %v5466
        %v5487 = vpack.c.bf16 %v5477, %v5467
        %v5488 = vpack.c.bf16 %v5478, %v5468
        %v5489 = vpack.c.bf16 %v5479, %v5469
        %v5500 = vunpack.c.l.b16 %v5480
        %v5501 = vunpack.c.l.b16 %v5481
        %v5502 = vunpack.c.l.b16 %v5482
        %v5503 = vunpack.c.l.b16 %v5483
        %v5504 = vunpack.c.l.b16 %v5484
        %v5505 = vunpack.c.l.b16 %v5485
        %v5506 = vunpack.c.l.b16 %v5486
        %v5507 = vunpack.c.l.b16 %v5487
        %v5508 = vunpack.c.l.b16 %v5488
        %v5509 = vunpack.c.l.b16 %v5489
        %v5510 = vunpack.c.h.b16 %v5480
        %v5511 = vunpack.c.h.b16 %v5481
        %v5512 = vunpack.c.h.b16 %v5482
        %v5513 = vunpack.c.h.b16 %v5483
        %v5514 = vunpack.c.h.b16 %v5484
        %v5515 = vunpack.c.h.b16 %v5485
        %v5516 = vunpack.c.h.b16 %v5486
        %v5517 = vunpack.c.h.b16 %v5487
        %v5518 = vunpack.c.h.b16 %v5488
        %v5519 = vunpack.c.h.b16 %v5489
        %v5520 = vpack.c.b16 %v5501, %v5500
        %v5521 = vpack.c.b16 %v5503, %v5502
        %v5522 = vpack.c.b16 %v5505, %v5504
        %v5523 = vpack.c.b16 %v5507, %v5506
        %v5524 = vpack.c.b16 %v5509, %v5508
        %v5525 = vpack.c.b16 %v5511, %v5510
        %v5526 = vpack.c.b16 %v5513, %v5512
        %v5527 = vpack.c.b16 %v5515, %v5514
        %v5528 = vpack.c.b16 %v5517, %v5516
        %v5529 = vpack.c.b16 %v5519, %v5518
        %5540 = vst [vmem:[%s725] sm:$0xff] %v5520
        %5541 = vst [vmem:[%s725 + $0x8] sm:$0xff] %v5521
        %5542 = vst [vmem:[%s725 + $0x10] sm:$0xff] %v5522
        %5543 = vst [vmem:[%s725 + $0x18] sm:$0xff] %v5523
        %5544 = vst [vmem:[%s725 + $0x20] sm:$0xff] %v5524
        %5545 = vst [vmem:[%s725 + $0x28] sm:$0xff] %v5525
        %5546 = vst [vmem:[%s725 + $0x30] sm:$0xff] %v5526
        %5547 = vst [vmem:[%s725 + $0x38] sm:$0xff] %v5527
        %5548 = vst [vmem:[%s725 + $0x40] sm:$0xff] %v5528
        %5549 = vst [vmem:[%s725 + $0x48] sm:$0xff] %v5529
        %s5550 = sand.u32 %s139, 1
        %s5551 = sand.u32 %s139, 1
        %s5552 = smul.addr %s5551, 80
        %s5553 = scalar_lea.vmem [#allocation5], %s5552
        // Predicated region
        $region144: #{_conv1d_pallas.1} parent=134 // pred_check
          %p5554 = pneg %p149
        $region145: #{_conv1d_pallas.1} parent=134 // pred_check_branch
          %5556 = sbr.rel (%p5554) target = $region147
        $region146: #{_conv1d_pallas.1} parent=134 // pred_region
          %s5557 = smul.u32 10, %s20
          %s5558 = smul.addr %s19, 40
          %s5559 = sadd.s32 %s5557, %s5558
          %s5560 = smul.addr %s5559, 4
          %s5561 = scalar_lea.vmem %s4, %s5560
          // Predicated region
          $region148: #{_conv1d_pallas.1} parent=146 // pred_check
            _
          $region149: #{_conv1d_pallas.1} parent=146 // pred_check_branch
            %5563 = sbr.rel (0) target = $region151
          $region150: #{_conv1d_pallas.1} parent=146 // pred_region
            // Predicated region
            $region152: #{_conv1d_pallas.1} parent=150 // pred_check
              _
            $region153: #{_conv1d_pallas.1} parent=150 // pred_check_branch
              %5565 = sbr.rel (0) target = $region155
            $region154: #{_conv1d_pallas.1} parent=150 // pred_region
              loop: start=0, step=1, limit=1
              $region156: #{_conv1d_pallas.1} parent=154 // loop_pre_header
                _
              $region157: #{_conv1d_pallas.1} parent=154 // loop_header
                %s5567 = sphi 0, %s5571
                %p5568 = scmp.ge.s32.totalorder %s5567, 1
                %s5572 = sphi %s5553, %s5553
                %s5573 = sphi %s5561, %s5561
              $region158: #{_conv1d_pallas.1} parent=154 // loop_header_branch
                %5570 = sbr.rel (%p5568) target = $region162
              $region159: #{_conv1d_pallas.1} parent=154 // loop_body
                %v5574 = vld [vmem:[%s5572] sm:$0xff]
                %5575 = vst [vmem:[%s5573] sm:$0xff] %v5574
                %v5576 = vld [vmem:[%s5572 + $0x8] sm:$0xff]
                %5577 = vst [vmem:[%s5573 + $0x8] sm:$0xff] %v5576
                %v5578 = vld [vmem:[%s5572 + $0x10] sm:$0xff]
                %5579 = vst [vmem:[%s5573 + $0x10] sm:$0xff] %v5578
                %v5580 = vld [vmem:[%s5572 + $0x18] sm:$0xff]
                %5581 = vst [vmem:[%s5573 + $0x18] sm:$0xff] %v5580
                %v5582 = vld [vmem:[%s5572 + $0x20] sm:$0xff]
                %5583 = vst [vmem:[%s5573 + $0x20] sm:$0xff] %v5582
                %v5584 = vld [vmem:[%s5572 + $0x28] sm:$0xff]
                %5585 = vst [vmem:[%s5573 + $0x50] sm:$0xff] %v5584
                %v5586 = vld [vmem:[%s5572 + $0x30] sm:$0xff]
                %5587 = vst [vmem:[%s5573 + $0x58] sm:$0xff] %v5586
                %v5588 = vld [vmem:[%s5572 + $0x38] sm:$0xff]
                %5589 = vst [vmem:[%s5573 + $0x60] sm:$0xff] %v5588
                %v5590 = vld [vmem:[%s5572 + $0x40] sm:$0xff]
                %5591 = vst [vmem:[%s5573 + $0x68] sm:$0xff] %v5590
                %v5592 = vld [vmem:[%s5572 + $0x48] sm:$0xff]
                %5593 = vst [vmem:[%s5573 + $0x70] sm:$0xff] %v5592
              $region160: #{_conv1d_pallas.1} parent=154 // loop_footer
                %s5571 = sadd.s32 1, %s5567
              $region161: #{_conv1d_pallas.1} parent=154 // loop_footer_branch
                %5566 = sbr.rel target = $region157
              $region162: #{_conv1d_pallas.1} parent=154 // loop_exit
                _
            $region155: #{_conv1d_pallas.1} parent=150 // pred_fallthru
              _
            // Predicated region
            $region163: #{_conv1d_pallas.1} parent=150 // pred_check
              _
            $region164: #{_conv1d_pallas.1} parent=150 // pred_check_branch
              %5595 = sbr.rel target = $region166
            $region165: #{_conv1d_pallas.1} parent=150 // pred_region
              _
            $region166: #{_conv1d_pallas.1} parent=150 // pred_fallthru
              _
          $region151: #{_conv1d_pallas.1} parent=146 // pred_fallthru
            _
          %5596 = vnop
        $region147: #{_conv1d_pallas.1} parent=134 // pred_fallthru
          _
      $region135: #{_conv1d_pallas.1} parent=5 // pred_fallthru
        _
      %p5597 = scmp.le.s32.totalorder 2, %s10
      // Predicated region
      $region167: #{_conv1d_pallas.1} parent=5 // pred_check
        %p5598 = pneg %p5597
      $region168: #{_conv1d_pallas.1} parent=5 // pred_check_branch
        %5600 = sbr.rel (%p5598) target = $region170
      $region169: #{_conv1d_pallas.1} parent=5 // pred_region
        %s5601 = ssub.s32 %s10, 2
        // Predicated region
        $region171: #{_conv1d_pallas.1} parent=169 // pred_check
          %p5602 = pneg %p155
        $region172: #{_conv1d_pallas.1} parent=169 // pred_check_branch
          %5604 = sbr.rel (%p5602) target = $region174
        $region173: #{_conv1d_pallas.1} parent=169 // pred_region
          %s5605 = sand.u32 %s140, 1
          %s5606 = sand.u32 %s140, 1
          %s5607 = smul.addr %s5606, 80
          %s5608 = scalar_lea.vmem [#allocation5], %s5607
        $region174: #{_conv1d_pallas.1} parent=169 // pred_fallthru
          _
      $region170: #{_conv1d_pallas.1} parent=5 // pred_fallthru
        _
    $region6: #{_conv1d_pallas.1} parent=1 // loop_footer
      %s14 = sadd.s32 1, %s10
    $region7: #{_conv1d_pallas.1} parent=1 // loop_footer_branch
      %9 = sbr.rel target = $region3
    $region8: #{_conv1d_pallas.1} parent=1 // loop_exit
      _

</llo_original>
